<compile_context>
chip_gen: v7x
topology: tpu7x:2x2x1
jax: 0.10.0
libtpu: 0.0.40
codegen_flags: <defaults>
</compile_context>

<pallas_src>
import functools

import jax
import jax.numpy as jnp
import numpy as np
from jax.experimental import pallas as pl
from jax.experimental.pallas import tpu as pltpu

N_EMBD = 384
N_HEAD = 6
HEAD_SIZE = N_EMBD // N_HEAD   # 64
BLOCK_SIZE = 128               # causal-mask capacity; we require T <= BLOCK_SIZE


def _device_kind():
    try:
        return jax.devices()[0].device_kind.lower()
    except Exception:
        return ""


def _bf16_exp_supported():
    """v6e / v7x have a bf16 EUP path; older chips (<= v5e) do not."""
    kind = _device_kind()
    return ("v6" in kind) or ("v7" in kind)


def _multi_tensorcore():
    """v7x has 2 TensorCores per chip; only there is grid >= 2 worth forcing."""
    return "v7" in _device_kind()


def mha_kernel(x_ref, wqkv_ref, wp_ref, bp_ref, out_ref, o_slab_ref, *, bf16_exp):
    """One batch-block per grid step.

    x_ref      : (Bt, T, C)     f32 (cast to bf16 in-kernel)
    wqkv_ref   : (C, 3*C)       bf16 (softmax scale pre-folded into the Q columns)
    wp_ref     : (C, C)         bf16
    bp_ref     : (1, C)         f32
    out_ref    : (Bt, T, C)     f32
    o_slab_ref : (Bt*T, C)      bf16 VMEM scratch (per-head contexts, lane-packed)
    """
    bt, t, c = x_ref.shape
    hs = HEAD_SIZE

    # ---- fused QKV projection: one lane-dense (Bt*T, 384) @ (384, 1152) MXU matmul ----
    x2d = x_ref[...].reshape(bt * t, c).astype(jnp.bfloat16)
    qkv = jnp.dot(x2d, wqkv_ref[...],
                  preferred_element_type=jnp.float32).astype(jnp.bfloat16)   # (Bt*T, 1152)
    qkv = qkv.reshape(bt, t, 3 * N_EMBD)                                     # bf16

    # Causal (lower-triangular) mask, built once as (T, T), broadcast over the batch dim.
    rows = jax.lax.broadcasted_iota(jnp.int32, (t, t), 0)
    cols = jax.lax.broadcasted_iota(jnp.int32, (t, t), 1)
    causal = cols <= rows                                                    # (T, T) bool

    # ---- per-head attention; contexts packed into a bf16 VMEM slab (no concatenate) ----
    for h in range(N_HEAD):                                                  # static unroll (6)
        q = qkv[:, :, h * hs:(h + 1) * hs]                                   # (Bt, T, 64) bf16
        k = qkv[:, :, N_EMBD + h * hs:N_EMBD + (h + 1) * hs]
        v = qkv[:, :, 2 * N_EMBD + h * hs:2 * N_EMBD + (h + 1) * hs]

        # Scores (scale already folded into the Q weights host-side).
        s = jnp.einsum('btd,bsd->bts', q, k,
                       preferred_element_type=jnp.float32)                   # (Bt, T, T) f32
        s = jnp.where(causal, s, -jnp.inf)

        # Softmax: f32 max-subtract; exp on the EUP (bf16 path only on v6e/v7x);
        # f32 row-sum; approximate EUP reciprocal for the denominator.
        s = s - jnp.max(s, axis=-1, keepdims=True)
        if bf16_exp:
            p = jnp.exp(s.astype(jnp.bfloat16))
            denom = jnp.sum(p.astype(jnp.float32), axis=-1, keepdims=True)
        else:
            p = jnp.exp(s)
            denom = jnp.sum(p, axis=-1, keepdims=True)
        p_b = (p * pl.reciprocal(denom, approx=True)).astype(jnp.bfloat16)
        # TODO(synk): attention-weight dropout (p=0.3) omitted — eval-mode identity.

        o = jnp.einsum('bts,bsd->btd', p_b, v,
                       preferred_element_type=jnp.float32)                   # (Bt, T, 64) f32

        # Write this head's context into the lane-packed bf16 slab (VMEM-internal).
        o_slab_ref[:, h * hs:(h + 1) * hs] = o.reshape(bt * t, hs).astype(jnp.bfloat16)

    # ---- single K=384 output projection over the packed slab ----
    out = jnp.dot(o_slab_ref[...], wp_ref[...],
                  preferred_element_type=jnp.float32) + bp_ref[...]          # (Bt*T, 384) f32
    # TODO(synk): output dropout (p=0.3) omitted — eval-mode identity.
    out_ref[...] = out.reshape(bt, t, N_EMBD).astype(out_ref.dtype)


def prepare_mha_params(wq, wk, wv, wp, bp):
    """One-time parameter prep (hoisted out of the per-call forward).

    wq/wk/wv: (n_head, C, head_size).  wp: (C, C).  bp: (1, C) or (C,).
    Returns (w_qkv bf16 (C, 3C) with the softmax scale folded into the Q columns,
             wp bf16 (C, C), bp f32 (1, C)).
    """
    scale = HEAD_SIZE ** (-0.5)
    wq_f = jnp.transpose(wq, (1, 0, 2)).reshape(N_EMBD, N_EMBD) * scale
    wk_f = jnp.transpose(wk, (1, 0, 2)).reshape(N_EMBD, N_EMBD)
    wv_f = jnp.transpose(wv, (1, 0, 2)).reshape(N_EMBD, N_EMBD)
    w_qkv = jnp.concatenate([wq_f, wk_f, wv_f], axis=-1).astype(jnp.bfloat16)  # (384, 1152)
    wp_b = wp.astype(jnp.bfloat16)
    bp_f = bp.reshape(1, N_EMBD).astype(jnp.float32)
    return w_qkv, wp_b, bp_f


def _pick_bt(batch, multi_core):
    """Batch elements per grid step.

    Single-TensorCore chips (v2-v6e): maximize Bt (grid=1 is fine — extra grid steps
    only cost ~600 cycles each and shrink M in the QKV matmul).  v7x: keep >= 2
    'parallel' grid steps so both TensorCores get work, when that is possible.
    """
    cands = (8, 4, 2, 1)
    if multi_core:
        for c in cands:
            if batch % c == 0 and batch // c >= 2:
                return c
    for c in cands:
        if batch % c == 0:
            return c
    return 1


def multi_head_attention(x, w_qkv, wp_b, bp_f):
    """x: (B, T, C) f32.  Remaining args come from prepare_mha_params()."""
    B, T, C = x.shape
    assert C == N_EMBD and T <= BLOCK_SIZE

    bt = _pick_bt(B, _multi_tensorcore())
    kernel = functools.partial(mha_kernel, bf16_exp=_bf16_exp_supported())

    return pl.pallas_call(
        kernel,
        out_shape=jax.ShapeDtypeStruct((B, T, N_EMBD), x.dtype),
        grid=(B // bt,),
        in_specs=[
            pl.BlockSpec((bt, T, C), lambda b: (b, 0, 0)),
            pl.BlockSpec((N_EMBD, 3 * N_EMBD), lambda b: (0, 0)),
            pl.BlockSpec((N_EMBD, N_EMBD), lambda b: (0, 0)),
            pl.BlockSpec((1, N_EMBD), lambda b: (0, 0)),
        ],
        out_specs=pl.BlockSpec((bt, T, N_EMBD), lambda b: (b, 0, 0)),
        scratch_shapes=[pltpu.VMEM((bt * T, N_EMBD), jnp.bfloat16)],
        compiler_params=pltpu.CompilerParams(
            dimension_semantics=("parallel",),
            vmem_limit_bytes=32 * 1024 * 1024,
        ),
    )(x, w_qkv, wp_b, bp_f)


def reference(x, wq, wk, wv, wp, bp):
    """Pure-JAX f32 reference mirroring the PyTorch forward (eval mode)."""
    B, T, C = x.shape
    scale = HEAD_SIZE ** (-0.5)
    mask = jnp.tril(jnp.ones((T, T), dtype=bool))
    outs = []
    for h in range(N_HEAD):
        q = x @ wq[h]
        k = x @ wk[h]
        v = x @ wv[h]
        wei = (q @ jnp.swapaxes(k, -1, -2)) * scale
        wei = jnp.where(mask, wei, -jnp.inf)
        wei = jax.nn.softmax(wei, axis=-1)
        outs.append(wei @ v)
    cat = jnp.concatenate(outs, axis=-1)
    return cat @ wp + bp


if __name__ == "__main__":
    key = jax.random.PRNGKey(0)
    kx, kq, kk, kv, kp, kb = jax.random.split(key, 6)

    B, T = 2, 16
    x = jax.random.normal(kx, (B, T, N_EMBD), dtype=jnp.float32)

    # Deterministic synthetic parameters (nn.Linear(bias=False) per head; proj has bias).
    wq = 0.02 * jax.random.normal(kq, (N_HEAD, N_EMBD, HEAD_SIZE), dtype=jnp.float32)
    wk = 0.02 * jax.random.normal(kk, (N_HEAD, N_EMBD, HEAD_SIZE), dtype=jnp.float32)
    wv = 0.02 * jax.random.normal(kv, (N_HEAD, N_EMBD, HEAD_SIZE), dtype=jnp.float32)
    wp = 0.02 * jax.random.normal(kp, (N_HEAD * HEAD_SIZE, N_EMBD), dtype=jnp.float32)
    bp = 0.01 * jax.random.normal(kb, (1, N_EMBD), dtype=jnp.float32)

    # One-time parameter prep (kept out of the per-forward path).
    w_qkv, wp_b, bp_f = prepare_mha_params(wq, wk, wv, wp, bp)

    out = multi_head_attention(x, w_qkv, wp_b, bp_f)
    out = jax.block_until_ready(out)

    ref = reference(x, wq, wk, wv, wp, bp.reshape(-1))
    # Tolerance relaxed vs pure-f32: kernel uses bf16 MXU operands (f32 accumulation),
    # an approximate EUP reciprocal, and (on v6e/v7x) a bf16 exp in the softmax.
    np.testing.assert_allclose(np.asarray(out, dtype=np.float32), np.asarray(ref),
                               rtol=2e-2, atol=2e-2)

    print("KERNEL_OK")
</pallas_src>

<mosaic_0001>
module attributes {stable_mosaic.version = 11 : i64} {
  func.func @mha_kernel(%arg0: i32, %arg1: memref<2x16x384xf32, #tpu.memory_space<vmem>>, %arg2: memref<384x1152xbf16, #tpu.memory_space<vmem>>, %arg3: memref<384x384xbf16, #tpu.memory_space<vmem>>, %arg4: memref<1x384xf32, #tpu.memory_space<vmem>>, %arg5: memref<2x16x384xf32, #tpu.memory_space<vmem>>, %arg6: memref<32x384xbf16, #tpu.memory_space<vmem>>) attributes {dimension_semantics = [#tpu.dimension_semantics<parallel>], iteration_bounds = array<i64: 1>, scalar_prefetch = 0 : i64, scratch_operands = 1 : i64, tpu.core_type = #tpu.core_type<tc>, window_params = [{transform_indices = @transform_0, window_bounds = array<i64: 2, 16, 384>}, {pipeline_mode = #tpu.pipeline_mode<synchronous>, transform_indices = @transform_1, window_bounds = array<i64: 384, 1152>}, {pipeline_mode = #tpu.pipeline_mode<synchronous>, transform_indices = @transform_2, window_bounds = array<i64: 384, 384>}, {pipeline_mode = #tpu.pipeline_mode<synchronous>, transform_indices = @transform_3, window_bounds = array<i64: 1, 384>}, {transform_indices = @transform_4, window_bounds = array<i64: 2, 16, 384>}]} {
    %c0 = arith.constant 0 : index
    %c0_0 = arith.constant 0 : index
    %c0_1 = arith.constant 0 : index
    %0 = vector.load %arg1[%c0, %c0_0, %c0_1] : memref<2x16x384xf32, #tpu.memory_space<vmem>>, vector<2x16x384xf32>
    %1 = vector.shape_cast %0 : vector<2x16x384xf32> to vector<32x384xf32>
    %2 = arith.truncf %1 : vector<32x384xf32> to vector<32x384xbf16>
    %c0_2 = arith.constant 0 : index
    %c0_3 = arith.constant 0 : index
    %3 = vector.load %arg2[%c0_2, %c0_3] : memref<384x1152xbf16, #tpu.memory_space<vmem>>, vector<384x1152xbf16>
    %cst = arith.constant dense<0.000000e+00> : vector<32x1152xf32>
    %4 = tpu.matmul %2, %3, %cst {dimension_numbers = #tpu.dot_dimension_numbers<[1], [0], [0], [1], [0, 0, 1, 1], [], []>} : vector<32x384xbf16>, vector<384x1152xbf16>, vector<32x1152xf32> -> vector<32x1152xf32>
    %5 = arith.truncf %4 : vector<32x1152xf32> to vector<32x1152xbf16>
    %6 = vector.shape_cast %5 : vector<32x1152xbf16> to vector<2x16x1152xbf16>
    %7 = tpu.iota {dimensions = array<i32: 0>} : vector<16x16xi32>
    %8 = tpu.iota {dimensions = array<i32: 1>} : vector<16x16xi32>
    %9 = arith.cmpi sle, %8, %7 : vector<16x16xi32>
    %10 = vector.extract_strided_slice %6 {offsets = [0, 0, 0], sizes = [2, 16, 64], strides = [1, 1, 1]} : vector<2x16x1152xbf16> to vector<2x16x64xbf16>
    %11 = vector.extract_strided_slice %6 {offsets = [0, 0, 384], sizes = [2, 16, 64], strides = [1, 1, 1]} : vector<2x16x1152xbf16> to vector<2x16x64xbf16>
    %12 = vector.extract_strided_slice %6 {offsets = [0, 0, 768], sizes = [2, 16, 64], strides = [1, 1, 1]} : vector<2x16x1152xbf16> to vector<2x16x64xbf16>
    "tpu.trace_start"() <{level = 10 : i32, message = "btd,bsd->bts"}> : () -> ()
    %cst_4 = arith.constant dense<0.000000e+00> : vector<2x16x16xf32>
    %13 = tpu.matmul %10, %11, %cst_4 {dimension_numbers = #tpu.dot_dimension_numbers<[2], [2], [1], [1], [0, 0, 0, 1, 1, 1], [0], [0]>} : vector<2x16x64xbf16>, vector<2x16x64xbf16>, vector<2x16x16xf32> -> vector<2x16x16xf32>
    %cst_5 = arith.constant 0xFF800000 : f32
    "tpu.trace_stop"() : () -> ()
    %14 = vector.shape_cast %9 : vector<16x16xi1> to vector<1x16x16xi1>
    %15 = vector.broadcast %14 : vector<1x16x16xi1> to vector<2x16x16xi1>
    %16 = vector.broadcast %cst_5 : f32 to vector<2x16x16xf32>
    %17 = arith.select %15, %13, %16 : vector<2x16x16xi1>, vector<2x16x16xf32>
    %cst_6 = arith.constant dense<0xFF800000> : vector<2x16xf32>
    %18 = vector.multi_reduction <maximumf>, %17, %cst_6 [2] : vector<2x16x16xf32> to vector<2x16xf32>
    %19 = vector.shape_cast %18 : vector<2x16xf32> to vector<2x16x1xf32>
    %20 = vector.broadcast %19 : vector<2x16x1xf32> to vector<2x16x16xf32>
    %21 = arith.subf %17, %20 : vector<2x16x16xf32>
    %22 = math.exp %21 : vector<2x16x16xf32>
    %cst_7 = arith.constant dense<0.000000e+00> : vector<2x16xf32>
    %23 = vector.multi_reduction <add>, %22, %cst_7 [2] : vector<2x16x16xf32> to vector<2x16xf32>
    %24 = vector.shape_cast %23 : vector<2x16xf32> to vector<2x16x1xf32>
    %25 = tpu.reciprocal %24 {approx = true} : vector<2x16x1xf32> -> vector<2x16x1xf32>
    %26 = vector.broadcast %25 : vector<2x16x1xf32> to vector<2x16x16xf32>
    %27 = arith.mulf %22, %26 : vector<2x16x16xf32>
    %28 = arith.truncf %27 : vector<2x16x16xf32> to vector<2x16x16xbf16>
    "tpu.trace_start"() <{level = 10 : i32, message = "bts,bsd->btd"}> : () -> ()
    %cst_8 = arith.constant dense<0.000000e+00> : vector<2x16x64xf32>
    %29 = tpu.matmul %28, %12, %cst_8 {dimension_numbers = #tpu.dot_dimension_numbers<[2], [1], [1], [2], [0, 0, 0, 1, 1, 2], [0], [0]>} : vector<2x16x16xbf16>, vector<2x16x64xbf16>, vector<2x16x64xf32> -> vector<2x16x64xf32>
    "tpu.trace_stop"() : () -> ()
    %30 = vector.shape_cast %29 : vector<2x16x64xf32> to vector<32x64xf32>
    %31 = arith.truncf %30 : vector<32x64xf32> to vector<32x64xbf16>
    %c0_9 = arith.constant 0 : index
    %c0_10 = arith.constant 0 : index
    %32 = vector.load %arg6[%c0_9, %c0_10] : memref<32x384xbf16, #tpu.memory_space<vmem>>, vector<32x64xbf16>
    tpu.vector_store %arg6[%c0_9, %c0_10], %31 {strides = array<i32>} : memref<32x384xbf16, #tpu.memory_space<vmem>>, vector<32x64xbf16>,
    %33 = vector.extract_strided_slice %6 {offsets = [0, 0, 64], sizes = [2, 16, 64], strides = [1, 1, 1]} : vector<2x16x1152xbf16> to vector<2x16x64xbf16>
    %34 = vector.extract_strided_slice %6 {offsets = [0, 0, 448], sizes = [2, 16, 64], strides = [1, 1, 1]} : vector<2x16x1152xbf16> to vector<2x16x64xbf16>
    %35 = vector.extract_strided_slice %6 {offsets = [0, 0, 832], sizes = [2, 16, 64], strides = [1, 1, 1]} : vector<2x16x1152xbf16> to vector<2x16x64xbf16>
    "tpu.trace_start"() <{level = 10 : i32, message = "btd,bsd->bts"}> : () -> ()
    %cst_11 = arith.constant dense<0.000000e+00> : vector<2x16x16xf32>
    %36 = tpu.matmul %33, %34, %cst_11 {dimension_numbers = #tpu.dot_dimension_numbers<[2], [2], [1], [1], [0, 0, 0, 1, 1, 1], [0], [0]>} : vector<2x16x64xbf16>, vector<2x16x64xbf16>, vector<2x16x16xf32> -> vector<2x16x16xf32>
    %cst_12 = arith.constant 0xFF800000 : f32
    "tpu.trace_stop"() : () -> ()
    %37 = vector.shape_cast %9 : vector<16x16xi1> to vector<1x16x16xi1>
    %38 = vector.broadcast %37 : vector<1x16x16xi1> to vector<2x16x16xi1>
    %39 = vector.broadcast %cst_12 : f32 to vector<2x16x16xf32>
    %40 = arith.select %38, %36, %39 : vector<2x16x16xi1>, vector<2x16x16xf32>
    %cst_13 = arith.constant dense<0xFF800000> : vector<2x16xf32>
    %41 = vector.multi_reduction <maximumf>, %40, %cst_13 [2] : vector<2x16x16xf32> to vector<2x16xf32>
    %42 = vector.shape_cast %41 : vector<2x16xf32> to vector<2x16x1xf32>
    %43 = vector.broadcast %42 : vector<2x16x1xf32> to vector<2x16x16xf32>
    %44 = arith.subf %40, %43 : vector<2x16x16xf32>
    %45 = math.exp %44 : vector<2x16x16xf32>
    %cst_14 = arith.constant dense<0.000000e+00> : vector<2x16xf32>
    %46 = vector.multi_reduction <add>, %45, %cst_14 [2] : vector<2x16x16xf32> to vector<2x16xf32>
    %47 = vector.shape_cast %46 : vector<2x16xf32> to vector<2x16x1xf32>
    %48 = tpu.reciprocal %47 {approx = true} : vector<2x16x1xf32> -> vector<2x16x1xf32>
    %49 = vector.broadcast %48 : vector<2x16x1xf32> to vector<2x16x16xf32>
    %50 = arith.mulf %45, %49 : vector<2x16x16xf32>
    %51 = arith.truncf %50 : vector<2x16x16xf32> to vector<2x16x16xbf16>
    "tpu.trace_start"() <{level = 10 : i32, message = "bts,bsd->btd"}> : () -> ()
    %cst_15 = arith.constant dense<0.000000e+00> : vector<2x16x64xf32>
    %52 = tpu.matmul %51, %35, %cst_15 {dimension_numbers = #tpu.dot_dimension_numbers<[2], [1], [1], [2], [0, 0, 0, 1, 1, 2], [0], [0]>} : vector<2x16x16xbf16>, vector<2x16x64xbf16>, vector<2x16x64xf32> -> vector<2x16x64xf32>
    "tpu.trace_stop"() : () -> ()
    %53 = vector.shape_cast %52 : vector<2x16x64xf32> to vector<32x64xf32>
    %54 = arith.truncf %53 : vector<32x64xf32> to vector<32x64xbf16>
    %c0_16 = arith.constant 0 : index
    %c64 = arith.constant 64 : index
    %55 = vector.load %arg6[%c0_16, %c64] : memref<32x384xbf16, #tpu.memory_space<vmem>>, vector<32x64xbf16>
    tpu.vector_store %arg6[%c0_16, %c64], %54 {strides = array<i32>} : memref<32x384xbf16, #tpu.memory_space<vmem>>, vector<32x64xbf16>,
    %56 = vector.extract_strided_slice %6 {offsets = [0, 0, 128], sizes = [2, 16, 64], strides = [1, 1, 1]} : vector<2x16x1152xbf16> to vector<2x16x64xbf16>
    %57 = vector.extract_strided_slice %6 {offsets = [0, 0, 512], sizes = [2, 16, 64], strides = [1, 1, 1]} : vector<2x16x1152xbf16> to vector<2x16x64xbf16>
    %58 = vector.extract_strided_slice %6 {offsets = [0, 0, 896], sizes = [2, 16, 64], strides = [1, 1, 1]} : vector<2x16x1152xbf16> to vector<2x16x64xbf16>
    "tpu.trace_start"() <{level = 10 : i32, message = "btd,bsd->bts"}> : () -> ()
    %cst_17 = arith.constant dense<0.000000e+00> : vector<2x16x16xf32>
    %59 = tpu.matmul %56, %57, %cst_17 {dimension_numbers = #tpu.dot_dimension_numbers<[2], [2], [1], [1], [0, 0, 0, 1, 1, 1], [0], [0]>} : vector<2x16x64xbf16>, vector<2x16x64xbf16>, vector<2x16x16xf32> -> vector<2x16x16xf32>
    %cst_18 = arith.constant 0xFF800000 : f32
    "tpu.trace_stop"() : () -> ()
    %60 = vector.shape_cast %9 : vector<16x16xi1> to vector<1x16x16xi1>
    %61 = vector.broadcast %60 : vector<1x16x16xi1> to vector<2x16x16xi1>
    %62 = vector.broadcast %cst_18 : f32 to vector<2x16x16xf32>
    %63 = arith.select %61, %59, %62 : vector<2x16x16xi1>, vector<2x16x16xf32>
    %cst_19 = arith.constant dense<0xFF800000> : vector<2x16xf32>
    %64 = vector.multi_reduction <maximumf>, %63, %cst_19 [2] : vector<2x16x16xf32> to vector<2x16xf32>
    %65 = vector.shape_cast %64 : vector<2x16xf32> to vector<2x16x1xf32>
    %66 = vector.broadcast %65 : vector<2x16x1xf32> to vector<2x16x16xf32>
    %67 = arith.subf %63, %66 : vector<2x16x16xf32>
    %68 = math.exp %67 : vector<2x16x16xf32>
    %cst_20 = arith.constant dense<0.000000e+00> : vector<2x16xf32>
    %69 = vector.multi_reduction <add>, %68, %cst_20 [2] : vector<2x16x16xf32> to vector<2x16xf32>
    %70 = vector.shape_cast %69 : vector<2x16xf32> to vector<2x16x1xf32>
    %71 = tpu.reciprocal %70 {approx = true} : vector<2x16x1xf32> -> vector<2x16x1xf32>
    %72 = vector.broadcast %71 : vector<2x16x1xf32> to vector<2x16x16xf32>
    %73 = arith.mulf %68, %72 : vector<2x16x16xf32>
    %74 = arith.truncf %73 : vector<2x16x16xf32> to vector<2x16x16xbf16>
    "tpu.trace_start"() <{level = 10 : i32, message = "bts,bsd->btd"}> : () -> ()
    %cst_21 = arith.constant dense<0.000000e+00> : vector<2x16x64xf32>
    %75 = tpu.matmul %74, %58, %cst_21 {dimension_numbers = #tpu.dot_dimension_numbers<[2], [1], [1], [2], [0, 0, 0, 1, 1, 2], [0], [0]>} : vector<2x16x16xbf16>, vector<2x16x64xbf16>, vector<2x16x64xf32> -> vector<2x16x64xf32>
    "tpu.trace_stop"() : () -> ()
    %76 = vector.shape_cast %75 : vector<2x16x64xf32> to vector<32x64xf32>
    %77 = arith.truncf %76 : vector<32x64xf32> to vector<32x64xbf16>
    %c0_22 = arith.constant 0 : index
    %c128 = arith.constant 128 : index
    %78 = vector.load %arg6[%c0_22, %c128] : memref<32x384xbf16, #tpu.memory_space<vmem>>, vector<32x64xbf16>
    tpu.vector_store %arg6[%c0_22, %c128], %77 {strides = array<i32>} : memref<32x384xbf16, #tpu.memory_space<vmem>>, vector<32x64xbf16>,
    %79 = vector.extract_strided_slice %6 {offsets = [0, 0, 192], sizes = [2, 16, 64], strides = [1, 1, 1]} : vector<2x16x1152xbf16> to vector<2x16x64xbf16>
    %80 = vector.extract_strided_slice %6 {offsets = [0, 0, 576], sizes = [2, 16, 64], strides = [1, 1, 1]} : vector<2x16x1152xbf16> to vector<2x16x64xbf16>
    %81 = vector.extract_strided_slice %6 {offsets = [0, 0, 960], sizes = [2, 16, 64], strides = [1, 1, 1]} : vector<2x16x1152xbf16> to vector<2x16x64xbf16>
    "tpu.trace_start"() <{level = 10 : i32, message = "btd,bsd->bts"}> : () -> ()
    %cst_23 = arith.constant dense<0.000000e+00> : vector<2x16x16xf32>
    %82 = tpu.matmul %79, %80, %cst_23 {dimension_numbers = #tpu.dot_dimension_numbers<[2], [2], [1], [1], [0, 0, 0, 1, 1, 1], [0], [0]>} : vector<2x16x64xbf16>, vector<2x16x64xbf16>, vector<2x16x16xf32> -> vector<2x16x16xf32>
    %cst_24 = arith.constant 0xFF800000 : f32
    "tpu.trace_stop"() : () -> ()
    %83 = vector.shape_cast %9 : vector<16x16xi1> to vector<1x16x16xi1>
    %84 = vector.broadcast %83 : vector<1x16x16xi1> to vector<2x16x16xi1>
    %85 = vector.broadcast %cst_24 : f32 to vector<2x16x16xf32>
    %86 = arith.select %84, %82, %85 : vector<2x16x16xi1>, vector<2x16x16xf32>
    %cst_25 = arith.constant dense<0xFF800000> : vector<2x16xf32>
    %87 = vector.multi_reduction <maximumf>, %86, %cst_25 [2] : vector<2x16x16xf32> to vector<2x16xf32>
    %88 = vector.shape_cast %87 : vector<2x16xf32> to vector<2x16x1xf32>
    %89 = vector.broadcast %88 : vector<2x16x1xf32> to vector<2x16x16xf32>
    %90 = arith.subf %86, %89 : vector<2x16x16xf32>
    %91 = math.exp %90 : vector<2x16x16xf32>
    %cst_26 = arith.constant dense<0.000000e+00> : vector<2x16xf32>
    %92 = vector.multi_reduction <add>, %91, %cst_26 [2] : vector<2x16x16xf32> to vector<2x16xf32>
    %93 = vector.shape_cast %92 : vector<2x16xf32> to vector<2x16x1xf32>
    %94 = tpu.reciprocal %93 {approx = true} : vector<2x16x1xf32> -> vector<2x16x1xf32>
    %95 = vector.broadcast %94 : vector<2x16x1xf32> to vector<2x16x16xf32>
    %96 = arith.mulf %91, %95 : vector<2x16x16xf32>
    %97 = arith.truncf %96 : vector<2x16x16xf32> to vector<2x16x16xbf16>
    "tpu.trace_start"() <{level = 10 : i32, message = "bts,bsd->btd"}> : () -> ()
    %cst_27 = arith.constant dense<0.000000e+00> : vector<2x16x64xf32>
    %98 = tpu.matmul %97, %81, %cst_27 {dimension_numbers = #tpu.dot_dimension_numbers<[2], [1], [1], [2], [0, 0, 0, 1, 1, 2], [0], [0]>} : vector<2x16x16xbf16>, vector<2x16x64xbf16>, vector<2x16x64xf32> -> vector<2x16x64xf32>
    "tpu.trace_stop"() : () -> ()
    %99 = vector.shape_cast %98 : vector<2x16x64xf32> to vector<32x64xf32>
    %100 = arith.truncf %99 : vector<32x64xf32> to vector<32x64xbf16>
    %c0_28 = arith.constant 0 : index
    %c192 = arith.constant 192 : index
    %101 = vector.load %arg6[%c0_28, %c192] : memref<32x384xbf16, #tpu.memory_space<vmem>>, vector<32x64xbf16>
    tpu.vector_store %arg6[%c0_28, %c192], %100 {strides = array<i32>} : memref<32x384xbf16, #tpu.memory_space<vmem>>, vector<32x64xbf16>,
    %102 = vector.extract_strided_slice %6 {offsets = [0, 0, 256], sizes = [2, 16, 64], strides = [1, 1, 1]} : vector<2x16x1152xbf16> to vector<2x16x64xbf16>
    %103 = vector.extract_strided_slice %6 {offsets = [0, 0, 640], sizes = [2, 16, 64], strides = [1, 1, 1]} : vector<2x16x1152xbf16> to vector<2x16x64xbf16>
    %104 = vector.extract_strided_slice %6 {offsets = [0, 0, 1024], sizes = [2, 16, 64], strides = [1, 1, 1]} : vector<2x16x1152xbf16> to vector<2x16x64xbf16>
    "tpu.trace_start"() <{level = 10 : i32, message = "btd,bsd->bts"}> : () -> ()
    %cst_29 = arith.constant dense<0.000000e+00> : vector<2x16x16xf32>
    %105 = tpu.matmul %102, %103, %cst_29 {dimension_numbers = #tpu.dot_dimension_numbers<[2], [2], [1], [1], [0, 0, 0, 1, 1, 1], [0], [0]>} : vector<2x16x64xbf16>, vector<2x16x64xbf16>, vector<2x16x16xf32> -> vector<2x16x16xf32>
    %cst_30 = arith.constant 0xFF800000 : f32
    "tpu.trace_stop"() : () -> ()
    %106 = vector.shape_cast %9 : vector<16x16xi1> to vector<1x16x16xi1>
    %107 = vector.broadcast %106 : vector<1x16x16xi1> to vector<2x16x16xi1>
    %108 = vector.broadcast %cst_30 : f32 to vector<2x16x16xf32>
    %109 = arith.select %107, %105, %108 : vector<2x16x16xi1>, vector<2x16x16xf32>
    %cst_31 = arith.constant dense<0xFF800000> : vector<2x16xf32>
    %110 = vector.multi_reduction <maximumf>, %109, %cst_31 [2] : vector<2x16x16xf32> to vector<2x16xf32>
    %111 = vector.shape_cast %110 : vector<2x16xf32> to vector<2x16x1xf32>
    %112 = vector.broadcast %111 : vector<2x16x1xf32> to vector<2x16x16xf32>
    %113 = arith.subf %109, %112 : vector<2x16x16xf32>
    %114 = math.exp %113 : vector<2x16x16xf32>
    %cst_32 = arith.constant dense<0.000000e+00> : vector<2x16xf32>
    %115 = vector.multi_reduction <add>, %114, %cst_32 [2] : vector<2x16x16xf32> to vector<2x16xf32>
    %116 = vector.shape_cast %115 : vector<2x16xf32> to vector<2x16x1xf32>
    %117 = tpu.reciprocal %116 {approx = true} : vector<2x16x1xf32> -> vector<2x16x1xf32>
    %118 = vector.broadcast %117 : vector<2x16x1xf32> to vector<2x16x16xf32>
    %119 = arith.mulf %114, %118 : vector<2x16x16xf32>
    %120 = arith.truncf %119 : vector<2x16x16xf32> to vector<2x16x16xbf16>
    "tpu.trace_start"() <{level = 10 : i32, message = "bts,bsd->btd"}> : () -> ()
    %cst_33 = arith.constant dense<0.000000e+00> : vector<2x16x64xf32>
    %121 = tpu.matmul %120, %104, %cst_33 {dimension_numbers = #tpu.dot_dimension_numbers<[2], [1], [1], [2], [0, 0, 0, 1, 1, 2], [0], [0]>} : vector<2x16x16xbf16>, vector<2x16x64xbf16>, vector<2x16x64xf32> -> vector<2x16x64xf32>
    "tpu.trace_stop"() : () -> ()
    %122 = vector.shape_cast %121 : vector<2x16x64xf32> to vector<32x64xf32>
    %123 = arith.truncf %122 : vector<32x64xf32> to vector<32x64xbf16>
    %c0_34 = arith.constant 0 : index
    %c256 = arith.constant 256 : index
    %124 = vector.load %arg6[%c0_34, %c256] : memref<32x384xbf16, #tpu.memory_space<vmem>>, vector<32x64xbf16>
    tpu.vector_store %arg6[%c0_34, %c256], %123 {strides = array<i32>} : memref<32x384xbf16, #tpu.memory_space<vmem>>, vector<32x64xbf16>,
    %125 = vector.extract_strided_slice %6 {offsets = [0, 0, 320], sizes = [2, 16, 64], strides = [1, 1, 1]} : vector<2x16x1152xbf16> to vector<2x16x64xbf16>
    %126 = vector.extract_strided_slice %6 {offsets = [0, 0, 704], sizes = [2, 16, 64], strides = [1, 1, 1]} : vector<2x16x1152xbf16> to vector<2x16x64xbf16>
    %127 = vector.extract_strided_slice %6 {offsets = [0, 0, 1088], sizes = [2, 16, 64], strides = [1, 1, 1]} : vector<2x16x1152xbf16> to vector<2x16x64xbf16>
    "tpu.trace_start"() <{level = 10 : i32, message = "btd,bsd->bts"}> : () -> ()
    %cst_35 = arith.constant dense<0.000000e+00> : vector<2x16x16xf32>
    %128 = tpu.matmul %125, %126, %cst_35 {dimension_numbers = #tpu.dot_dimension_numbers<[2], [2], [1], [1], [0, 0, 0, 1, 1, 1], [0], [0]>} : vector<2x16x64xbf16>, vector<2x16x64xbf16>, vector<2x16x16xf32> -> vector<2x16x16xf32>
    %cst_36 = arith.constant 0xFF800000 : f32
    "tpu.trace_stop"() : () -> ()
    %129 = vector.shape_cast %9 : vector<16x16xi1> to vector<1x16x16xi1>
    %130 = vector.broadcast %129 : vector<1x16x16xi1> to vector<2x16x16xi1>
    %131 = vector.broadcast %cst_36 : f32 to vector<2x16x16xf32>
    %132 = arith.select %130, %128, %131 : vector<2x16x16xi1>, vector<2x16x16xf32>
    %cst_37 = arith.constant dense<0xFF800000> : vector<2x16xf32>
    %133 = vector.multi_reduction <maximumf>, %132, %cst_37 [2] : vector<2x16x16xf32> to vector<2x16xf32>
    %134 = vector.shape_cast %133 : vector<2x16xf32> to vector<2x16x1xf32>
    %135 = vector.broadcast %134 : vector<2x16x1xf32> to vector<2x16x16xf32>
    %136 = arith.subf %132, %135 : vector<2x16x16xf32>
    %137 = math.exp %136 : vector<2x16x16xf32>
    %cst_38 = arith.constant dense<0.000000e+00> : vector<2x16xf32>
    %138 = vector.multi_reduction <add>, %137, %cst_38 [2] : vector<2x16x16xf32> to vector<2x16xf32>
    %139 = vector.shape_cast %138 : vector<2x16xf32> to vector<2x16x1xf32>
    %140 = tpu.reciprocal %139 {approx = true} : vector<2x16x1xf32> -> vector<2x16x1xf32>
    %141 = vector.broadcast %140 : vector<2x16x1xf32> to vector<2x16x16xf32>
    %142 = arith.mulf %137, %141 : vector<2x16x16xf32>
    %143 = arith.truncf %142 : vector<2x16x16xf32> to vector<2x16x16xbf16>
    "tpu.trace_start"() <{level = 10 : i32, message = "bts,bsd->btd"}> : () -> ()
    %cst_39 = arith.constant dense<0.000000e+00> : vector<2x16x64xf32>
    %144 = tpu.matmul %143, %127, %cst_39 {dimension_numbers = #tpu.dot_dimension_numbers<[2], [1], [1], [2], [0, 0, 0, 1, 1, 2], [0], [0]>} : vector<2x16x16xbf16>, vector<2x16x64xbf16>, vector<2x16x64xf32> -> vector<2x16x64xf32>
    "tpu.trace_stop"() : () -> ()
    %145 = vector.shape_cast %144 : vector<2x16x64xf32> to vector<32x64xf32>
    %146 = arith.truncf %145 : vector<32x64xf32> to vector<32x64xbf16>
    %c0_40 = arith.constant 0 : index
    %c320 = arith.constant 320 : index
    %147 = vector.load %arg6[%c0_40, %c320] : memref<32x384xbf16, #tpu.memory_space<vmem>>, vector<32x64xbf16>
    tpu.vector_store %arg6[%c0_40, %c320], %146 {strides = array<i32>} : memref<32x384xbf16, #tpu.memory_space<vmem>>, vector<32x64xbf16>,
    %c0_41 = arith.constant 0 : index
    %c0_42 = arith.constant 0 : index
    %148 = vector.load %arg6[%c0_41, %c0_42] : memref<32x384xbf16, #tpu.memory_space<vmem>>, vector<32x384xbf16>
    %c0_43 = arith.constant 0 : index
    %c0_44 = arith.constant 0 : index
    %149 = vector.load %arg3[%c0_43, %c0_44] : memref<384x384xbf16, #tpu.memory_space<vmem>>, vector<384x384xbf16>
    %cst_45 = arith.constant dense<0.000000e+00> : vector<32x384xf32>
    %150 = tpu.matmul %148, %149, %cst_45 {dimension_numbers = #tpu.dot_dimension_numbers<[1], [0], [0], [1], [0, 0, 1, 1], [], []>} : vector<32x384xbf16>, vector<384x384xbf16>, vector<32x384xf32> -> vector<32x384xf32>
    %c0_46 = arith.constant 0 : index
    %c0_47 = arith.constant 0 : index
    %151 = vector.load %arg4[%c0_46, %c0_47] : memref<1x384xf32, #tpu.memory_space<vmem>>, vector<1x384xf32>
    %152 = vector.broadcast %151 : vector<1x384xf32> to vector<32x384xf32>
    %153 = arith.addf %150, %152 : vector<32x384xf32>
    %154 = vector.shape_cast %153 : vector<32x384xf32> to vector<2x16x384xf32>
    %c0_48 = arith.constant 0 : index
    %c0_49 = arith.constant 0 : index
    %c0_50 = arith.constant 0 : index
    %155 = vector.load %arg5[%c0_48, %c0_49, %c0_50] : memref<2x16x384xf32, #tpu.memory_space<vmem>>, vector<2x16x384xf32>
    tpu.vector_store %arg5[%c0_48, %c0_49, %c0_50], %154 {strides = array<i32>} : memref<2x16x384xf32, #tpu.memory_space<vmem>>, vector<2x16x384xf32>,
    return
  }
  func.func @transform_0(%arg0: i32) -> (i32, i32, i32) {
    %c0_i32 = arith.constant 0 : i32
    %c0_i32_0 = arith.constant 0 : i32
    %c0_i32_1 = arith.constant 0 : i32
    return %arg0, %c0_i32, %c0_i32_0 : i32, i32, i32
  }
  func.func @transform_1(%arg0: i32) -> (i32, i32) {
    %c0_i32 = arith.constant 0 : i32
    %c0_i32_0 = arith.constant 0 : i32
    %c0_i32_1 = arith.constant 0 : i32
    return %c0_i32, %c0_i32_0 : i32, i32
  }
  func.func @transform_2(%arg0: i32) -> (i32, i32) {
    %c0_i32 = arith.constant 0 : i32
    %c0_i32_0 = arith.constant 0 : i32
    %c0_i32_1 = arith.constant 0 : i32
    return %c0_i32, %c0_i32_0 : i32, i32
  }
  func.func @transform_3(%arg0: i32) -> (i32, i32) {
    %c0_i32 = arith.constant 0 : i32
    %c0_i32_0 = arith.constant 0 : i32
    %c0_i32_1 = arith.constant 0 : i32
    return %c0_i32, %c0_i32_0 : i32, i32
  }
  func.func @transform_4(%arg0: i32) -> (i32, i32, i32) {
    %c0_i32 = arith.constant 0 : i32
    %c0_i32_0 = arith.constant 0 : i32
    %c0_i32_1 = arith.constant 0 : i32
    return %arg0, %c0_i32, %c0_i32_0 : i32, i32, i32
  }
}

</mosaic_0001>

<llo_original>
// kernel: tpu_custom_call.1
$region0: #{tpu_custom_call.1}
  #allocation0 [shape = 'u32[]', space=smem, size = 0x4, offset = 0x4, fixed_abs, tag = 'smem constant byte address 0x4 - core index']
  #allocation1 [shape = 'u32[144,128]{1,0:T(1,128)}', space=vmem, size = 0x12000, scoped, tag = 'internal scratch']
  #allocation2 [shape = 'bf16[32,384]{1,0:T(16,128)(2,1)}', space=vmem, size = 0x6000, scoped, tag = 'scratch operand']
  %s0 = inlined_call_operand.hbm [shape: f32[2,16,384], index: 0, kind: input, shape index: {}]
  %s1 = inlined_call_operand.hbm [shape: bf16[384,1152], index: 1, kind: input, shape index: {}]
  %s2 = inlined_call_operand.hbm [shape: bf16[384,384], index: 2, kind: input, shape index: {}]
  %s3 = inlined_call_operand.vmem [shape: f32[1,384], index: 3, kind: input, shape index: {}]
  %s4 = inlined_call_operand.hbm [shape: f32[2,16,384], index: 4, kind: output, shape index: {}]
  %s5 = sld [smem:[#allocation0]]
  $region38: #{tpu_custom_call.1} parent=0
    _
  %s7 = ssub.s32 1, %s5
  %s8 = scalar_select 0, %s7, %s5
  $region1: #{tpu_custom_call.1} parent=0
    #allocation3 [shape = 'u8[49152]{0}', space=vmem, size = 0xc000, scoped, tag = 'input window, operand 0, single buffered']
    #allocation4 [shape = 's32[1]{0}', space=sflag, size = 0x4, scoped, tag = 'scoped memory for tpu_custom_call.1']
    #allocation5 [shape = 's32[1]{0}', space=sflag, size = 0x4, scoped, tag = 'scoped memory for tpu_custom_call.1']
    #allocation6 [shape = 'u8[884736]{0}', space=vmem, size = 0xd8000, scoped, tag = 'input window, operand 1, single buffered']
    #allocation7 [shape = 's32[1]{0}', space=sflag, size = 0x4, scoped, tag = 'scoped memory for tpu_custom_call.1']
    #allocation8 [shape = 'u8[294912]{0}', space=vmem, size = 0x48000, scoped, tag = 'input window, operand 2, single buffered']
    #allocation9 [shape = 'u8[49152]{0}', space=vmem, size = 0xc000, scoped, tag = 'output window, operand 0, single buffered']
    %9 = vsyncpa [#allocation4], 0
    %10 = vsyncpa [#allocation7], 0
    %11 = vsyncpa [#allocation5], 0
    // Predicated region
    $region2: #{tpu_custom_call.1} parent=1 // pred_check
      _
    $region3: #{tpu_custom_call.1} parent=1 // pred_check_branch
      %13 = sbr.rel (0) target = $region5
    $region4: #{tpu_custom_call.1} parent=1 // pred_region
      %s15 = ssub.s32 1536, 1536
      %16 = vsyncadd [#allocation4], %s15
      %s17 = sshll.u32 [#allocation3], 4
      %s18 = int_to_ptr.vmem [resolvable:$true] %s17
      %23 = dma.hbm_to_vmem [thread:$0]  %s0, 1536, %s18, [#allocation4], 384, 384, 24
    $region5: #{tpu_custom_call.1} parent=1 // pred_fallthru
      _
    // Predicated region
    $region6: #{tpu_custom_call.1} parent=1 // pred_check
      _
    $region7: #{tpu_custom_call.1} parent=1 // pred_check_branch
      %25 = sbr.rel (0) target = $region9
    $region8: #{tpu_custom_call.1} parent=1 // pred_region
      %s27 = ssub.s32 27648, 27648
      %28 = vsyncadd [#allocation7], %s27
      %s29 = sshll.u32 [#allocation6], 4
      %s30 = int_to_ptr.vmem [resolvable:$true] %s29
      %35 = dma.hbm_to_vmem [thread:$0]  %s1, 27648, %s30, [#allocation7], 576, 576, 36
    $region9: #{tpu_custom_call.1} parent=1 // pred_fallthru
      _
    // Predicated region
    $region10: #{tpu_custom_call.1} parent=1 // pred_check
      _
    $region11: #{tpu_custom_call.1} parent=1 // pred_check_branch
      %37 = sbr.rel (0) target = $region13
    $region12: #{tpu_custom_call.1} parent=1 // pred_region
      %s39 = ssub.s32 9216, 9216
      %40 = vsyncadd [#allocation7], %s39
      %s41 = sshll.u32 [#allocation8], 4
      %s42 = int_to_ptr.vmem [resolvable:$true] %s41
      %47 = dma.hbm_to_vmem [thread:$0]  %s2, 9216, %s42, [#allocation7], 192, 192, 12
    $region13: #{tpu_custom_call.1} parent=1 // pred_fallthru
      _
    // Predicated region
    $region14: #{tpu_custom_call.1} parent=1 // pred_check
      _
    $region15: #{tpu_custom_call.1} parent=1 // pred_check_branch
      %49 = sbr.rel (0) target = $region17
    $region16: #{tpu_custom_call.1} parent=1 // pred_region
      _
    $region17: #{tpu_custom_call.1} parent=1 // pred_fallthru
      _
    // Predicated region
    $region18: #{tpu_custom_call.1} parent=1 // pred_check
      _
    $region19: #{tpu_custom_call.1} parent=1 // pred_check_branch
      %51 = sbr.rel (0) target = $region21
    $region20: #{tpu_custom_call.1} parent=1 // pred_region
      %52 = dma.done [#allocation4], 1536
    $region21: #{tpu_custom_call.1} parent=1 // pred_fallthru
      _
    // Predicated region
    $region22: #{tpu_custom_call.1} parent=1 // pred_check
      _
    $region23: #{tpu_custom_call.1} parent=1 // pred_check_branch
      %54 = sbr.rel (0) target = $region25
    $region24: #{tpu_custom_call.1} parent=1 // pred_region
      %55 = dma.done [#allocation7], 27648
    $region25: #{tpu_custom_call.1} parent=1 // pred_fallthru
      _
    // Predicated region
    $region26: #{tpu_custom_call.1} parent=1 // pred_check
      _
    $region27: #{tpu_custom_call.1} parent=1 // pred_check_branch
      %57 = sbr.rel (0) target = $region29
    $region28: #{tpu_custom_call.1} parent=1 // pred_region
      %58 = dma.done [#allocation7], 9216
    $region29: #{tpu_custom_call.1} parent=1 // pred_fallthru
      _
    %v60 = vld [vmem:[#allocation3] sm:$0xff]
    %v61 = vld [vmem:[#allocation3 + $0x8] sm:$0xff]
    %v62 = vld [vmem:[#allocation3 + $0x10] sm:$0xff]
    %v63 = vld [vmem:[#allocation3 + $0x18] sm:$0xff]
    %v64 = vld [vmem:[#allocation3 + $0x20] sm:$0xff]
    %v65 = vld [vmem:[#allocation3 + $0x28] sm:$0xff]
    %v66 = vld [vmem:[#allocation3 + $0x30] sm:$0xff]
    %v67 = vld [vmem:[#allocation3 + $0x38] sm:$0xff]
    %v68 = vld [vmem:[#allocation3 + $0x40] sm:$0xff]
    %v69 = vld [vmem:[#allocation3 + $0x48] sm:$0xff]
    %v70 = vld [vmem:[#allocation3 + $0x50] sm:$0xff]
    %v71 = vld [vmem:[#allocation3 + $0x58] sm:$0xff]
    %v72 = vpack.c.bf16 %v63, %v60
    %v73 = vpack.c.bf16 %v64, %v61
    %v74 = vpack.c.bf16 %v65, %v62
    %v75 = vpack.c.bf16 %v69, %v66
    %v76 = vpack.c.bf16 %v70, %v67
    %v77 = vpack.c.bf16 %v71, %v68
    %v78 = vld [vmem:[#allocation6] sm:$0xff]
    %v79 = vld [vmem:[#allocation6 + $0x8] sm:$0xff]
    %v80 = vld [vmem:[#allocation6 + $0x10] sm:$0xff]
    %v81 = vld [vmem:[#allocation6 + $0x18] sm:$0xff]
    %v82 = vld [vmem:[#allocation6 + $0x20] sm:$0xf]
    %v83 = vld [vmem:[#allocation6 + $0x24] sm:$0xff]
    %v84 = vld [vmem:[#allocation6 + $0x2c] sm:$0xff]
    %v85 = vld [vmem:[#allocation6 + $0x34] sm:$0xff]
    %v86 = vld [vmem:[#allocation6 + $0x3c] sm:$0xff]
    %v87 = vld [vmem:[#allocation6 + $0x44] sm:$0xf]
    %v88 = vld [vmem:[#allocation6 + $0x48] sm:$0xff]
    %v89 = vld [vmem:[#allocation6 + $0x50] sm:$0xff]
    %v90 = vld [vmem:[#allocation6 + $0x58] sm:$0xff]
    %v91 = vld [vmem:[#allocation6 + $0x60] sm:$0xff]
    %v92 = vld [vmem:[#allocation6 + $0x68] sm:$0xf]
    %v93 = vld [vmem:[#allocation6 + $0x6c] sm:$0xff]
    %v94 = vld [vmem:[#allocation6 + $0x74] sm:$0xff]
    %v95 = vld [vmem:[#allocation6 + $0x7c] sm:$0xff]
    %v96 = vld [vmem:[#allocation6 + $0x84] sm:$0xff]
    %v97 = vld [vmem:[#allocation6 + $0x8c] sm:$0xf]
    %v98 = vld [vmem:[#allocation6 + $0x90] sm:$0xff]
    %v99 = vld [vmem:[#allocation6 + $0x98] sm:$0xff]
    %v100 = vld [vmem:[#allocation6 + $0xa0] sm:$0xff]
    %v101 = vld [vmem:[#allocation6 + $0xa8] sm:$0xff]
    %v102 = vld [vmem:[#allocation6 + $0xb0] sm:$0xf]
    %v103 = vld [vmem:[#allocation6 + $0xb4] sm:$0xff]
    %v104 = vld [vmem:[#allocation6 + $0xbc] sm:$0xff]
    %v105 = vld [vmem:[#allocation6 + $0xc4] sm:$0xff]
    %v106 = vld [vmem:[#allocation6 + $0xcc] sm:$0xff]
    %v107 = vld [vmem:[#allocation6 + $0xd4] sm:$0xf]
    %v108 = vld [vmem:[#allocation6 + $0xd8] sm:$0xff]
    %v109 = vld [vmem:[#allocation6 + $0xe0] sm:$0xff]
    %v110 = vld [vmem:[#allocation6 + $0xe8] sm:$0xff]
    %v111 = vld [vmem:[#allocation6 + $0xf0] sm:$0xff]
    %v112 = vld [vmem:[#allocation6 + $0xf8] sm:$0xf]
    %v113 = vld [vmem:[#allocation6 + $0xfc] sm:$0xff]
    %v114 = vld [vmem:[#allocation6 + $0x104] sm:$0xff]
    %v115 = vld [vmem:[#allocation6 + $0x10c] sm:$0xff]
    %v116 = vld [vmem:[#allocation6 + $0x114] sm:$0xff]
    %v117 = vld [vmem:[#allocation6 + $0x11c] sm:$0xf]
    %v118 = vld [vmem:[#allocation6 + $0x120] sm:$0xff]
    %v119 = vld [vmem:[#allocation6 + $0x128] sm:$0xff]
    %v120 = vld [vmem:[#allocation6 + $0x130] sm:$0xff]
    %v121 = vld [vmem:[#allocation6 + $0x138] sm:$0xff]
    %v122 = vld [vmem:[#allocation6 + $0x140] sm:$0xf]
    %v123 = vld [vmem:[#allocation6 + $0x144] sm:$0xff]
    %v124 = vld [vmem:[#allocation6 + $0x14c] sm:$0xff]
    %v125 = vld [vmem:[#allocation6 + $0x154] sm:$0xff]
    %v126 = vld [vmem:[#allocation6 + $0x15c] sm:$0xff]
    %v127 = vld [vmem:[#allocation6 + $0x164] sm:$0xf]
    %v128 = vld [vmem:[#allocation6 + $0x168] sm:$0xff]
    %v129 = vld [vmem:[#allocation6 + $0x170] sm:$0xff]
    %v130 = vld [vmem:[#allocation6 + $0x178] sm:$0xff]
    %v131 = vld [vmem:[#allocation6 + $0x180] sm:$0xff]
    %v132 = vld [vmem:[#allocation6 + $0x188] sm:$0xf]
    %v133 = vld [vmem:[#allocation6 + $0x18c] sm:$0xff]
    %v134 = vld [vmem:[#allocation6 + $0x194] sm:$0xff]
    %v135 = vld [vmem:[#allocation6 + $0x19c] sm:$0xff]
    %v136 = vld [vmem:[#allocation6 + $0x1a4] sm:$0xff]
    %v137 = vld [vmem:[#allocation6 + $0x1ac] sm:$0xf]
    %v138 = vld [vmem:[#allocation6 + $0x1b0] sm:$0xff]
    %v139 = vld [vmem:[#allocation6 + $0x1b8] sm:$0xff]
    %v140 = vld [vmem:[#allocation6 + $0x1c0] sm:$0xff]
    %v141 = vld [vmem:[#allocation6 + $0x1c8] sm:$0xff]
    %v142 = vld [vmem:[#allocation6 + $0x1d0] sm:$0xf]
    %v143 = vld [vmem:[#allocation6 + $0x1d4] sm:$0xff]
    %v144 = vld [vmem:[#allocation6 + $0x1dc] sm:$0xff]
    %v145 = vld [vmem:[#allocation6 + $0x1e4] sm:$0xff]
    %v146 = vld [vmem:[#allocation6 + $0x1ec] sm:$0xff]
    %v147 = vld [vmem:[#allocation6 + $0x1f4] sm:$0xf]
    %v148 = vld [vmem:[#allocation6 + $0x1f8] sm:$0xff]
    %v149 = vld [vmem:[#allocation6 + $0x200] sm:$0xff]
    %v150 = vld [vmem:[#allocation6 + $0x208] sm:$0xff]
    %v151 = vld [vmem:[#allocation6 + $0x210] sm:$0xff]
    %v152 = vld [vmem:[#allocation6 + $0x218] sm:$0xf]
    %v153 = vld [vmem:[#allocation6 + $0x21c] sm:$0xff]
    %v154 = vld [vmem:[#allocation6 + $0x224] sm:$0xff]
    %v155 = vld [vmem:[#allocation6 + $0x22c] sm:$0xff]
    %v156 = vld [vmem:[#allocation6 + $0x234] sm:$0xff]
    %v157 = vld [vmem:[#allocation6 + $0x23c] sm:$0xf]
    %v158 = vld [vmem:[#allocation6 + $0x240] sm:$0xff]
    %v159 = vld [vmem:[#allocation6 + $0x248] sm:$0xff]
    %v160 = vld [vmem:[#allocation6 + $0x250] sm:$0xff]
    %v161 = vld [vmem:[#allocation6 + $0x258] sm:$0xff]
    %v162 = vld [vmem:[#allocation6 + $0x260] sm:$0xf]
    %v163 = vld [vmem:[#allocation6 + $0x264] sm:$0xff]
    %v164 = vld [vmem:[#allocation6 + $0x26c] sm:$0xff]
    %v165 = vld [vmem:[#allocation6 + $0x274] sm:$0xff]
    %v166 = vld [vmem:[#allocation6 + $0x27c] sm:$0xff]
    %v167 = vld [vmem:[#allocation6 + $0x284] sm:$0xf]
    %v168 = vld [vmem:[#allocation6 + $0x288] sm:$0xff]
    %v169 = vld [vmem:[#allocation6 + $0x290] sm:$0xff]
    %v170 = vld [vmem:[#allocation6 + $0x298] sm:$0xff]
    %v171 = vld [vmem:[#allocation6 + $0x2a0] sm:$0xff]
    %v172 = vld [vmem:[#allocation6 + $0x2a8] sm:$0xf]
    %v173 = vld [vmem:[#allocation6 + $0x2ac] sm:$0xff]
    %v174 = vld [vmem:[#allocation6 + $0x2b4] sm:$0xff]
    %v175 = vld [vmem:[#allocation6 + $0x2bc] sm:$0xff]
    %v176 = vld [vmem:[#allocation6 + $0x2c4] sm:$0xff]
    %v177 = vld [vmem:[#allocation6 + $0x2cc] sm:$0xf]
    %v178 = vld [vmem:[#allocation6 + $0x2d0] sm:$0xff]
    %v179 = vld [vmem:[#allocation6 + $0x2d8] sm:$0xff]
    %v180 = vld [vmem:[#allocation6 + $0x2e0] sm:$0xff]
    %v181 = vld [vmem:[#allocation6 + $0x2e8] sm:$0xff]
    %v182 = vld [vmem:[#allocation6 + $0x2f0] sm:$0xf]
    %v183 = vld [vmem:[#allocation6 + $0x2f4] sm:$0xff]
    %v184 = vld [vmem:[#allocation6 + $0x2fc] sm:$0xff]
    %v185 = vld [vmem:[#allocation6 + $0x304] sm:$0xff]
    %v186 = vld [vmem:[#allocation6 + $0x30c] sm:$0xff]
    %v187 = vld [vmem:[#allocation6 + $0x314] sm:$0xf]
    %v188 = vld [vmem:[#allocation6 + $0x318] sm:$0xff]
    %v189 = vld [vmem:[#allocation6 + $0x320] sm:$0xff]
    %v190 = vld [vmem:[#allocation6 + $0x328] sm:$0xff]
    %v191 = vld [vmem:[#allocation6 + $0x330] sm:$0xff]
    %v192 = vld [vmem:[#allocation6 + $0x338] sm:$0xf]
    %v193 = vld [vmem:[#allocation6 + $0x33c] sm:$0xff]
    %v194 = vld [vmem:[#allocation6 + $0x344] sm:$0xff]
    %v195 = vld [vmem:[#allocation6 + $0x34c] sm:$0xff]
    %v196 = vld [vmem:[#allocation6 + $0x354] sm:$0xff]
    %v197 = vld [vmem:[#allocation6 + $0x35c] sm:$0xf]
    %v198 = vld [vmem:[#allocation6 + $0x360] sm:$0xff]
    %v199 = vld [vmem:[#allocation6 + $0x368] sm:$0xff]
    %v200 = vld [vmem:[#allocation6 + $0x370] sm:$0xff]
    %v201 = vld [vmem:[#allocation6 + $0x378] sm:$0xff]
    %v202 = vld [vmem:[#allocation6 + $0x380] sm:$0xf]
    %v203 = vld [vmem:[#allocation6 + $0x384] sm:$0xff]
    %v204 = vld [vmem:[#allocation6 + $0x38c] sm:$0xff]
    %v205 = vld [vmem:[#allocation6 + $0x394] sm:$0xff]
    %v206 = vld [vmem:[#allocation6 + $0x39c] sm:$0xff]
    %v207 = vld [vmem:[#allocation6 + $0x3a4] sm:$0xf]
    %v208 = vld [vmem:[#allocation6 + $0x3a8] sm:$0xff]
    %v209 = vld [vmem:[#allocation6 + $0x3b0] sm:$0xff]
    %v210 = vld [vmem:[#allocation6 + $0x3b8] sm:$0xff]
    %v211 = vld [vmem:[#allocation6 + $0x3c0] sm:$0xff]
    %v212 = vld [vmem:[#allocation6 + $0x3c8] sm:$0xf]
    %v213 = vld [vmem:[#allocation6 + $0x3cc] sm:$0xff]
    %v214 = vld [vmem:[#allocation6 + $0x3d4] sm:$0xff]
    %v215 = vld [vmem:[#allocation6 + $0x3dc] sm:$0xff]
    %v216 = vld [vmem:[#allocation6 + $0x3e4] sm:$0xff]
    %v217 = vld [vmem:[#allocation6 + $0x3ec] sm:$0xf]
    %v218 = vld [vmem:[#allocation6 + $0x3f0] sm:$0xff]
    %v219 = vld [vmem:[#allocation6 + $0x3f8] sm:$0xff]
    %v220 = vld [vmem:[#allocation6 + $0x400] sm:$0xff]
    %v221 = vld [vmem:[#allocation6 + $0x408] sm:$0xff]
    %v222 = vld [vmem:[#allocation6 + $0x410] sm:$0xf]
    %v223 = vld [vmem:[#allocation6 + $0x414] sm:$0xff]
    %v224 = vld [vmem:[#allocation6 + $0x41c] sm:$0xff]
    %v225 = vld [vmem:[#allocation6 + $0x424] sm:$0xff]
    %v226 = vld [vmem:[#allocation6 + $0x42c] sm:$0xff]
    %v227 = vld [vmem:[#allocation6 + $0x434] sm:$0xf]
    %v228 = vld [vmem:[#allocation6 + $0x438] sm:$0xff]
    %v229 = vld [vmem:[#allocation6 + $0x440] sm:$0xff]
    %v230 = vld [vmem:[#allocation6 + $0x448] sm:$0xff]
    %v231 = vld [vmem:[#allocation6 + $0x450] sm:$0xff]
    %v232 = vld [vmem:[#allocation6 + $0x458] sm:$0xf]
    %v233 = vld [vmem:[#allocation6 + $0x45c] sm:$0xff]
    %v234 = vld [vmem:[#allocation6 + $0x464] sm:$0xff]
    %v235 = vld [vmem:[#allocation6 + $0x46c] sm:$0xff]
    %v236 = vld [vmem:[#allocation6 + $0x474] sm:$0xff]
    %v237 = vld [vmem:[#allocation6 + $0x47c] sm:$0xf]
    %v238 = vld [vmem:[#allocation6 + $0x480] sm:$0xff]
    %v239 = vld [vmem:[#allocation6 + $0x488] sm:$0xff]
    %v240 = vld [vmem:[#allocation6 + $0x490] sm:$0xff]
    %v241 = vld [vmem:[#allocation6 + $0x498] sm:$0xff]
    %v242 = vld [vmem:[#allocation6 + $0x4a0] sm:$0xf]
    %v243 = vld [vmem:[#allocation6 + $0x4a4] sm:$0xff]
    %v244 = vld [vmem:[#allocation6 + $0x4ac] sm:$0xff]
    %v245 = vld [vmem:[#allocation6 + $0x4b4] sm:$0xff]
    %v246 = vld [vmem:[#allocation6 + $0x4bc] sm:$0xff]
    %v247 = vld [vmem:[#allocation6 + $0x4c4] sm:$0xf]
    %v248 = vld [vmem:[#allocation6 + $0x4c8] sm:$0xff]
    %v249 = vld [vmem:[#allocation6 + $0x4d0] sm:$0xff]
    %v250 = vld [vmem:[#allocation6 + $0x4d8] sm:$0xff]
    %v251 = vld [vmem:[#allocation6 + $0x4e0] sm:$0xff]
    %v252 = vld [vmem:[#allocation6 + $0x4e8] sm:$0xf]
    %v253 = vld [vmem:[#allocation6 + $0x4ec] sm:$0xff]
    %v254 = vld [vmem:[#allocation6 + $0x4f4] sm:$0xff]
    %v255 = vld [vmem:[#allocation6 + $0x4fc] sm:$0xff]
    %v256 = vld [vmem:[#allocation6 + $0x504] sm:$0xff]
    %v257 = vld [vmem:[#allocation6 + $0x50c] sm:$0xf]
    %v258 = vld [vmem:[#allocation6 + $0x510] sm:$0xff]
    %v259 = vld [vmem:[#allocation6 + $0x518] sm:$0xff]
    %v260 = vld [vmem:[#allocation6 + $0x520] sm:$0xff]
    %v261 = vld [vmem:[#allocation6 + $0x528] sm:$0xff]
    %v262 = vld [vmem:[#allocation6 + $0x530] sm:$0xf]
    %v263 = vld [vmem:[#allocation6 + $0x534] sm:$0xff]
    %v264 = vld [vmem:[#allocation6 + $0x53c] sm:$0xff]
    %v265 = vld [vmem:[#allocation6 + $0x544] sm:$0xff]
    %v266 = vld [vmem:[#allocation6 + $0x54c] sm:$0xff]
    %v267 = vld [vmem:[#allocation6 + $0x554] sm:$0xf]
    %v268 = vld [vmem:[#allocation6 + $0x558] sm:$0xff]
    %v269 = vld [vmem:[#allocation6 + $0x560] sm:$0xff]
    %v270 = vld [vmem:[#allocation6 + $0x568] sm:$0xff]
    %v271 = vld [vmem:[#allocation6 + $0x570] sm:$0xff]
    %v272 = vld [vmem:[#allocation6 + $0x578] sm:$0xf]
    %v273 = vld [vmem:[#allocation6 + $0x57c] sm:$0xff]
    %v274 = vld [vmem:[#allocation6 + $0x584] sm:$0xff]
    %v275 = vld [vmem:[#allocation6 + $0x58c] sm:$0xff]
    %v276 = vld [vmem:[#allocation6 + $0x594] sm:$0xff]
    %v277 = vld [vmem:[#allocation6 + $0x59c] sm:$0xf]
    %v278 = vld [vmem:[#allocation6 + $0x5a0] sm:$0xff]
    %v279 = vld [vmem:[#allocation6 + $0x5a8] sm:$0xff]
    %v280 = vld [vmem:[#allocation6 + $0x5b0] sm:$0xff]
    %v281 = vld [vmem:[#allocation6 + $0x5b8] sm:$0xff]
    %v282 = vld [vmem:[#allocation6 + $0x5c0] sm:$0xf]
    %v283 = vld [vmem:[#allocation6 + $0x5c4] sm:$0xff]
    %v284 = vld [vmem:[#allocation6 + $0x5cc] sm:$0xff]
    %v285 = vld [vmem:[#allocation6 + $0x5d4] sm:$0xff]
    %v286 = vld [vmem:[#allocation6 + $0x5dc] sm:$0xff]
    %v287 = vld [vmem:[#allocation6 + $0x5e4] sm:$0xf]
    %v288 = vld [vmem:[#allocation6 + $0x5e8] sm:$0xff]
    %v289 = vld [vmem:[#allocation6 + $0x5f0] sm:$0xff]
    %v290 = vld [vmem:[#allocation6 + $0x5f8] sm:$0xff]
    %v291 = vld [vmem:[#allocation6 + $0x600] sm:$0xff]
    %v292 = vld [vmem:[#allocation6 + $0x608] sm:$0xf]
    %v293 = vld [vmem:[#allocation6 + $0x60c] sm:$0xff]
    %v294 = vld [vmem:[#allocation6 + $0x614] sm:$0xff]
    %v295 = vld [vmem:[#allocation6 + $0x61c] sm:$0xff]
    %v296 = vld [vmem:[#allocation6 + $0x624] sm:$0xff]
    %v297 = vld [vmem:[#allocation6 + $0x62c] sm:$0xf]
    %v298 = vld [vmem:[#allocation6 + $0x630] sm:$0xff]
    %v299 = vld [vmem:[#allocation6 + $0x638] sm:$0xff]
    %v300 = vld [vmem:[#allocation6 + $0x640] sm:$0xff]
    %v301 = vld [vmem:[#allocation6 + $0x648] sm:$0xff]
    %v302 = vld [vmem:[#allocation6 + $0x650] sm:$0xf]
    %v303 = vld [vmem:[#allocation6 + $0x654] sm:$0xff]
    %v304 = vld [vmem:[#allocation6 + $0x65c] sm:$0xff]
    %v305 = vld [vmem:[#allocation6 + $0x664] sm:$0xff]
    %v306 = vld [vmem:[#allocation6 + $0x66c] sm:$0xff]
    %v307 = vld [vmem:[#allocation6 + $0x674] sm:$0xf]
    %v308 = vld [vmem:[#allocation6 + $0x678] sm:$0xff]
    %v309 = vld [vmem:[#allocation6 + $0x680] sm:$0xff]
    %v310 = vld [vmem:[#allocation6 + $0x688] sm:$0xff]
    %v311 = vld [vmem:[#allocation6 + $0x690] sm:$0xff]
    %v312 = vld [vmem:[#allocation6 + $0x698] sm:$0xf]
    %v313 = vld [vmem:[#allocation6 + $0x69c] sm:$0xff]
    %v314 = vld [vmem:[#allocation6 + $0x6a4] sm:$0xff]
    %v315 = vld [vmem:[#allocation6 + $0x6ac] sm:$0xff]
    %v316 = vld [vmem:[#allocation6 + $0x6b4] sm:$0xff]
    %v317 = vld [vmem:[#allocation6 + $0x6bc] sm:$0xf]
    %v558 = vunpack.c.l.b16 %v78
    %v559 = vunpack.c.h.b16 %v78
    %v560 = vunpack.c.l.b16 %v79
    %v561 = vunpack.c.h.b16 %v79
    %v562 = vunpack.c.l.b16 %v80
    %v563 = vunpack.c.h.b16 %v80
    %v564 = vunpack.c.l.b16 %v81
    %v565 = vunpack.c.h.b16 %v81
    %v566 = vunpack.c.l.b16 %v82
    %v567 = vunpack.c.l.b16 %v83
    %v568 = vunpack.c.h.b16 %v83
    %v569 = vunpack.c.l.b16 %v84
    %v570 = vunpack.c.h.b16 %v84
    %v571 = vunpack.c.l.b16 %v85
    %v572 = vunpack.c.h.b16 %v85
    %v573 = vunpack.c.l.b16 %v86
    %v574 = vunpack.c.h.b16 %v86
    %v575 = vunpack.c.l.b16 %v87
    %v576 = vunpack.c.l.b16 %v88
    %v577 = vunpack.c.h.b16 %v88
    %v578 = vunpack.c.l.b16 %v89
    %v579 = vunpack.c.h.b16 %v89
    %v580 = vunpack.c.l.b16 %v90
    %v581 = vunpack.c.h.b16 %v90
    %v582 = vunpack.c.l.b16 %v91
    %v583 = vunpack.c.h.b16 %v91
    %v584 = vunpack.c.l.b16 %v92
    %v585 = vunpack.c.l.b16 %v93
    %v586 = vunpack.c.h.b16 %v93
    %v587 = vunpack.c.l.b16 %v94
    %v588 = vunpack.c.h.b16 %v94
    %v589 = vunpack.c.l.b16 %v95
    %v590 = vunpack.c.h.b16 %v95
    %v591 = vunpack.c.l.b16 %v96
    %v592 = vunpack.c.h.b16 %v96
    %v593 = vunpack.c.l.b16 %v97
    %v594 = vunpack.c.l.b16 %v98
    %v595 = vunpack.c.h.b16 %v98
    %v596 = vunpack.c.l.b16 %v99
    %v597 = vunpack.c.h.b16 %v99
    %v598 = vunpack.c.l.b16 %v100
    %v599 = vunpack.c.h.b16 %v100
    %v600 = vunpack.c.l.b16 %v101
    %v601 = vunpack.c.h.b16 %v101
    %v602 = vunpack.c.l.b16 %v102
    %v603 = vunpack.c.l.b16 %v103
    %v604 = vunpack.c.h.b16 %v103
    %v605 = vunpack.c.l.b16 %v104
    %v606 = vunpack.c.h.b16 %v104
    %v607 = vunpack.c.l.b16 %v105
    %v608 = vunpack.c.h.b16 %v105
    %v609 = vunpack.c.l.b16 %v106
    %v610 = vunpack.c.h.b16 %v106
    %v611 = vunpack.c.l.b16 %v107
    %v612 = vunpack.c.l.b16 %v108
    %v613 = vunpack.c.h.b16 %v108
    %v614 = vunpack.c.l.b16 %v109
    %v615 = vunpack.c.h.b16 %v109
    %v616 = vunpack.c.l.b16 %v110
    %v617 = vunpack.c.h.b16 %v110
    %v618 = vunpack.c.l.b16 %v111
    %v619 = vunpack.c.h.b16 %v111
    %v620 = vunpack.c.l.b16 %v112
    %v621 = vunpack.c.l.b16 %v113
    %v622 = vunpack.c.h.b16 %v113
    %v623 = vunpack.c.l.b16 %v114
    %v624 = vunpack.c.h.b16 %v114
    %v625 = vunpack.c.l.b16 %v115
    %v626 = vunpack.c.h.b16 %v115
    %v627 = vunpack.c.l.b16 %v116
    %v628 = vunpack.c.h.b16 %v116
    %v629 = vunpack.c.l.b16 %v117
    %v630 = vunpack.c.l.b16 %v118
    %v631 = vunpack.c.h.b16 %v118
    %v632 = vunpack.c.l.b16 %v119
    %v633 = vunpack.c.h.b16 %v119
    %v634 = vunpack.c.l.b16 %v120
    %v635 = vunpack.c.h.b16 %v120
    %v636 = vunpack.c.l.b16 %v121
    %v637 = vunpack.c.h.b16 %v121
    %v638 = vunpack.c.l.b16 %v122
    %v639 = vunpack.c.l.b16 %v123
    %v640 = vunpack.c.h.b16 %v123
    %v641 = vunpack.c.l.b16 %v124
    %v642 = vunpack.c.h.b16 %v124
    %v643 = vunpack.c.l.b16 %v125
    %v644 = vunpack.c.h.b16 %v125
    %v645 = vunpack.c.l.b16 %v126
    %v646 = vunpack.c.h.b16 %v126
    %v647 = vunpack.c.l.b16 %v127
    %v648 = vunpack.c.l.b16 %v128
    %v649 = vunpack.c.h.b16 %v128
    %v650 = vunpack.c.l.b16 %v129
    %v651 = vunpack.c.h.b16 %v129
    %v652 = vunpack.c.l.b16 %v130
    %v653 = vunpack.c.h.b16 %v130
    %v654 = vunpack.c.l.b16 %v131
    %v655 = vunpack.c.h.b16 %v131
    %v656 = vunpack.c.l.b16 %v132
    %v657 = vunpack.c.l.b16 %v133
    %v658 = vunpack.c.h.b16 %v133
    %v659 = vunpack.c.l.b16 %v134
    %v660 = vunpack.c.h.b16 %v134
    %v661 = vunpack.c.l.b16 %v135
    %v662 = vunpack.c.h.b16 %v135
    %v663 = vunpack.c.l.b16 %v136
    %v664 = vunpack.c.h.b16 %v136
    %v665 = vunpack.c.l.b16 %v137
    %v666 = vunpack.c.l.b16 %v138
    %v667 = vunpack.c.h.b16 %v138
    %v668 = vunpack.c.l.b16 %v139
    %v669 = vunpack.c.h.b16 %v139
    %v670 = vunpack.c.l.b16 %v140
    %v671 = vunpack.c.h.b16 %v140
    %v672 = vunpack.c.l.b16 %v141
    %v673 = vunpack.c.h.b16 %v141
    %v674 = vunpack.c.l.b16 %v142
    %v675 = vunpack.c.l.b16 %v143
    %v676 = vunpack.c.h.b16 %v143
    %v677 = vunpack.c.l.b16 %v144
    %v678 = vunpack.c.h.b16 %v144
    %v679 = vunpack.c.l.b16 %v145
    %v680 = vunpack.c.h.b16 %v145
    %v681 = vunpack.c.l.b16 %v146
    %v682 = vunpack.c.h.b16 %v146
    %v683 = vunpack.c.l.b16 %v147
    %v684 = vunpack.c.l.b16 %v148
    %v685 = vunpack.c.h.b16 %v148
    %v686 = vunpack.c.l.b16 %v149
    %v687 = vunpack.c.h.b16 %v149
    %v688 = vunpack.c.l.b16 %v150
    %v689 = vunpack.c.h.b16 %v150
    %v690 = vunpack.c.l.b16 %v151
    %v691 = vunpack.c.h.b16 %v151
    %v692 = vunpack.c.l.b16 %v152
    %v693 = vunpack.c.l.b16 %v153
    %v694 = vunpack.c.h.b16 %v153
    %v695 = vunpack.c.l.b16 %v154
    %v696 = vunpack.c.h.b16 %v154
    %v697 = vunpack.c.l.b16 %v155
    %v698 = vunpack.c.h.b16 %v155
    %v699 = vunpack.c.l.b16 %v156
    %v700 = vunpack.c.h.b16 %v156
    %v701 = vunpack.c.l.b16 %v157
    %v702 = vunpack.c.l.b16 %v158
    %v703 = vunpack.c.h.b16 %v158
    %v704 = vunpack.c.l.b16 %v159
    %v705 = vunpack.c.h.b16 %v159
    %v706 = vunpack.c.l.b16 %v160
    %v707 = vunpack.c.h.b16 %v160
    %v708 = vunpack.c.l.b16 %v161
    %v709 = vunpack.c.h.b16 %v161
    %v710 = vunpack.c.l.b16 %v162
    %v711 = vunpack.c.l.b16 %v163
    %v712 = vunpack.c.h.b16 %v163
    %v713 = vunpack.c.l.b16 %v164
    %v714 = vunpack.c.h.b16 %v164
    %v715 = vunpack.c.l.b16 %v165
    %v716 = vunpack.c.h.b16 %v165
    %v717 = vunpack.c.l.b16 %v166
    %v718 = vunpack.c.h.b16 %v166
    %v719 = vunpack.c.l.b16 %v167
    %v720 = vunpack.c.l.b16 %v168
    %v721 = vunpack.c.h.b16 %v168
    %v722 = vunpack.c.l.b16 %v169
    %v723 = vunpack.c.h.b16 %v169
    %v724 = vunpack.c.l.b16 %v170
    %v725 = vunpack.c.h.b16 %v170
    %v726 = vunpack.c.l.b16 %v171
    %v727 = vunpack.c.h.b16 %v171
    %v728 = vunpack.c.l.b16 %v172
    %v729 = vunpack.c.l.b16 %v173
    %v730 = vunpack.c.h.b16 %v173
    %v731 = vunpack.c.l.b16 %v174
    %v732 = vunpack.c.h.b16 %v174
    %v733 = vunpack.c.l.b16 %v175
    %v734 = vunpack.c.h.b16 %v175
    %v735 = vunpack.c.l.b16 %v176
    %v736 = vunpack.c.h.b16 %v176
    %v737 = vunpack.c.l.b16 %v177
    %v738 = vunpack.c.l.b16 %v178
    %v739 = vunpack.c.h.b16 %v178
    %v740 = vunpack.c.l.b16 %v179
    %v741 = vunpack.c.h.b16 %v179
    %v742 = vunpack.c.l.b16 %v180
    %v743 = vunpack.c.h.b16 %v180
    %v744 = vunpack.c.l.b16 %v181
    %v745 = vunpack.c.h.b16 %v181
    %v746 = vunpack.c.l.b16 %v182
    %v747 = vunpack.c.l.b16 %v183
    %v748 = vunpack.c.h.b16 %v183
    %v749 = vunpack.c.l.b16 %v184
    %v750 = vunpack.c.h.b16 %v184
    %v751 = vunpack.c.l.b16 %v185
    %v752 = vunpack.c.h.b16 %v185
    %v753 = vunpack.c.l.b16 %v186
    %v754 = vunpack.c.h.b16 %v186
    %v755 = vunpack.c.l.b16 %v187
    %v756 = vunpack.c.l.b16 %v188
    %v757 = vunpack.c.h.b16 %v188
    %v758 = vunpack.c.l.b16 %v189
    %v759 = vunpack.c.h.b16 %v189
    %v760 = vunpack.c.l.b16 %v190
    %v761 = vunpack.c.h.b16 %v190
    %v762 = vunpack.c.l.b16 %v191
    %v763 = vunpack.c.h.b16 %v191
    %v764 = vunpack.c.l.b16 %v192
    %v765 = vunpack.c.l.b16 %v193
    %v766 = vunpack.c.h.b16 %v193
    %v767 = vunpack.c.l.b16 %v194
    %v768 = vunpack.c.h.b16 %v194
    %v769 = vunpack.c.l.b16 %v195
    %v770 = vunpack.c.h.b16 %v195
    %v771 = vunpack.c.l.b16 %v196
    %v772 = vunpack.c.h.b16 %v196
    %v773 = vunpack.c.l.b16 %v197
    %v774 = vunpack.c.l.b16 %v198
    %v775 = vunpack.c.h.b16 %v198
    %v776 = vunpack.c.l.b16 %v199
    %v777 = vunpack.c.h.b16 %v199
    %v778 = vunpack.c.l.b16 %v200
    %v779 = vunpack.c.h.b16 %v200
    %v780 = vunpack.c.l.b16 %v201
    %v781 = vunpack.c.h.b16 %v201
    %v782 = vunpack.c.l.b16 %v202
    %v783 = vunpack.c.l.b16 %v203
    %v784 = vunpack.c.h.b16 %v203
    %v785 = vunpack.c.l.b16 %v204
    %v786 = vunpack.c.h.b16 %v204
    %v787 = vunpack.c.l.b16 %v205
    %v788 = vunpack.c.h.b16 %v205
    %v789 = vunpack.c.l.b16 %v206
    %v790 = vunpack.c.h.b16 %v206
    %v791 = vunpack.c.l.b16 %v207
    %v792 = vunpack.c.l.b16 %v208
    %v793 = vunpack.c.h.b16 %v208
    %v794 = vunpack.c.l.b16 %v209
    %v795 = vunpack.c.h.b16 %v209
    %v796 = vunpack.c.l.b16 %v210
    %v797 = vunpack.c.h.b16 %v210
    %v798 = vunpack.c.l.b16 %v211
    %v799 = vunpack.c.h.b16 %v211
    %v800 = vunpack.c.l.b16 %v212
    %v801 = vunpack.c.l.b16 %v213
    %v802 = vunpack.c.h.b16 %v213
    %v803 = vunpack.c.l.b16 %v214
    %v804 = vunpack.c.h.b16 %v214
    %v805 = vunpack.c.l.b16 %v215
    %v806 = vunpack.c.h.b16 %v215
    %v807 = vunpack.c.l.b16 %v216
    %v808 = vunpack.c.h.b16 %v216
    %v809 = vunpack.c.l.b16 %v217
    %v810 = vunpack.c.l.b16 %v218
    %v811 = vunpack.c.h.b16 %v218
    %v812 = vunpack.c.l.b16 %v219
    %v813 = vunpack.c.h.b16 %v219
    %v814 = vunpack.c.l.b16 %v220
    %v815 = vunpack.c.h.b16 %v220
    %v816 = vunpack.c.l.b16 %v221
    %v817 = vunpack.c.h.b16 %v221
    %v818 = vunpack.c.l.b16 %v222
    %v819 = vunpack.c.l.b16 %v223
    %v820 = vunpack.c.h.b16 %v223
    %v821 = vunpack.c.l.b16 %v224
    %v822 = vunpack.c.h.b16 %v224
    %v823 = vunpack.c.l.b16 %v225
    %v824 = vunpack.c.h.b16 %v225
    %v825 = vunpack.c.l.b16 %v226
    %v826 = vunpack.c.h.b16 %v226
    %v827 = vunpack.c.l.b16 %v227
    %v828 = vunpack.c.l.b16 %v228
    %v829 = vunpack.c.h.b16 %v228
    %v830 = vunpack.c.l.b16 %v229
    %v831 = vunpack.c.h.b16 %v229
    %v832 = vunpack.c.l.b16 %v230
    %v833 = vunpack.c.h.b16 %v230
    %v834 = vunpack.c.l.b16 %v231
    %v835 = vunpack.c.h.b16 %v231
    %v836 = vunpack.c.l.b16 %v232
    %v837 = vunpack.c.l.b16 %v233
    %v838 = vunpack.c.h.b16 %v233
    %v839 = vunpack.c.l.b16 %v234
    %v840 = vunpack.c.h.b16 %v234
    %v841 = vunpack.c.l.b16 %v235
    %v842 = vunpack.c.h.b16 %v235
    %v843 = vunpack.c.l.b16 %v236
    %v844 = vunpack.c.h.b16 %v236
    %v845 = vunpack.c.l.b16 %v237
    %v846 = vunpack.c.l.b16 %v238
    %v847 = vunpack.c.h.b16 %v238
    %v848 = vunpack.c.l.b16 %v239
    %v849 = vunpack.c.h.b16 %v239
    %v850 = vunpack.c.l.b16 %v240
    %v851 = vunpack.c.h.b16 %v240
    %v852 = vunpack.c.l.b16 %v241
    %v853 = vunpack.c.h.b16 %v241
    %v854 = vunpack.c.l.b16 %v242
    %v855 = vunpack.c.l.b16 %v243
    %v856 = vunpack.c.h.b16 %v243
    %v857 = vunpack.c.l.b16 %v244
    %v858 = vunpack.c.h.b16 %v244
    %v859 = vunpack.c.l.b16 %v245
    %v860 = vunpack.c.h.b16 %v245
    %v861 = vunpack.c.l.b16 %v246
    %v862 = vunpack.c.h.b16 %v246
    %v863 = vunpack.c.l.b16 %v247
    %v864 = vunpack.c.l.b16 %v248
    %v865 = vunpack.c.h.b16 %v248
    %v866 = vunpack.c.l.b16 %v249
    %v867 = vunpack.c.h.b16 %v249
    %v868 = vunpack.c.l.b16 %v250
    %v869 = vunpack.c.h.b16 %v250
    %v870 = vunpack.c.l.b16 %v251
    %v871 = vunpack.c.h.b16 %v251
    %v872 = vunpack.c.l.b16 %v252
    %v873 = vunpack.c.l.b16 %v253
    %v874 = vunpack.c.h.b16 %v253
    %v875 = vunpack.c.l.b16 %v254
    %v876 = vunpack.c.h.b16 %v254
    %v877 = vunpack.c.l.b16 %v255
    %v878 = vunpack.c.h.b16 %v255
    %v879 = vunpack.c.l.b16 %v256
    %v880 = vunpack.c.h.b16 %v256
    %v881 = vunpack.c.l.b16 %v257
    %v882 = vunpack.c.l.b16 %v258
    %v883 = vunpack.c.h.b16 %v258
    %v884 = vunpack.c.l.b16 %v259
    %v885 = vunpack.c.h.b16 %v259
    %v886 = vunpack.c.l.b16 %v260
    %v887 = vunpack.c.h.b16 %v260
    %v888 = vunpack.c.l.b16 %v261
    %v889 = vunpack.c.h.b16 %v261
    %v890 = vunpack.c.l.b16 %v262
    %v891 = vunpack.c.l.b16 %v263
    %v892 = vunpack.c.h.b16 %v263
    %v893 = vunpack.c.l.b16 %v264
    %v894 = vunpack.c.h.b16 %v264
    %v895 = vunpack.c.l.b16 %v265
    %v896 = vunpack.c.h.b16 %v265
    %v897 = vunpack.c.l.b16 %v266
    %v898 = vunpack.c.h.b16 %v266
    %v899 = vunpack.c.l.b16 %v267
    %v900 = vunpack.c.l.b16 %v268
    %v901 = vunpack.c.h.b16 %v268
    %v902 = vunpack.c.l.b16 %v269
    %v903 = vunpack.c.h.b16 %v269
    %v904 = vunpack.c.l.b16 %v270
    %v905 = vunpack.c.h.b16 %v270
    %v906 = vunpack.c.l.b16 %v271
    %v907 = vunpack.c.h.b16 %v271
    %v908 = vunpack.c.l.b16 %v272
    %v909 = vunpack.c.l.b16 %v273
    %v910 = vunpack.c.h.b16 %v273
    %v911 = vunpack.c.l.b16 %v274
    %v912 = vunpack.c.h.b16 %v274
    %v913 = vunpack.c.l.b16 %v275
    %v914 = vunpack.c.h.b16 %v275
    %v915 = vunpack.c.l.b16 %v276
    %v916 = vunpack.c.h.b16 %v276
    %v917 = vunpack.c.l.b16 %v277
    %v918 = vunpack.c.l.b16 %v278
    %v919 = vunpack.c.h.b16 %v278
    %v920 = vunpack.c.l.b16 %v279
    %v921 = vunpack.c.h.b16 %v279
    %v922 = vunpack.c.l.b16 %v280
    %v923 = vunpack.c.h.b16 %v280
    %v924 = vunpack.c.l.b16 %v281
    %v925 = vunpack.c.h.b16 %v281
    %v926 = vunpack.c.l.b16 %v282
    %v927 = vunpack.c.l.b16 %v283
    %v928 = vunpack.c.h.b16 %v283
    %v929 = vunpack.c.l.b16 %v284
    %v930 = vunpack.c.h.b16 %v284
    %v931 = vunpack.c.l.b16 %v285
    %v932 = vunpack.c.h.b16 %v285
    %v933 = vunpack.c.l.b16 %v286
    %v934 = vunpack.c.h.b16 %v286
    %v935 = vunpack.c.l.b16 %v287
    %v936 = vunpack.c.l.b16 %v288
    %v937 = vunpack.c.h.b16 %v288
    %v938 = vunpack.c.l.b16 %v289
    %v939 = vunpack.c.h.b16 %v289
    %v940 = vunpack.c.l.b16 %v290
    %v941 = vunpack.c.h.b16 %v290
    %v942 = vunpack.c.l.b16 %v291
    %v943 = vunpack.c.h.b16 %v291
    %v944 = vunpack.c.l.b16 %v292
    %v945 = vunpack.c.l.b16 %v293
    %v946 = vunpack.c.h.b16 %v293
    %v947 = vunpack.c.l.b16 %v294
    %v948 = vunpack.c.h.b16 %v294
    %v949 = vunpack.c.l.b16 %v295
    %v950 = vunpack.c.h.b16 %v295
    %v951 = vunpack.c.l.b16 %v296
    %v952 = vunpack.c.h.b16 %v296
    %v953 = vunpack.c.l.b16 %v297
    %v954 = vunpack.c.l.b16 %v298
    %v955 = vunpack.c.h.b16 %v298
    %v956 = vunpack.c.l.b16 %v299
    %v957 = vunpack.c.h.b16 %v299
    %v958 = vunpack.c.l.b16 %v300
    %v959 = vunpack.c.h.b16 %v300
    %v960 = vunpack.c.l.b16 %v301
    %v961 = vunpack.c.h.b16 %v301
    %v962 = vunpack.c.l.b16 %v302
    %v963 = vunpack.c.l.b16 %v303
    %v964 = vunpack.c.h.b16 %v303
    %v965 = vunpack.c.l.b16 %v304
    %v966 = vunpack.c.h.b16 %v304
    %v967 = vunpack.c.l.b16 %v305
    %v968 = vunpack.c.h.b16 %v305
    %v969 = vunpack.c.l.b16 %v306
    %v970 = vunpack.c.h.b16 %v306
    %v971 = vunpack.c.l.b16 %v307
    %v972 = vunpack.c.l.b16 %v308
    %v973 = vunpack.c.h.b16 %v308
    %v974 = vunpack.c.l.b16 %v309
    %v975 = vunpack.c.h.b16 %v309
    %v976 = vunpack.c.l.b16 %v310
    %v977 = vunpack.c.h.b16 %v310
    %v978 = vunpack.c.l.b16 %v311
    %v979 = vunpack.c.h.b16 %v311
    %v980 = vunpack.c.l.b16 %v312
    %v981 = vunpack.c.l.b16 %v313
    %v982 = vunpack.c.h.b16 %v313
    %v983 = vunpack.c.l.b16 %v314
    %v984 = vunpack.c.h.b16 %v314
    %v985 = vunpack.c.l.b16 %v315
    %v986 = vunpack.c.h.b16 %v315
    %v987 = vunpack.c.l.b16 %v316
    %v988 = vunpack.c.h.b16 %v316
    %v989 = vunpack.c.l.b16 %v317
    %v990 = vpack.c.b16 %v567, %v558
    %v991 = vpack.c.b16 %v568, %v559
    %v992 = vpack.c.b16 %v569, %v560
    %v993 = vpack.c.b16 %v570, %v561
    %v994 = vpack.c.b16 %v571, %v562
    %v995 = vpack.c.b16 %v572, %v563
    %v996 = vpack.c.b16 %v573, %v564
    %v997 = vpack.c.b16 %v574, %v565
    %v998 = vpack.c.b16 %v575, %v566
    %v999 = vpack.c.b16 %v585, %v576
    %v1000 = vpack.c.b16 %v586, %v577
    %v1001 = vpack.c.b16 %v587, %v578
    %v1002 = vpack.c.b16 %v588, %v579
    %v1003 = vpack.c.b16 %v589, %v580
    %v1004 = vpack.c.b16 %v590, %v581
    %v1005 = vpack.c.b16 %v591, %v582
    %v1006 = vpack.c.b16 %v592, %v583
    %v1007 = vpack.c.b16 %v593, %v584
    %v1008 = vpack.c.b16 %v603, %v594
    %v1009 = vpack.c.b16 %v604, %v595
    %v1010 = vpack.c.b16 %v605, %v596
    %v1011 = vpack.c.b16 %v606, %v597
    %v1012 = vpack.c.b16 %v607, %v598
    %v1013 = vpack.c.b16 %v608, %v599
    %v1014 = vpack.c.b16 %v609, %v600
    %v1015 = vpack.c.b16 %v610, %v601
    %v1016 = vpack.c.b16 %v611, %v602
    %v1017 = vpack.c.b16 %v621, %v612
    %v1018 = vpack.c.b16 %v622, %v613
    %v1019 = vpack.c.b16 %v623, %v614
    %v1020 = vpack.c.b16 %v624, %v615
    %v1021 = vpack.c.b16 %v625, %v616
    %v1022 = vpack.c.b16 %v626, %v617
    %v1023 = vpack.c.b16 %v627, %v618
    %v1024 = vpack.c.b16 %v628, %v619
    %v1025 = vpack.c.b16 %v629, %v620
    %v1026 = vpack.c.b16 %v639, %v630
    %v1027 = vpack.c.b16 %v640, %v631
    %v1028 = vpack.c.b16 %v641, %v632
    %v1029 = vpack.c.b16 %v642, %v633
    %v1030 = vpack.c.b16 %v643, %v634
    %v1031 = vpack.c.b16 %v644, %v635
    %v1032 = vpack.c.b16 %v645, %v636
    %v1033 = vpack.c.b16 %v646, %v637
    %v1034 = vpack.c.b16 %v647, %v638
    %v1035 = vpack.c.b16 %v657, %v648
    %v1036 = vpack.c.b16 %v658, %v649
    %v1037 = vpack.c.b16 %v659, %v650
    %v1038 = vpack.c.b16 %v660, %v651
    %v1039 = vpack.c.b16 %v661, %v652
    %v1040 = vpack.c.b16 %v662, %v653
    %v1041 = vpack.c.b16 %v663, %v654
    %v1042 = vpack.c.b16 %v664, %v655
    %v1043 = vpack.c.b16 %v665, %v656
    %v1044 = vpack.c.b16 %v675, %v666
    %v1045 = vpack.c.b16 %v676, %v667
    %v1046 = vpack.c.b16 %v677, %v668
    %v1047 = vpack.c.b16 %v678, %v669
    %v1048 = vpack.c.b16 %v679, %v670
    %v1049 = vpack.c.b16 %v680, %v671
    %v1050 = vpack.c.b16 %v681, %v672
    %v1051 = vpack.c.b16 %v682, %v673
    %v1052 = vpack.c.b16 %v683, %v674
    %v1053 = vpack.c.b16 %v693, %v684
    %v1054 = vpack.c.b16 %v694, %v685
    %v1055 = vpack.c.b16 %v695, %v686
    %v1056 = vpack.c.b16 %v696, %v687
    %v1057 = vpack.c.b16 %v697, %v688
    %v1058 = vpack.c.b16 %v698, %v689
    %v1059 = vpack.c.b16 %v699, %v690
    %v1060 = vpack.c.b16 %v700, %v691
    %v1061 = vpack.c.b16 %v701, %v692
    %v1062 = vpack.c.b16 %v711, %v702
    %v1063 = vpack.c.b16 %v712, %v703
    %v1064 = vpack.c.b16 %v713, %v704
    %v1065 = vpack.c.b16 %v714, %v705
    %v1066 = vpack.c.b16 %v715, %v706
    %v1067 = vpack.c.b16 %v716, %v707
    %v1068 = vpack.c.b16 %v717, %v708
    %v1069 = vpack.c.b16 %v718, %v709
    %v1070 = vpack.c.b16 %v719, %v710
    %v1071 = vpack.c.b16 %v729, %v720
    %v1072 = vpack.c.b16 %v730, %v721
    %v1073 = vpack.c.b16 %v731, %v722
    %v1074 = vpack.c.b16 %v732, %v723
    %v1075 = vpack.c.b16 %v733, %v724
    %v1076 = vpack.c.b16 %v734, %v725
    %v1077 = vpack.c.b16 %v735, %v726
    %v1078 = vpack.c.b16 %v736, %v727
    %v1079 = vpack.c.b16 %v737, %v728
    %v1080 = vpack.c.b16 %v747, %v738
    %v1081 = vpack.c.b16 %v748, %v739
    %v1082 = vpack.c.b16 %v749, %v740
    %v1083 = vpack.c.b16 %v750, %v741
    %v1084 = vpack.c.b16 %v751, %v742
    %v1085 = vpack.c.b16 %v752, %v743
    %v1086 = vpack.c.b16 %v753, %v744
    %v1087 = vpack.c.b16 %v754, %v745
    %v1088 = vpack.c.b16 %v755, %v746
    %v1089 = vpack.c.b16 %v765, %v756
    %v1090 = vpack.c.b16 %v766, %v757
    %v1091 = vpack.c.b16 %v767, %v758
    %v1092 = vpack.c.b16 %v768, %v759
    %v1093 = vpack.c.b16 %v769, %v760
    %v1094 = vpack.c.b16 %v770, %v761
    %v1095 = vpack.c.b16 %v771, %v762
    %v1096 = vpack.c.b16 %v772, %v763
    %v1097 = vpack.c.b16 %v773, %v764
    %v1098 = vpack.c.b16 %v783, %v774
    %v1099 = vpack.c.b16 %v784, %v775
    %v1100 = vpack.c.b16 %v785, %v776
    %v1101 = vpack.c.b16 %v786, %v777
    %v1102 = vpack.c.b16 %v787, %v778
    %v1103 = vpack.c.b16 %v788, %v779
    %v1104 = vpack.c.b16 %v789, %v780
    %v1105 = vpack.c.b16 %v790, %v781
    %v1106 = vpack.c.b16 %v791, %v782
    %v1107 = vpack.c.b16 %v801, %v792
    %v1108 = vpack.c.b16 %v802, %v793
    %v1109 = vpack.c.b16 %v803, %v794
    %v1110 = vpack.c.b16 %v804, %v795
    %v1111 = vpack.c.b16 %v805, %v796
    %v1112 = vpack.c.b16 %v806, %v797
    %v1113 = vpack.c.b16 %v807, %v798
    %v1114 = vpack.c.b16 %v808, %v799
    %v1115 = vpack.c.b16 %v809, %v800
    %v1116 = vpack.c.b16 %v819, %v810
    %v1117 = vpack.c.b16 %v820, %v811
    %v1118 = vpack.c.b16 %v821, %v812
    %v1119 = vpack.c.b16 %v822, %v813
    %v1120 = vpack.c.b16 %v823, %v814
    %v1121 = vpack.c.b16 %v824, %v815
    %v1122 = vpack.c.b16 %v825, %v816
    %v1123 = vpack.c.b16 %v826, %v817
    %v1124 = vpack.c.b16 %v827, %v818
    %v1125 = vpack.c.b16 %v837, %v828
    %v1126 = vpack.c.b16 %v838, %v829
    %v1127 = vpack.c.b16 %v839, %v830
    %v1128 = vpack.c.b16 %v840, %v831
    %v1129 = vpack.c.b16 %v841, %v832
    %v1130 = vpack.c.b16 %v842, %v833
    %v1131 = vpack.c.b16 %v843, %v834
    %v1132 = vpack.c.b16 %v844, %v835
    %v1133 = vpack.c.b16 %v845, %v836
    %v1134 = vpack.c.b16 %v855, %v846
    %v1135 = vpack.c.b16 %v856, %v847
    %v1136 = vpack.c.b16 %v857, %v848
    %v1137 = vpack.c.b16 %v858, %v849
    %v1138 = vpack.c.b16 %v859, %v850
    %v1139 = vpack.c.b16 %v860, %v851
    %v1140 = vpack.c.b16 %v861, %v852
    %v1141 = vpack.c.b16 %v862, %v853
    %v1142 = vpack.c.b16 %v863, %v854
    %v1143 = vpack.c.b16 %v873, %v864
    %v1144 = vpack.c.b16 %v874, %v865
    %v1145 = vpack.c.b16 %v875, %v866
    %v1146 = vpack.c.b16 %v876, %v867
    %v1147 = vpack.c.b16 %v877, %v868
    %v1148 = vpack.c.b16 %v878, %v869
    %v1149 = vpack.c.b16 %v879, %v870
    %v1150 = vpack.c.b16 %v880, %v871
    %v1151 = vpack.c.b16 %v881, %v872
    %v1152 = vpack.c.b16 %v891, %v882
    %v1153 = vpack.c.b16 %v892, %v883
    %v1154 = vpack.c.b16 %v893, %v884
    %v1155 = vpack.c.b16 %v894, %v885
    %v1156 = vpack.c.b16 %v895, %v886
    %v1157 = vpack.c.b16 %v896, %v887
    %v1158 = vpack.c.b16 %v897, %v888
    %v1159 = vpack.c.b16 %v898, %v889
    %v1160 = vpack.c.b16 %v899, %v890
    %v1161 = vpack.c.b16 %v909, %v900
    %v1162 = vpack.c.b16 %v910, %v901
    %v1163 = vpack.c.b16 %v911, %v902
    %v1164 = vpack.c.b16 %v912, %v903
    %v1165 = vpack.c.b16 %v913, %v904
    %v1166 = vpack.c.b16 %v914, %v905
    %v1167 = vpack.c.b16 %v915, %v906
    %v1168 = vpack.c.b16 %v916, %v907
    %v1169 = vpack.c.b16 %v917, %v908
    %v1170 = vpack.c.b16 %v927, %v918
    %v1171 = vpack.c.b16 %v928, %v919
    %v1172 = vpack.c.b16 %v929, %v920
    %v1173 = vpack.c.b16 %v930, %v921
    %v1174 = vpack.c.b16 %v931, %v922
    %v1175 = vpack.c.b16 %v932, %v923
    %v1176 = vpack.c.b16 %v933, %v924
    %v1177 = vpack.c.b16 %v934, %v925
    %v1178 = vpack.c.b16 %v935, %v926
    %v1179 = vpack.c.b16 %v945, %v936
    %v1180 = vpack.c.b16 %v946, %v937
    %v1181 = vpack.c.b16 %v947, %v938
    %v1182 = vpack.c.b16 %v948, %v939
    %v1183 = vpack.c.b16 %v949, %v940
    %v1184 = vpack.c.b16 %v950, %v941
    %v1185 = vpack.c.b16 %v951, %v942
    %v1186 = vpack.c.b16 %v952, %v943
    %v1187 = vpack.c.b16 %v953, %v944
    %v1188 = vpack.c.b16 %v963, %v954
    %v1189 = vpack.c.b16 %v964, %v955
    %v1190 = vpack.c.b16 %v965, %v956
    %v1191 = vpack.c.b16 %v966, %v957
    %v1192 = vpack.c.b16 %v967, %v958
    %v1193 = vpack.c.b16 %v968, %v959
    %v1194 = vpack.c.b16 %v969, %v960
    %v1195 = vpack.c.b16 %v970, %v961
    %v1196 = vpack.c.b16 %v971, %v962
    %v1197 = vpack.c.b16 %v981, %v972
    %v1198 = vpack.c.b16 %v982, %v973
    %v1199 = vpack.c.b16 %v983, %v974
    %v1200 = vpack.c.b16 %v984, %v975
    %v1201 = vpack.c.b16 %v985, %v976
    %v1202 = vpack.c.b16 %v986, %v977
    %v1203 = vpack.c.b16 %v987, %v978
    %v1204 = vpack.c.b16 %v988, %v979
    %v1205 = vpack.c.b16 %v989, %v980
    %1422 = vmatprep.subr.bf16.mxu0 %v991
    %1423 = vmatpush1.bf16.msra.mxu0 %v990
    %1424 = vmatprep.subr.bf16.mxu0 %v1000
    %1425 = vmatpush1.bf16.msra.mxu0 %v999
    %1426 = vmatprep.subr.bf16.mxu0 %v1009
    %1427 = vmatpush1.bf16.msra.mxu0 %v1008
    %1428 = vmatprep.subr.bf16.mxu0 %v1018
    %1429 = vmatpush1.bf16.msra.mxu0 %v1017
    %1430 = vmatprep.subr.bf16.mxu0 %v1027
    %1431 = vmatpush1.bf16.msra.mxu0 %v1026
    %1432 = vmatprep.subr.bf16.mxu0 %v1036
    %1433 = vmatpush1.bf16.msra.mxu0 %v1035
    %1434 = vmatprep.subr.bf16.mxu0 %v1045
    %1435 = vmatpush1.bf16.msra.mxu0 %v1044
    %1436 = vmatprep.subr.bf16.mxu0 %v1054
    %1437 = vmatpush1.bf16.msra.mxu0 %v1053
    %1438 = vmatprep.subr.bf16.mxu0 %v1063
    %1439 = vmatpush1.bf16.msra.mxu0 %v1062
    %1440 = vmatprep.subr.bf16.mxu0 %v1072
    %1441 = vmatpush1.bf16.msra.mxu0 %v1071
    %1442 = vmatprep.subr.bf16.mxu0 %v1081
    %1443 = vmatpush1.bf16.msra.mxu0 %v1080
    %1444 = vmatprep.subr.bf16.mxu0 %v1090
    %1445 = vmatpush1.bf16.msra.mxu0 %v1089
    %1446 = vmatprep.subr.bf16.mxu0 %v1099
    %1447 = vmatpush1.bf16.msra.mxu0 %v1098
    %1448 = vmatprep.subr.bf16.mxu0 %v1108
    %1449 = vmatpush1.bf16.msra.mxu0 %v1107
    %1450 = vmatprep.subr.bf16.mxu0 %v1117
    %1451 = vmatpush1.bf16.msra.mxu0 %v1116
    %1452 = vmatprep.subr.bf16.mxu0 %v1126
    %1453 = vmatpush1.bf16.msra.mxu0 %v1125
    %1454 = vmatprep.mubr.bf16.mxu0 %v73
    %1455 = vmatmul.mubr.bf16.gmra.mrb[0].mxu0 %v72
    %v1456 = vpop.f32.mrb[0].mxu0
    %v1457 = vadd.f32 0.0, %v1456
    %v1458 = vpop.f32.mrb[0].mxu0
    %v1459 = vadd.f32 0.0, %v1458
    %v1460 = vpop.f32.mrb[0].mxu0
    %v1461 = vadd.f32 0.0, %v1460
    %v1462 = vpop.f32.mrb[0].mxu0
    %v1463 = vadd.f32 0.0, %v1462
    %1464 = vmatprep.mubr.bf16.mxu0 %v76
    %1465 = vmatmul.mubr.bf16.gmra.mrb[0].mxu0 %v75
    %v1466 = vpop.f32.mrb[0].mxu0
    %v1467 = vadd.f32 0.0, %v1466
    %v1468 = vpop.f32.mrb[0].mxu0
    %v1469 = vadd.f32 0.0, %v1468
    %v1470 = vpop.f32.mrb[0].mxu0
    %v1471 = vadd.f32 0.0, %v1470
    %v1472 = vpop.f32.mrb[0].mxu0
    %v1473 = vadd.f32 0.0, %v1472
    %1474 = vdwg.mxu0
    %1475 = vmatprep.subr.bf16.mxu0 %v1135
    %1476 = vmatpush1.bf16.msra.mxu0 %v1134
    %1477 = vmatprep.subr.bf16.mxu0 %v1144
    %1478 = vmatpush1.bf16.msra.mxu0 %v1143
    %1479 = vmatprep.subr.bf16.mxu0 %v1153
    %1480 = vmatpush1.bf16.msra.mxu0 %v1152
    %1481 = vmatprep.subr.bf16.mxu0 %v1162
    %1482 = vmatpush1.bf16.msra.mxu0 %v1161
    %1483 = vmatprep.subr.bf16.mxu0 %v1171
    %1484 = vmatpush1.bf16.msra.mxu0 %v1170
    %1485 = vmatprep.subr.bf16.mxu0 %v1180
    %1486 = vmatpush1.bf16.msra.mxu0 %v1179
    %1487 = vmatprep.subr.bf16.mxu0 %v1189
    %1488 = vmatpush1.bf16.msra.mxu0 %v1188
    %1489 = vmatprep.subr.bf16.mxu0 %v1198
    %1490 = vmatpush1.bf16.msra.mxu0 %v1197
    %1491 = vmatprep.subr.bf16.mxu0 0
    %1492 = vmatpush1.bf16.msra.mxu0 0
    %1493 = vmatprep.subr.bf16.mxu0 0
    %1494 = vmatpush1.bf16.msra.mxu0 0
    %1495 = vmatprep.subr.bf16.mxu0 0
    %1496 = vmatpush1.bf16.msra.mxu0 0
    %1497 = vmatprep.subr.bf16.mxu0 0
    %1498 = vmatpush1.bf16.msra.mxu0 0
    %1499 = vmatprep.subr.bf16.mxu0 0
    %1500 = vmatpush1.bf16.msra.mxu0 0
    %1501 = vmatprep.subr.bf16.mxu0 0
    %1502 = vmatpush1.bf16.msra.mxu0 0
    %1503 = vmatprep.subr.bf16.mxu0 0
    %1504 = vmatpush1.bf16.msra.mxu0 0
    %1505 = vmatprep.subr.bf16.mxu0 0
    %1506 = vmatpush1.bf16.msra.mxu0 0
    %1507 = vmatprep.mubr.bf16.mxu0 0
    %1508 = vmatmul.mubr.bf16.gmra.mrb[0].mxu0 %v74
    %v1509 = vpop.f32.mrb[0].mxu0
    %v1510 = vadd.f32 %v1457, %v1509
    %v1511 = vpop.f32.mrb[0].mxu0
    %v1512 = vadd.f32 %v1459, %v1511
    %v1513 = vpop.f32.mrb[0].mxu0
    %v1514 = vadd.f32 %v1461, %v1513
    %v1515 = vpop.f32.mrb[0].mxu0
    %v1516 = vadd.f32 %v1463, %v1515
    %1517 = vmatprep.mubr.bf16.mxu0 0
    %1518 = vmatmul.mubr.bf16.gmra.mrb[0].mxu0 %v77
    %v1519 = vpop.f32.mrb[0].mxu0
    %v1520 = vadd.f32 %v1467, %v1519
    %v1521 = vpop.f32.mrb[0].mxu0
    %v1522 = vadd.f32 %v1469, %v1521
    %v1523 = vpop.f32.mrb[0].mxu0
    %v1524 = vadd.f32 %v1471, %v1523
    %v1525 = vpop.f32.mrb[0].mxu0
    %v1526 = vadd.f32 %v1473, %v1525
    %1527 = vdwg.mxu0
    %1528 = vmatprep.subr.bf16.mxu0 %v993
    %1529 = vmatpush1.bf16.msra.mxu0 %v992
    %1530 = vmatprep.subr.bf16.mxu0 %v1002
    %1531 = vmatpush1.bf16.msra.mxu0 %v1001
    %1532 = vmatprep.subr.bf16.mxu0 %v1011
    %1533 = vmatpush1.bf16.msra.mxu0 %v1010
    %1534 = vmatprep.subr.bf16.mxu0 %v1020
    %1535 = vmatpush1.bf16.msra.mxu0 %v1019
    %1536 = vmatprep.subr.bf16.mxu0 %v1029
    %1537 = vmatpush1.bf16.msra.mxu0 %v1028
    %1538 = vmatprep.subr.bf16.mxu0 %v1038
    %1539 = vmatpush1.bf16.msra.mxu0 %v1037
    %1540 = vmatprep.subr.bf16.mxu0 %v1047
    %1541 = vmatpush1.bf16.msra.mxu0 %v1046
    %1542 = vmatprep.subr.bf16.mxu0 %v1056
    %1543 = vmatpush1.bf16.msra.mxu0 %v1055
    %1544 = vmatprep.subr.bf16.mxu0 %v1065
    %1545 = vmatpush1.bf16.msra.mxu0 %v1064
    %1546 = vmatprep.subr.bf16.mxu0 %v1074
    %1547 = vmatpush1.bf16.msra.mxu0 %v1073
    %1548 = vmatprep.subr.bf16.mxu0 %v1083
    %1549 = vmatpush1.bf16.msra.mxu0 %v1082
    %1550 = vmatprep.subr.bf16.mxu0 %v1092
    %1551 = vmatpush1.bf16.msra.mxu0 %v1091
    %1552 = vmatprep.subr.bf16.mxu0 %v1101
    %1553 = vmatpush1.bf16.msra.mxu0 %v1100
    %1554 = vmatprep.subr.bf16.mxu0 %v1110
    %1555 = vmatpush1.bf16.msra.mxu0 %v1109
    %1556 = vmatprep.subr.bf16.mxu0 %v1119
    %1557 = vmatpush1.bf16.msra.mxu0 %v1118
    %1558 = vmatprep.subr.bf16.mxu0 %v1128
    %1559 = vmatpush1.bf16.msra.mxu0 %v1127
    %1560 = vmatprep.mubr.bf16.mxu0 %v73
    %1561 = vmatmul.mubr.bf16.gmra.mrb[0].mxu0 %v72
    %v1562 = vpop.f32.mrb[0].mxu0
    %v1563 = vadd.f32 0.0, %v1562
    %v1564 = vpop.f32.mrb[0].mxu0
    %v1565 = vadd.f32 0.0, %v1564
    %v1566 = vpop.f32.mrb[0].mxu0
    %v1567 = vadd.f32 0.0, %v1566
    %v1568 = vpop.f32.mrb[0].mxu0
    %v1569 = vadd.f32 0.0, %v1568
    %1570 = vmatprep.mubr.bf16.mxu0 %v76
    %1571 = vmatmul.mubr.bf16.gmra.mrb[0].mxu0 %v75
    %v1572 = vpop.f32.mrb[0].mxu0
    %v1573 = vadd.f32 0.0, %v1572
    %v1574 = vpop.f32.mrb[0].mxu0
    %v1575 = vadd.f32 0.0, %v1574
    %v1576 = vpop.f32.mrb[0].mxu0
    %v1577 = vadd.f32 0.0, %v1576
    %v1578 = vpop.f32.mrb[0].mxu0
    %v1579 = vadd.f32 0.0, %v1578
    %1580 = vdwg.mxu0
    %1581 = vmatprep.subr.bf16.mxu0 %v1137
    %1582 = vmatpush1.bf16.msra.mxu0 %v1136
    %1583 = vmatprep.subr.bf16.mxu0 %v1146
    %1584 = vmatpush1.bf16.msra.mxu0 %v1145
    %1585 = vmatprep.subr.bf16.mxu0 %v1155
    %1586 = vmatpush1.bf16.msra.mxu0 %v1154
    %1587 = vmatprep.subr.bf16.mxu0 %v1164
    %1588 = vmatpush1.bf16.msra.mxu0 %v1163
    %1589 = vmatprep.subr.bf16.mxu0 %v1173
    %1590 = vmatpush1.bf16.msra.mxu0 %v1172
    %1591 = vmatprep.subr.bf16.mxu0 %v1182
    %1592 = vmatpush1.bf16.msra.mxu0 %v1181
    %1593 = vmatprep.subr.bf16.mxu0 %v1191
    %1594 = vmatpush1.bf16.msra.mxu0 %v1190
    %1595 = vmatprep.subr.bf16.mxu0 %v1200
    %1596 = vmatpush1.bf16.msra.mxu0 %v1199
    %1597 = vmatprep.subr.bf16.mxu0 0
    %1598 = vmatpush1.bf16.msra.mxu0 0
    %1599 = vmatprep.subr.bf16.mxu0 0
    %1600 = vmatpush1.bf16.msra.mxu0 0
    %1601 = vmatprep.subr.bf16.mxu0 0
    %1602 = vmatpush1.bf16.msra.mxu0 0
    %1603 = vmatprep.subr.bf16.mxu0 0
    %1604 = vmatpush1.bf16.msra.mxu0 0
    %1605 = vmatprep.subr.bf16.mxu0 0
    %1606 = vmatpush1.bf16.msra.mxu0 0
    %1607 = vmatprep.subr.bf16.mxu0 0
    %1608 = vmatpush1.bf16.msra.mxu0 0
    %1609 = vmatprep.subr.bf16.mxu0 0
    %1610 = vmatpush1.bf16.msra.mxu0 0
    %1611 = vmatprep.subr.bf16.mxu0 0
    %1612 = vmatpush1.bf16.msra.mxu0 0
    %1613 = vmatprep.mubr.bf16.mxu0 0
    %1614 = vmatmul.mubr.bf16.gmra.mrb[0].mxu0 %v74
    %v1615 = vpop.f32.mrb[0].mxu0
    %v1616 = vadd.f32 %v1563, %v1615
    %v1617 = vpop.f32.mrb[0].mxu0
    %v1618 = vadd.f32 %v1565, %v1617
    %v1619 = vpop.f32.mrb[0].mxu0
    %v1620 = vadd.f32 %v1567, %v1619
    %v1621 = vpop.f32.mrb[0].mxu0
    %v1622 = vadd.f32 %v1569, %v1621
    %1623 = vmatprep.mubr.bf16.mxu0 0
    %1624 = vmatmul.mubr.bf16.gmra.mrb[0].mxu0 %v77
    %v1625 = vpop.f32.mrb[0].mxu0
    %v1626 = vadd.f32 %v1573, %v1625
    %v1627 = vpop.f32.mrb[0].mxu0
    %v1628 = vadd.f32 %v1575, %v1627
    %v1629 = vpop.f32.mrb[0].mxu0
    %v1630 = vadd.f32 %v1577, %v1629
    %v1631 = vpop.f32.mrb[0].mxu0
    %v1632 = vadd.f32 %v1579, %v1631
    %1633 = vdwg.mxu0
    %1634 = vmatprep.subr.bf16.mxu0 %v995
    %1635 = vmatpush1.bf16.msra.mxu0 %v994
    %1636 = vmatprep.subr.bf16.mxu0 %v1004
    %1637 = vmatpush1.bf16.msra.mxu0 %v1003
    %1638 = vmatprep.subr.bf16.mxu0 %v1013
    %1639 = vmatpush1.bf16.msra.mxu0 %v1012
    %1640 = vmatprep.subr.bf16.mxu0 %v1022
    %1641 = vmatpush1.bf16.msra.mxu0 %v1021
    %1642 = vmatprep.subr.bf16.mxu0 %v1031
    %1643 = vmatpush1.bf16.msra.mxu0 %v1030
    %1644 = vmatprep.subr.bf16.mxu0 %v1040
    %1645 = vmatpush1.bf16.msra.mxu0 %v1039
    %1646 = vmatprep.subr.bf16.mxu0 %v1049
    %1647 = vmatpush1.bf16.msra.mxu0 %v1048
    %1648 = vmatprep.subr.bf16.mxu0 %v1058
    %1649 = vmatpush1.bf16.msra.mxu0 %v1057
    %1650 = vmatprep.subr.bf16.mxu0 %v1067
    %1651 = vmatpush1.bf16.msra.mxu0 %v1066
    %1652 = vmatprep.subr.bf16.mxu0 %v1076
    %1653 = vmatpush1.bf16.msra.mxu0 %v1075
    %1654 = vmatprep.subr.bf16.mxu0 %v1085
    %1655 = vmatpush1.bf16.msra.mxu0 %v1084
    %1656 = vmatprep.subr.bf16.mxu0 %v1094
    %1657 = vmatpush1.bf16.msra.mxu0 %v1093
    %1658 = vmatprep.subr.bf16.mxu0 %v1103
    %1659 = vmatpush1.bf16.msra.mxu0 %v1102
    %1660 = vmatprep.subr.bf16.mxu0 %v1112
    %1661 = vmatpush1.bf16.msra.mxu0 %v1111
    %1662 = vmatprep.subr.bf16.mxu0 %v1121
    %1663 = vmatpush1.bf16.msra.mxu0 %v1120
    %1664 = vmatprep.subr.bf16.mxu0 %v1130
    %1665 = vmatpush1.bf16.msra.mxu0 %v1129
    %1666 = vmatprep.mubr.bf16.mxu0 %v73
    %1667 = vmatmul.mubr.bf16.gmra.mrb[0].mxu0 %v72
    %v1668 = vpop.f32.mrb[0].mxu0
    %v1669 = vadd.f32 0.0, %v1668
    %v1670 = vpop.f32.mrb[0].mxu0
    %v1671 = vadd.f32 0.0, %v1670
    %v1672 = vpop.f32.mrb[0].mxu0
    %v1673 = vadd.f32 0.0, %v1672
    %v1674 = vpop.f32.mrb[0].mxu0
    %v1675 = vadd.f32 0.0, %v1674
    %1676 = vmatprep.mubr.bf16.mxu0 %v76
    %1677 = vmatmul.mubr.bf16.gmra.mrb[0].mxu0 %v75
    %v1678 = vpop.f32.mrb[0].mxu0
    %v1679 = vadd.f32 0.0, %v1678
    %v1680 = vpop.f32.mrb[0].mxu0
    %v1681 = vadd.f32 0.0, %v1680
    %v1682 = vpop.f32.mrb[0].mxu0
    %v1683 = vadd.f32 0.0, %v1682
    %v1684 = vpop.f32.mrb[0].mxu0
    %v1685 = vadd.f32 0.0, %v1684
    %1686 = vdwg.mxu0
    %1687 = vmatprep.subr.bf16.mxu0 %v1139
    %1688 = vmatpush1.bf16.msra.mxu0 %v1138
    %1689 = vmatprep.subr.bf16.mxu0 %v1148
    %1690 = vmatpush1.bf16.msra.mxu0 %v1147
    %1691 = vmatprep.subr.bf16.mxu0 %v1157
    %1692 = vmatpush1.bf16.msra.mxu0 %v1156
    %1693 = vmatprep.subr.bf16.mxu0 %v1166
    %1694 = vmatpush1.bf16.msra.mxu0 %v1165
    %1695 = vmatprep.subr.bf16.mxu0 %v1175
    %1696 = vmatpush1.bf16.msra.mxu0 %v1174
    %1697 = vmatprep.subr.bf16.mxu0 %v1184
    %1698 = vmatpush1.bf16.msra.mxu0 %v1183
    %1699 = vmatprep.subr.bf16.mxu0 %v1193
    %1700 = vmatpush1.bf16.msra.mxu0 %v1192
    %1701 = vmatprep.subr.bf16.mxu0 %v1202
    %1702 = vmatpush1.bf16.msra.mxu0 %v1201
    %1703 = vmatprep.subr.bf16.mxu0 0
    %1704 = vmatpush1.bf16.msra.mxu0 0
    %1705 = vmatprep.subr.bf16.mxu0 0
    %1706 = vmatpush1.bf16.msra.mxu0 0
    %1707 = vmatprep.subr.bf16.mxu0 0
    %1708 = vmatpush1.bf16.msra.mxu0 0
    %1709 = vmatprep.subr.bf16.mxu0 0
    %1710 = vmatpush1.bf16.msra.mxu0 0
    %1711 = vmatprep.subr.bf16.mxu0 0
    %1712 = vmatpush1.bf16.msra.mxu0 0
    %1713 = vmatprep.subr.bf16.mxu0 0
    %1714 = vmatpush1.bf16.msra.mxu0 0
    %1715 = vmatprep.subr.bf16.mxu0 0
    %1716 = vmatpush1.bf16.msra.mxu0 0
    %1717 = vmatprep.subr.bf16.mxu0 0
    %1718 = vmatpush1.bf16.msra.mxu0 0
    %1719 = vmatprep.mubr.bf16.mxu0 0
    %1720 = vmatmul.mubr.bf16.gmra.mrb[0].mxu0 %v74
    %v1721 = vpop.f32.mrb[0].mxu0
    %v1722 = vadd.f32 %v1669, %v1721
    %v1723 = vpop.f32.mrb[0].mxu0
    %v1724 = vadd.f32 %v1671, %v1723
    %v1725 = vpop.f32.mrb[0].mxu0
    %v1726 = vadd.f32 %v1673, %v1725
    %v1727 = vpop.f32.mrb[0].mxu0
    %v1728 = vadd.f32 %v1675, %v1727
    %1729 = vmatprep.mubr.bf16.mxu0 0
    %1730 = vmatmul.mubr.bf16.gmra.mrb[0].mxu0 %v77
    %v1731 = vpop.f32.mrb[0].mxu0
    %v1732 = vadd.f32 %v1679, %v1731
    %v1733 = vpop.f32.mrb[0].mxu0
    %v1734 = vadd.f32 %v1681, %v1733
    %v1735 = vpop.f32.mrb[0].mxu0
    %v1736 = vadd.f32 %v1683, %v1735
    %v1737 = vpop.f32.mrb[0].mxu0
    %v1738 = vadd.f32 %v1685, %v1737
    %1739 = vdwg.mxu0
    %1740 = vmatprep.subr.bf16.mxu0 %v997
    %1741 = vmatpush1.bf16.msra.mxu0 %v996
    %1742 = vmatprep.subr.bf16.mxu0 %v1006
    %1743 = vmatpush1.bf16.msra.mxu0 %v1005
    %1744 = vmatprep.subr.bf16.mxu0 %v1015
    %1745 = vmatpush1.bf16.msra.mxu0 %v1014
    %1746 = vmatprep.subr.bf16.mxu0 %v1024
    %1747 = vmatpush1.bf16.msra.mxu0 %v1023
    %1748 = vmatprep.subr.bf16.mxu0 %v1033
    %1749 = vmatpush1.bf16.msra.mxu0 %v1032
    %1750 = vmatprep.subr.bf16.mxu0 %v1042
    %1751 = vmatpush1.bf16.msra.mxu0 %v1041
    %1752 = vmatprep.subr.bf16.mxu0 %v1051
    %1753 = vmatpush1.bf16.msra.mxu0 %v1050
    %1754 = vmatprep.subr.bf16.mxu0 %v1060
    %1755 = vmatpush1.bf16.msra.mxu0 %v1059
    %1756 = vmatprep.subr.bf16.mxu0 %v1069
    %1757 = vmatpush1.bf16.msra.mxu0 %v1068
    %1758 = vmatprep.subr.bf16.mxu0 %v1078
    %1759 = vmatpush1.bf16.msra.mxu0 %v1077
    %1760 = vmatprep.subr.bf16.mxu0 %v1087
    %1761 = vmatpush1.bf16.msra.mxu0 %v1086
    %1762 = vmatprep.subr.bf16.mxu0 %v1096
    %1763 = vmatpush1.bf16.msra.mxu0 %v1095
    %1764 = vmatprep.subr.bf16.mxu0 %v1105
    %1765 = vmatpush1.bf16.msra.mxu0 %v1104
    %1766 = vmatprep.subr.bf16.mxu0 %v1114
    %1767 = vmatpush1.bf16.msra.mxu0 %v1113
    %1768 = vmatprep.subr.bf16.mxu0 %v1123
    %1769 = vmatpush1.bf16.msra.mxu0 %v1122
    %1770 = vmatprep.subr.bf16.mxu0 %v1132
    %1771 = vmatpush1.bf16.msra.mxu0 %v1131
    %1772 = vmatprep.mubr.bf16.mxu0 %v73
    %1773 = vmatmul.mubr.bf16.gmra.mrb[0].mxu0 %v72
    %v1774 = vpop.f32.mrb[0].mxu0
    %v1775 = vadd.f32 0.0, %v1774
    %v1776 = vpop.f32.mrb[0].mxu0
    %v1777 = vadd.f32 0.0, %v1776
    %v1778 = vpop.f32.mrb[0].mxu0
    %v1779 = vadd.f32 0.0, %v1778
    %v1780 = vpop.f32.mrb[0].mxu0
    %v1781 = vadd.f32 0.0, %v1780
    %1782 = vmatprep.mubr.bf16.mxu0 %v76
    %1783 = vmatmul.mubr.bf16.gmra.mrb[0].mxu0 %v75
    %v1784 = vpop.f32.mrb[0].mxu0
    %v1785 = vadd.f32 0.0, %v1784
    %v1786 = vpop.f32.mrb[0].mxu0
    %v1787 = vadd.f32 0.0, %v1786
    %v1788 = vpop.f32.mrb[0].mxu0
    %v1789 = vadd.f32 0.0, %v1788
    %v1790 = vpop.f32.mrb[0].mxu0
    %v1791 = vadd.f32 0.0, %v1790
    %1792 = vdwg.mxu0
    %1793 = vmatprep.subr.bf16.mxu0 %v1141
    %1794 = vmatpush1.bf16.msra.mxu0 %v1140
    %1795 = vmatprep.subr.bf16.mxu0 %v1150
    %1796 = vmatpush1.bf16.msra.mxu0 %v1149
    %1797 = vmatprep.subr.bf16.mxu0 %v1159
    %1798 = vmatpush1.bf16.msra.mxu0 %v1158
    %1799 = vmatprep.subr.bf16.mxu0 %v1168
    %1800 = vmatpush1.bf16.msra.mxu0 %v1167
    %1801 = vmatprep.subr.bf16.mxu0 %v1177
    %1802 = vmatpush1.bf16.msra.mxu0 %v1176
    %1803 = vmatprep.subr.bf16.mxu0 %v1186
    %1804 = vmatpush1.bf16.msra.mxu0 %v1185
    %1805 = vmatprep.subr.bf16.mxu0 %v1195
    %1806 = vmatpush1.bf16.msra.mxu0 %v1194
    %1807 = vmatprep.subr.bf16.mxu0 %v1204
    %1808 = vmatpush1.bf16.msra.mxu0 %v1203
    %1809 = vmatprep.subr.bf16.mxu0 0
    %1810 = vmatpush1.bf16.msra.mxu0 0
    %1811 = vmatprep.subr.bf16.mxu0 0
    %1812 = vmatpush1.bf16.msra.mxu0 0
    %1813 = vmatprep.subr.bf16.mxu0 0
    %1814 = vmatpush1.bf16.msra.mxu0 0
    %1815 = vmatprep.subr.bf16.mxu0 0
    %1816 = vmatpush1.bf16.msra.mxu0 0
    %1817 = vmatprep.subr.bf16.mxu0 0
    %1818 = vmatpush1.bf16.msra.mxu0 0
    %1819 = vmatprep.subr.bf16.mxu0 0
    %1820 = vmatpush1.bf16.msra.mxu0 0
    %1821 = vmatprep.subr.bf16.mxu0 0
    %1822 = vmatpush1.bf16.msra.mxu0 0
    %1823 = vmatprep.subr.bf16.mxu0 0
    %1824 = vmatpush1.bf16.msra.mxu0 0
    %1825 = vmatprep.mubr.bf16.mxu0 0
    %1826 = vmatmul.mubr.bf16.gmra.mrb[0].mxu0 %v74
    %v1827 = vpop.f32.mrb[0].mxu0
    %v1828 = vadd.f32 %v1775, %v1827
    %v1829 = vpop.f32.mrb[0].mxu0
    %v1830 = vadd.f32 %v1777, %v1829
    %v1831 = vpop.f32.mrb[0].mxu0
    %v1832 = vadd.f32 %v1779, %v1831
    %v1833 = vpop.f32.mrb[0].mxu0
    %v1834 = vadd.f32 %v1781, %v1833
    %1835 = vmatprep.mubr.bf16.mxu0 0
    %1836 = vmatmul.mubr.bf16.gmra.mrb[0].mxu0 %v77
    %v1837 = vpop.f32.mrb[0].mxu0
    %v1838 = vadd.f32 %v1785, %v1837
    %v1839 = vpop.f32.mrb[0].mxu0
    %v1840 = vadd.f32 %v1787, %v1839
    %v1841 = vpop.f32.mrb[0].mxu0
    %v1842 = vadd.f32 %v1789, %v1841
    %v1843 = vpop.f32.mrb[0].mxu0
    %v1844 = vadd.f32 %v1791, %v1843
    %1845 = vdwg.mxu0
    %1846 = vmatprep.subr.bf16.mxu0 0
    %1847 = vmatpush1.bf16.msra.mxu0 %v998
    %1848 = vmatprep.subr.bf16.mxu0 0
    %1849 = vmatpush1.bf16.msra.mxu0 %v1007
    %1850 = vmatprep.subr.bf16.mxu0 0
    %1851 = vmatpush1.bf16.msra.mxu0 %v1016
    %1852 = vmatprep.subr.bf16.mxu0 0
    %1853 = vmatpush1.bf16.msra.mxu0 %v1025
    %1854 = vmatprep.subr.bf16.mxu0 0
    %1855 = vmatpush1.bf16.msra.mxu0 %v1034
    %1856 = vmatprep.subr.bf16.mxu0 0
    %1857 = vmatpush1.bf16.msra.mxu0 %v1043
    %1858 = vmatprep.subr.bf16.mxu0 0
    %1859 = vmatpush1.bf16.msra.mxu0 %v1052
    %1860 = vmatprep.subr.bf16.mxu0 0
    %1861 = vmatpush1.bf16.msra.mxu0 %v1061
    %1862 = vmatprep.subr.bf16.mxu0 0
    %1863 = vmatpush1.bf16.msra.mxu0 %v1070
    %1864 = vmatprep.subr.bf16.mxu0 0
    %1865 = vmatpush1.bf16.msra.mxu0 %v1079
    %1866 = vmatprep.subr.bf16.mxu0 0
    %1867 = vmatpush1.bf16.msra.mxu0 %v1088
    %1868 = vmatprep.subr.bf16.mxu0 0
    %1869 = vmatpush1.bf16.msra.mxu0 %v1097
    %1870 = vmatprep.subr.bf16.mxu0 0
    %1871 = vmatpush1.bf16.msra.mxu0 %v1106
    %1872 = vmatprep.subr.bf16.mxu0 0
    %1873 = vmatpush1.bf16.msra.mxu0 %v1115
    %1874 = vmatprep.subr.bf16.mxu0 0
    %1875 = vmatpush1.bf16.msra.mxu0 %v1124
    %1876 = vmatprep.subr.bf16.mxu0 0
    %1877 = vmatpush1.bf16.msra.mxu0 %v1133
    %1878 = vmatprep.mubr.bf16.mxu0 %v73
    %1879 = vmatmul.mubr.bf16.gmra.mrb[0].mxu0 %v72
    %v1880 = vpop.f32.mrb[0].mxu0
    %v1881 = vadd.f32 0.0, %v1880
    %v1882 = vpop.f32.mrb[0].mxu0
    %v1883 = vpop.f32.mrb[0].mxu0
    %v1884 = vadd.f32 0.0, %v1883
    %v1885 = vpop.f32.mrb[0].mxu0
    %1886 = vmatprep.mubr.bf16.mxu0 %v76
    %1887 = vmatmul.mubr.bf16.gmra.mrb[0].mxu0 %v75
    %v1888 = vpop.f32.mrb[0].mxu0
    %v1889 = vadd.f32 0.0, %v1888
    %v1890 = vpop.f32.mrb[0].mxu0
    %v1891 = vpop.f32.mrb[0].mxu0
    %v1892 = vadd.f32 0.0, %v1891
    %v1893 = vpop.f32.mrb[0].mxu0
    %1894 = vdwg.mxu0
    %1895 = vmatprep.subr.bf16.mxu0 0
    %1896 = vmatpush1.bf16.msra.mxu0 %v1142
    %1897 = vmatprep.subr.bf16.mxu0 0
    %1898 = vmatpush1.bf16.msra.mxu0 %v1151
    %1899 = vmatprep.subr.bf16.mxu0 0
    %1900 = vmatpush1.bf16.msra.mxu0 %v1160
    %1901 = vmatprep.subr.bf16.mxu0 0
    %1902 = vmatpush1.bf16.msra.mxu0 %v1169
    %1903 = vmatprep.subr.bf16.mxu0 0
    %1904 = vmatpush1.bf16.msra.mxu0 %v1178
    %1905 = vmatprep.subr.bf16.mxu0 0
    %1906 = vmatpush1.bf16.msra.mxu0 %v1187
    %1907 = vmatprep.subr.bf16.mxu0 0
    %1908 = vmatpush1.bf16.msra.mxu0 %v1196
    %1909 = vmatprep.subr.bf16.mxu0 0
    %1910 = vmatpush1.bf16.msra.mxu0 %v1205
    %1911 = vmatprep.subr.bf16.mxu0 0
    %1912 = vmatpush1.bf16.msra.mxu0 0
    %1913 = vmatprep.subr.bf16.mxu0 0
    %1914 = vmatpush1.bf16.msra.mxu0 0
    %1915 = vmatprep.subr.bf16.mxu0 0
    %1916 = vmatpush1.bf16.msra.mxu0 0
    %1917 = vmatprep.subr.bf16.mxu0 0
    %1918 = vmatpush1.bf16.msra.mxu0 0
    %1919 = vmatprep.subr.bf16.mxu0 0
    %1920 = vmatpush1.bf16.msra.mxu0 0
    %1921 = vmatprep.subr.bf16.mxu0 0
    %1922 = vmatpush1.bf16.msra.mxu0 0
    %1923 = vmatprep.subr.bf16.mxu0 0
    %1924 = vmatpush1.bf16.msra.mxu0 0
    %1925 = vmatprep.subr.bf16.mxu0 0
    %1926 = vmatpush1.bf16.msra.mxu0 0
    %1927 = vmatprep.mubr.bf16.mxu0 0
    %1928 = vmatmul.mubr.bf16.gmra.mrb[0].mxu0 %v74
    %v1929 = vpop.f32.mrb[0].mxu0
    %v1930 = vadd.f32 %v1881, %v1929
    %v1931 = vpop.f32.mrb[0].mxu0
    %v1932 = vpop.f32.mrb[0].mxu0
    %v1933 = vadd.f32 %v1884, %v1932
    %v1934 = vpop.f32.mrb[0].mxu0
    %1935 = vmatprep.mubr.bf16.mxu0 0
    %1936 = vmatmul.mubr.bf16.gmra.mrb[0].mxu0 %v77
    %v1937 = vpop.f32.mrb[0].mxu0
    %v1938 = vadd.f32 %v1889, %v1937
    %v1939 = vpop.f32.mrb[0].mxu0
    %v1940 = vpop.f32.mrb[0].mxu0
    %v1941 = vadd.f32 %v1892, %v1940
    %v1942 = vpop.f32.mrb[0].mxu0
    %1943 = vdwg.mxu0
    %v1944 = vpack.c.bf16 %v1514, %v1510
    %v1945 = vpack.c.bf16 %v1516, %v1512
    %v1946 = vpack.c.bf16 %v1620, %v1616
    %v1947 = vpack.c.bf16 %v1622, %v1618
    %v1948 = vpack.c.bf16 %v1726, %v1722
    %v1949 = vpack.c.bf16 %v1728, %v1724
    %v1950 = vpack.c.bf16 %v1832, %v1828
    %v1951 = vpack.c.bf16 %v1834, %v1830
    %v1952 = vpack.c.bf16 %v1933, %v1930
    %v1953 = vpack.c.bf16 %v1524, %v1520
    %v1954 = vpack.c.bf16 %v1526, %v1522
    %v1955 = vpack.c.bf16 %v1630, %v1626
    %v1956 = vpack.c.bf16 %v1632, %v1628
    %v1957 = vpack.c.bf16 %v1736, %v1732
    %v1958 = vpack.c.bf16 %v1738, %v1734
    %v1959 = vpack.c.bf16 %v1842, %v1838
    %v1960 = vpack.c.bf16 %v1844, %v1840
    %v1961 = vpack.c.bf16 %v1941, %v1938
    %v1962 = vlaneseq
    %v1963 = vshrl.u32 %v1962, 7
    %v1964 = vadd.s32 %v1963, 8
    %v1965 = vlaneseq
    %v1966 = vand.u32 %v1965, 127
    %vm1967 = vcmp.le.s32.totalorder %v1966, %v1963
    %vm1968 = vcmp.le.s32.totalorder %v1966, %v1964
    %vm1969 = vcmask 523264
    %v1971 = vsel %vm1969, %v1944, 0
    %v1974 = vsel %vm1969, %v1947, 0
    %1976 = vmatprep.subr.bf16.mxu0 0
    %1977 = vmatpush1.bf16.xpose.msra.mxu0 %v1974
    %1978 = vmatprep.subr.bf16.mxu0 0
    %1979 = vmatpush1.bf16.xpose.msra.mxu0 0
    %1980 = vmatprep.subr.bf16.mxu0 0
    %1981 = vmatpush1.bf16.xpose.msra.mxu0 0
    %1982 = vmatprep.subr.bf16.mxu0 0
    %1983 = vmatpush1.bf16.xpose.msra.mxu0 0
    %1984 = vmatprep.subr.bf16.mxu0 0
    %1985 = vmatpush1.bf16.xpose.msra.mxu0 0
    %1986 = vmatprep.subr.bf16.mxu0 0
    %1987 = vmatpush1.bf16.xpose.msra.mxu0 0
    %1988 = vmatprep.subr.bf16.mxu0 0
    %1989 = vmatpush1.bf16.xpose.msra.mxu0 0
    %1990 = vmatprep.subr.bf16.mxu0 0
    %1991 = vmatpush1.bf16.xpose.msra.mxu0 0
    %1992 = vmatprep.subr.bf16.mxu0 0
    %1993 = vmatpush1.bf16.xpose.msra.mxu0 0
    %1994 = vmatprep.subr.bf16.mxu0 0
    %1995 = vmatpush1.bf16.xpose.msra.mxu0 0
    %1996 = vmatprep.subr.bf16.mxu0 0
    %1997 = vmatpush1.bf16.xpose.msra.mxu0 0
    %1998 = vmatprep.subr.bf16.mxu0 0
    %1999 = vmatpush1.bf16.xpose.msra.mxu0 0
    %2000 = vmatprep.subr.bf16.mxu0 0
    %2001 = vmatpush1.bf16.xpose.msra.mxu0 0
    %2002 = vmatprep.subr.bf16.mxu0 0
    %2003 = vmatpush1.bf16.xpose.msra.mxu0 0
    %2004 = vmatprep.subr.bf16.mxu0 0
    %2005 = vmatpush1.bf16.xpose.msra.mxu0 0
    %2006 = vmatprep.subr.bf16.mxu0 0
    %2007 = vmatpush1.bf16.xpose.msra.mxu0 0
    %2008 = vmatprep.mubr.bf16.mxu0 0
    %2009 = vmatmul.mubr.bf16.gmra.mrb[0].mxu0 %v1971
    %v2010 = vpop.f32.mrb[0].mxu0
    %v2011 = vadd.f32 0.0, %v2010
    %v2012 = vpop.f32.mrb[0].mxu0
    %v2013 = vpop.f32.mrb[0].mxu0
    %v2014 = vadd.f32 0.0, %v2013
    %v2015 = vpop.f32.mrb[0].mxu0
    %2016 = vdwg.mxu0
    %v2018 = vsel %vm1969, %v1953, 0
    %v2021 = vsel %vm1969, %v1956, 0
    %2023 = vmatprep.subr.bf16.mxu0 0
    %2024 = vmatpush1.bf16.xpose.msra.mxu0 %v2021
    %2025 = vmatprep.subr.bf16.mxu0 0
    %2026 = vmatpush1.bf16.xpose.msra.mxu0 0
    %2027 = vmatprep.subr.bf16.mxu0 0
    %2028 = vmatpush1.bf16.xpose.msra.mxu0 0
    %2029 = vmatprep.subr.bf16.mxu0 0
    %2030 = vmatpush1.bf16.xpose.msra.mxu0 0
    %2031 = vmatprep.subr.bf16.mxu0 0
    %2032 = vmatpush1.bf16.xpose.msra.mxu0 0
    %2033 = vmatprep.subr.bf16.mxu0 0
    %2034 = vmatpush1.bf16.xpose.msra.mxu0 0
    %2035 = vmatprep.subr.bf16.mxu0 0
    %2036 = vmatpush1.bf16.xpose.msra.mxu0 0
    %2037 = vmatprep.subr.bf16.mxu0 0
    %2038 = vmatpush1.bf16.xpose.msra.mxu0 0
    %2039 = vmatprep.subr.bf16.mxu0 0
    %2040 = vmatpush1.bf16.xpose.msra.mxu0 0
    %2041 = vmatprep.subr.bf16.mxu0 0
    %2042 = vmatpush1.bf16.xpose.msra.mxu0 0
    %2043 = vmatprep.subr.bf16.mxu0 0
    %2044 = vmatpush1.bf16.xpose.msra.mxu0 0
    %2045 = vmatprep.subr.bf16.mxu0 0
    %2046 = vmatpush1.bf16.xpose.msra.mxu0 0
    %2047 = vmatprep.subr.bf16.mxu0 0
    %2048 = vmatpush1.bf16.xpose.msra.mxu0 0
    %2049 = vmatprep.subr.bf16.mxu0 0
    %2050 = vmatpush1.bf16.xpose.msra.mxu0 0
    %2051 = vmatprep.subr.bf16.mxu0 0
    %2052 = vmatpush1.bf16.xpose.msra.mxu0 0
    %2053 = vmatprep.subr.bf16.mxu0 0
    %2054 = vmatpush1.bf16.xpose.msra.mxu0 0
    %2055 = vmatprep.mubr.bf16.mxu0 0
    %2056 = vmatmul.mubr.bf16.gmra.mrb[0].mxu0 %v2018
    %v2057 = vpop.f32.mrb[0].mxu0
    %v2058 = vadd.f32 0.0, %v2057
    %v2059 = vpop.f32.mrb[0].mxu0
    %v2060 = vpop.f32.mrb[0].mxu0
    %v2061 = vadd.f32 0.0, %v2060
    %v2062 = vpop.f32.mrb[0].mxu0
    %2063 = vdwg.mxu0
    %v2064 = vsel %vm1967, 1, 0
    %v2065 = vsel %vm1968, 1, 0
    %vm2066 = vcmp.eq.s32.totalorder %v2064, 1
    %vm2067 = vcmp.eq.s32.totalorder %v2065, 1
    %v2068 = vsel %vm2066, %v2011, -inf
    %v2069 = vsel %vm2067, %v2014, -inf
    %v2070 = vsel %vm2066, %v2058, -inf
    %v2071 = vsel %vm2067, %v2061, -inf
    %vm2072 = vcmask 130048
    %v2073 = vsel %vm2072, %v2068, -inf
    %2074 = vmax.xlane.f32.xlu0 %v2073
    %v2075 = vpop.xlane.xlu0 %2074
    %v2076 = vsel %vm2072, %v2069, -inf
    %2077 = vmax.xlane.f32.xlu0 %v2076
    %v2078 = vpop.xlane.xlu0 %2077
    %v2079 = vsel %vm2072, %v2070, -inf
    %2080 = vmax.xlane.f32.xlu0 %v2079
    %v2081 = vpop.xlane.xlu0 %2080
    %v2082 = vsel %vm2072, %v2071, -inf
    %2083 = vmax.xlane.f32.xlu0 %v2082
    %v2084 = vpop.xlane.xlu0 %2083
    %v2085 = vsub.f32 %v2068, %v2075
    %v2086 = vsub.f32 %v2069, %v2078
    %v2087 = vsub.f32 %v2070, %v2081
    %v2088 = vsub.f32 %v2071, %v2084
    %v2089 = vmul.f32 %v2085, 1.442695
    %v2090 = vpow.pop %v2089
    %v2091 = vmul.f32 %v2086, 1.442695
    %v2092 = vpow.pop %v2091
    %v2093 = vmul.f32 %v2087, 1.442695
    %v2094 = vpow.pop %v2093
    %v2095 = vmul.f32 %v2088, 1.442695
    %v2096 = vpow.pop %v2095
    %v2097 = vsel %vm2072, %v2090, 0.0
    %2098 = vadd.xlane.f32.xlu0 %v2097
    %v2099 = vpop.xlane.xlu0 %2098
    %v2100 = vsel %vm2072, %v2092, 0.0
    %2101 = vadd.xlane.f32.xlu0 %v2100
    %v2102 = vpop.xlane.xlu0 %2101
    %v2103 = vsel %vm2072, %v2094, 0.0
    %2104 = vadd.xlane.f32.xlu0 %v2103
    %v2105 = vpop.xlane.xlu0 %2104
    %v2106 = vsel %vm2072, %v2096, 0.0
    %2107 = vadd.xlane.f32.xlu0 %v2106
    %v2108 = vpop.xlane.xlu0 %2107
    %v2109 = vrcp.pop %v2099
    %v2110 = vrcp.pop %v2102
    %v2111 = vrcp.pop %v2105
    %v2112 = vrcp.pop %v2108
    %v2113 = vmul.f32 %v2090, %v2109
    %v2114 = vmul.f32 %v2092, %v2110
    %v2115 = vmul.f32 %v2094, %v2111
    %v2116 = vmul.f32 %v2096, %v2112
    %v2117 = vpack.c.bf16 %v2114, %v2113
    %v2118 = vpack.c.bf16 %v2116, %v2115
    %v2120 = vsel %vm2072, %v2117, 0
    %2122 = vmatprep.subr.bf16.mxu0 0
    %2123 = vmatpush1.bf16.msra.mxu0 %v1950
    %2124 = vmatprep.subr.bf16.mxu0 0
    %2125 = vmatpush1.bf16.msra.mxu0 0
    %2126 = vmatprep.subr.bf16.mxu0 0
    %2127 = vmatpush1.bf16.msra.mxu0 0
    %2128 = vmatprep.subr.bf16.mxu0 0
    %2129 = vmatpush1.bf16.msra.mxu0 0
    %2130 = vmatprep.subr.bf16.mxu0 0
    %2131 = vmatpush1.bf16.msra.mxu0 0
    %2132 = vmatprep.subr.bf16.mxu0 0
    %2133 = vmatpush1.bf16.msra.mxu0 0
    %2134 = vmatprep.subr.bf16.mxu0 0
    %2135 = vmatpush1.bf16.msra.mxu0 0
    %2136 = vmatprep.subr.bf16.mxu0 0
    %2137 = vmatpush1.bf16.msra.mxu0 0
    %2138 = vmatprep.subr.bf16.mxu0 0
    %2139 = vmatpush1.bf16.msra.mxu0 0
    %2140 = vmatprep.subr.bf16.mxu0 0
    %2141 = vmatpush1.bf16.msra.mxu0 0
    %2142 = vmatprep.subr.bf16.mxu0 0
    %2143 = vmatpush1.bf16.msra.mxu0 0
    %2144 = vmatprep.subr.bf16.mxu0 0
    %2145 = vmatpush1.bf16.msra.mxu0 0
    %2146 = vmatprep.subr.bf16.mxu0 0
    %2147 = vmatpush1.bf16.msra.mxu0 0
    %2148 = vmatprep.subr.bf16.mxu0 0
    %2149 = vmatpush1.bf16.msra.mxu0 0
    %2150 = vmatprep.subr.bf16.mxu0 0
    %2151 = vmatpush1.bf16.msra.mxu0 0
    %2152 = vmatprep.subr.bf16.mxu0 0
    %2153 = vmatpush1.bf16.msra.mxu0 0
    %2154 = vmatprep.mubr.bf16.mxu0 0
    %2155 = vmatmul.mubr.bf16.gmra.mrb[0].mxu0 %v2120
    %v2156 = vpop.f32.mrb[0].mxu0
    %v2157 = vadd.f32 0.0, %v2156
    %v2158 = vpop.f32.mrb[0].mxu0
    %v2159 = vpop.f32.mrb[0].mxu0
    %v2160 = vadd.f32 0.0, %v2159
    %v2161 = vpop.f32.mrb[0].mxu0
    %2162 = vdwg.mxu0
    %v2164 = vsel %vm2072, %v2118, 0
    %2166 = vmatprep.subr.bf16.mxu0 0
    %2167 = vmatpush1.bf16.msra.mxu0 %v1959
    %2168 = vmatprep.subr.bf16.mxu0 0
    %2169 = vmatpush1.bf16.msra.mxu0 0
    %2170 = vmatprep.subr.bf16.mxu0 0
    %2171 = vmatpush1.bf16.msra.mxu0 0
    %2172 = vmatprep.subr.bf16.mxu0 0
    %2173 = vmatpush1.bf16.msra.mxu0 0
    %2174 = vmatprep.subr.bf16.mxu0 0
    %2175 = vmatpush1.bf16.msra.mxu0 0
    %2176 = vmatprep.subr.bf16.mxu0 0
    %2177 = vmatpush1.bf16.msra.mxu0 0
    %2178 = vmatprep.subr.bf16.mxu0 0
    %2179 = vmatpush1.bf16.msra.mxu0 0
    %2180 = vmatprep.subr.bf16.mxu0 0
    %2181 = vmatpush1.bf16.msra.mxu0 0
    %2182 = vmatprep.subr.bf16.mxu0 0
    %2183 = vmatpush1.bf16.msra.mxu0 0
    %2184 = vmatprep.subr.bf16.mxu0 0
    %2185 = vmatpush1.bf16.msra.mxu0 0
    %2186 = vmatprep.subr.bf16.mxu0 0
    %2187 = vmatpush1.bf16.msra.mxu0 0
    %2188 = vmatprep.subr.bf16.mxu0 0
    %2189 = vmatpush1.bf16.msra.mxu0 0
    %2190 = vmatprep.subr.bf16.mxu0 0
    %2191 = vmatpush1.bf16.msra.mxu0 0
    %2192 = vmatprep.subr.bf16.mxu0 0
    %2193 = vmatpush1.bf16.msra.mxu0 0
    %2194 = vmatprep.subr.bf16.mxu0 0
    %2195 = vmatpush1.bf16.msra.mxu0 0
    %2196 = vmatprep.subr.bf16.mxu0 0
    %2197 = vmatpush1.bf16.msra.mxu0 0
    %2198 = vmatprep.mubr.bf16.mxu0 0
    %2199 = vmatmul.mubr.bf16.gmra.mrb[0].mxu0 %v2164
    %v2200 = vpop.f32.mrb[0].mxu0
    %v2201 = vadd.f32 0.0, %v2200
    %v2202 = vpop.f32.mrb[0].mxu0
    %v2203 = vpop.f32.mrb[0].mxu0
    %v2204 = vadd.f32 0.0, %v2203
    %v2205 = vpop.f32.mrb[0].mxu0
    %2206 = vdwg.mxu0
    %v2207 = vpack.c.bf16 %v2160, %v2157
    %v2208 = vpack.c.bf16 %v2204, %v2201
    %2209 = vst.msk [vmem:[#allocation2] sm:$0xff] %vm1969, %v2207
    %2210 = vst.msk [vmem:[#allocation2 + $0x18] sm:$0xff] %vm1969, %v2208
    %2212 = vrot.lane.b32.xlu0 %v1944, 64
    %v2213 = vpop.permute.xlu0 %2212
    %2215 = vrot.lane.b32.xlu0 %v1947, 64
    %v2216 = vpop.permute.xlu0 %2215
    %v2218 = vsel %vm1969, %v2213, 0
    %v2221 = vsel %vm1969, %v2216, 0
    %2223 = vmatprep.subr.bf16.mxu0 0
    %2224 = vmatpush1.bf16.xpose.msra.mxu0 %v2221
    %2225 = vmatprep.subr.bf16.mxu0 0
    %2226 = vmatpush1.bf16.xpose.msra.mxu0 0
    %2227 = vmatprep.subr.bf16.mxu0 0
    %2228 = vmatpush1.bf16.xpose.msra.mxu0 0
    %2229 = vmatprep.subr.bf16.mxu0 0
    %2230 = vmatpush1.bf16.xpose.msra.mxu0 0
    %2231 = vmatprep.subr.bf16.mxu0 0
    %2232 = vmatpush1.bf16.xpose.msra.mxu0 0
    %2233 = vmatprep.subr.bf16.mxu0 0
    %2234 = vmatpush1.bf16.xpose.msra.mxu0 0
    %2235 = vmatprep.subr.bf16.mxu0 0
    %2236 = vmatpush1.bf16.xpose.msra.mxu0 0
    %2237 = vmatprep.subr.bf16.mxu0 0
    %2238 = vmatpush1.bf16.xpose.msra.mxu0 0
    %2239 = vmatprep.subr.bf16.mxu0 0
    %2240 = vmatpush1.bf16.xpose.msra.mxu0 0
    %2241 = vmatprep.subr.bf16.mxu0 0
    %2242 = vmatpush1.bf16.xpose.msra.mxu0 0
    %2243 = vmatprep.subr.bf16.mxu0 0
    %2244 = vmatpush1.bf16.xpose.msra.mxu0 0
    %2245 = vmatprep.subr.bf16.mxu0 0
    %2246 = vmatpush1.bf16.xpose.msra.mxu0 0
    %2247 = vmatprep.subr.bf16.mxu0 0
    %2248 = vmatpush1.bf16.xpose.msra.mxu0 0
    %2249 = vmatprep.subr.bf16.mxu0 0
    %2250 = vmatpush1.bf16.xpose.msra.mxu0 0
    %2251 = vmatprep.subr.bf16.mxu0 0
    %2252 = vmatpush1.bf16.xpose.msra.mxu0 0
    %2253 = vmatprep.subr.bf16.mxu0 0
    %2254 = vmatpush1.bf16.xpose.msra.mxu0 0
    %2255 = vmatprep.mubr.bf16.mxu0 0
    %2256 = vmatmul.mubr.bf16.gmra.mrb[0].mxu0 %v2218
    %v2257 = vpop.f32.mrb[0].mxu0
    %v2258 = vadd.f32 0.0, %v2257
    %v2259 = vpop.f32.mrb[0].mxu0
    %v2260 = vpop.f32.mrb[0].mxu0
    %v2261 = vadd.f32 0.0, %v2260
    %v2262 = vpop.f32.mrb[0].mxu0
    %2263 = vdwg.mxu0
    %2265 = vrot.lane.b32.xlu0 %v1953, 64
    %v2266 = vpop.permute.xlu0 %2265
    %2268 = vrot.lane.b32.xlu0 %v1956, 64
    %v2269 = vpop.permute.xlu0 %2268
    %v2271 = vsel %vm1969, %v2266, 0
    %v2274 = vsel %vm1969, %v2269, 0
    %2276 = vmatprep.subr.bf16.mxu0 0
    %2277 = vmatpush1.bf16.xpose.msra.mxu0 %v2274
    %2278 = vmatprep.subr.bf16.mxu0 0
    %2279 = vmatpush1.bf16.xpose.msra.mxu0 0
    %2280 = vmatprep.subr.bf16.mxu0 0
    %2281 = vmatpush1.bf16.xpose.msra.mxu0 0
    %2282 = vmatprep.subr.bf16.mxu0 0
    %2283 = vmatpush1.bf16.xpose.msra.mxu0 0
    %2284 = vmatprep.subr.bf16.mxu0 0
    %2285 = vmatpush1.bf16.xpose.msra.mxu0 0
    %2286 = vmatprep.subr.bf16.mxu0 0
    %2287 = vmatpush1.bf16.xpose.msra.mxu0 0
    %2288 = vmatprep.subr.bf16.mxu0 0
    %2289 = vmatpush1.bf16.xpose.msra.mxu0 0
    %2290 = vmatprep.subr.bf16.mxu0 0
    %2291 = vmatpush1.bf16.xpose.msra.mxu0 0
    %2292 = vmatprep.subr.bf16.mxu0 0
    %2293 = vmatpush1.bf16.xpose.msra.mxu0 0
    %2294 = vmatprep.subr.bf16.mxu0 0
    %2295 = vmatpush1.bf16.xpose.msra.mxu0 0
    %2296 = vmatprep.subr.bf16.mxu0 0
    %2297 = vmatpush1.bf16.xpose.msra.mxu0 0
    %2298 = vmatprep.subr.bf16.mxu0 0
    %2299 = vmatpush1.bf16.xpose.msra.mxu0 0
    %2300 = vmatprep.subr.bf16.mxu0 0
    %2301 = vmatpush1.bf16.xpose.msra.mxu0 0
    %2302 = vmatprep.subr.bf16.mxu0 0
    %2303 = vmatpush1.bf16.xpose.msra.mxu0 0
    %2304 = vmatprep.subr.bf16.mxu0 0
    %2305 = vmatpush1.bf16.xpose.msra.mxu0 0
    %2306 = vmatprep.subr.bf16.mxu0 0
    %2307 = vmatpush1.bf16.xpose.msra.mxu0 0
    %2308 = vmatprep.mubr.bf16.mxu0 0
    %2309 = vmatmul.mubr.bf16.gmra.mrb[0].mxu0 %v2271
    %v2310 = vpop.f32.mrb[0].mxu0
    %v2311 = vadd.f32 0.0, %v2310
    %v2312 = vpop.f32.mrb[0].mxu0
    %v2313 = vpop.f32.mrb[0].mxu0
    %v2314 = vadd.f32 0.0, %v2313
    %v2315 = vpop.f32.mrb[0].mxu0
    %2316 = vdwg.mxu0
    %v2317 = vsel %vm2066, %v2258, -inf
    %v2318 = vsel %vm2067, %v2261, -inf
    %v2319 = vsel %vm2066, %v2311, -inf
    %v2320 = vsel %vm2067, %v2314, -inf
    %v2321 = vsel %vm2072, %v2317, -inf
    %2322 = vmax.xlane.f32.xlu0 %v2321
    %v2323 = vpop.xlane.xlu0 %2322
    %v2324 = vsel %vm2072, %v2318, -inf
    %2325 = vmax.xlane.f32.xlu0 %v2324
    %v2326 = vpop.xlane.xlu0 %2325
    %v2327 = vsel %vm2072, %v2319, -inf
    %2328 = vmax.xlane.f32.xlu0 %v2327
    %v2329 = vpop.xlane.xlu0 %2328
    %v2330 = vsel %vm2072, %v2320, -inf
    %2331 = vmax.xlane.f32.xlu0 %v2330
    %v2332 = vpop.xlane.xlu0 %2331
    %v2333 = vsub.f32 %v2317, %v2323
    %v2334 = vsub.f32 %v2318, %v2326
    %v2335 = vsub.f32 %v2319, %v2329
    %v2336 = vsub.f32 %v2320, %v2332
    %v2337 = vmul.f32 %v2333, 1.442695
    %v2338 = vpow.pop %v2337
    %v2339 = vmul.f32 %v2334, 1.442695
    %v2340 = vpow.pop %v2339
    %v2341 = vmul.f32 %v2335, 1.442695
    %v2342 = vpow.pop %v2341
    %v2343 = vmul.f32 %v2336, 1.442695
    %v2344 = vpow.pop %v2343
    %v2345 = vsel %vm2072, %v2338, 0.0
    %2346 = vadd.xlane.f32.xlu0 %v2345
    %v2347 = vpop.xlane.xlu0 %2346
    %v2348 = vsel %vm2072, %v2340, 0.0
    %2349 = vadd.xlane.f32.xlu0 %v2348
    %v2350 = vpop.xlane.xlu0 %2349
    %v2351 = vsel %vm2072, %v2342, 0.0
    %2352 = vadd.xlane.f32.xlu0 %v2351
    %v2353 = vpop.xlane.xlu0 %2352
    %v2354 = vsel %vm2072, %v2344, 0.0
    %2355 = vadd.xlane.f32.xlu0 %v2354
    %v2356 = vpop.xlane.xlu0 %2355
    %v2357 = vrcp.pop %v2347
    %v2358 = vrcp.pop %v2350
    %v2359 = vrcp.pop %v2353
    %v2360 = vrcp.pop %v2356
    %v2361 = vmul.f32 %v2338, %v2357
    %v2362 = vmul.f32 %v2340, %v2358
    %v2363 = vmul.f32 %v2342, %v2359
    %v2364 = vmul.f32 %v2344, %v2360
    %v2365 = vpack.c.bf16 %v2362, %v2361
    %v2366 = vpack.c.bf16 %v2364, %v2363
    %2368 = vrot.lane.b32.xlu0 %v1950, 64
    %v2369 = vpop.permute.xlu0 %2368
    %v2372 = vsel %vm2072, %v2365, 0
    %2374 = vmatprep.subr.bf16.mxu0 0
    %2375 = vmatpush1.bf16.msra.mxu0 %v2369
    %2376 = vmatprep.subr.bf16.mxu0 0
    %2377 = vmatpush1.bf16.msra.mxu0 0
    %2378 = vmatprep.subr.bf16.mxu0 0
    %2379 = vmatpush1.bf16.msra.mxu0 0
    %2380 = vmatprep.subr.bf16.mxu0 0
    %2381 = vmatpush1.bf16.msra.mxu0 0
    %2382 = vmatprep.subr.bf16.mxu0 0
    %2383 = vmatpush1.bf16.msra.mxu0 0
    %2384 = vmatprep.subr.bf16.mxu0 0
    %2385 = vmatpush1.bf16.msra.mxu0 0
    %2386 = vmatprep.subr.bf16.mxu0 0
    %2387 = vmatpush1.bf16.msra.mxu0 0
    %2388 = vmatprep.subr.bf16.mxu0 0
    %2389 = vmatpush1.bf16.msra.mxu0 0
    %2390 = vmatprep.subr.bf16.mxu0 0
    %2391 = vmatpush1.bf16.msra.mxu0 0
    %2392 = vmatprep.subr.bf16.mxu0 0
    %2393 = vmatpush1.bf16.msra.mxu0 0
    %2394 = vmatprep.subr.bf16.mxu0 0
    %2395 = vmatpush1.bf16.msra.mxu0 0
    %2396 = vmatprep.subr.bf16.mxu0 0
    %2397 = vmatpush1.bf16.msra.mxu0 0
    %2398 = vmatprep.subr.bf16.mxu0 0
    %2399 = vmatpush1.bf16.msra.mxu0 0
    %2400 = vmatprep.subr.bf16.mxu0 0
    %2401 = vmatpush1.bf16.msra.mxu0 0
    %2402 = vmatprep.subr.bf16.mxu0 0
    %2403 = vmatpush1.bf16.msra.mxu0 0
    %2404 = vmatprep.subr.bf16.mxu0 0
    %2405 = vmatpush1.bf16.msra.mxu0 0
    %2406 = vmatprep.mubr.bf16.mxu0 0
    %2407 = vmatmul.mubr.bf16.gmra.mrb[0].mxu0 %v2372
    %v2408 = vpop.f32.mrb[0].mxu0
    %v2409 = vadd.f32 0.0, %v2408
    %v2410 = vpop.f32.mrb[0].mxu0
    %v2411 = vpop.f32.mrb[0].mxu0
    %v2412 = vadd.f32 0.0, %v2411
    %v2413 = vpop.f32.mrb[0].mxu0
    %2414 = vdwg.mxu0
    %2416 = vrot.lane.b32.xlu0 %v1959, 64
    %v2417 = vpop.permute.xlu0 %2416
    %v2420 = vsel %vm2072, %v2366, 0
    %2422 = vmatprep.subr.bf16.mxu0 0
    %2423 = vmatpush1.bf16.msra.mxu0 %v2417
    %2424 = vmatprep.subr.bf16.mxu0 0
    %2425 = vmatpush1.bf16.msra.mxu0 0
    %2426 = vmatprep.subr.bf16.mxu0 0
    %2427 = vmatpush1.bf16.msra.mxu0 0
    %2428 = vmatprep.subr.bf16.mxu0 0
    %2429 = vmatpush1.bf16.msra.mxu0 0
    %2430 = vmatprep.subr.bf16.mxu0 0
    %2431 = vmatpush1.bf16.msra.mxu0 0
    %2432 = vmatprep.subr.bf16.mxu0 0
    %2433 = vmatpush1.bf16.msra.mxu0 0
    %2434 = vmatprep.subr.bf16.mxu0 0
    %2435 = vmatpush1.bf16.msra.mxu0 0
    %2436 = vmatprep.subr.bf16.mxu0 0
    %2437 = vmatpush1.bf16.msra.mxu0 0
    %2438 = vmatprep.subr.bf16.mxu0 0
    %2439 = vmatpush1.bf16.msra.mxu0 0
    %2440 = vmatprep.subr.bf16.mxu0 0
    %2441 = vmatpush1.bf16.msra.mxu0 0
    %2442 = vmatprep.subr.bf16.mxu0 0
    %2443 = vmatpush1.bf16.msra.mxu0 0
    %2444 = vmatprep.subr.bf16.mxu0 0
    %2445 = vmatpush1.bf16.msra.mxu0 0
    %2446 = vmatprep.subr.bf16.mxu0 0
    %2447 = vmatpush1.bf16.msra.mxu0 0
    %2448 = vmatprep.subr.bf16.mxu0 0
    %2449 = vmatpush1.bf16.msra.mxu0 0
    %2450 = vmatprep.subr.bf16.mxu0 0
    %2451 = vmatpush1.bf16.msra.mxu0 0
    %2452 = vmatprep.subr.bf16.mxu0 0
    %2453 = vmatpush1.bf16.msra.mxu0 0
    %2454 = vmatprep.mubr.bf16.mxu0 0
    %2455 = vmatmul.mubr.bf16.gmra.mrb[0].mxu0 %v2420
    %v2456 = vpop.f32.mrb[0].mxu0
    %v2457 = vadd.f32 0.0, %v2456
    %v2458 = vpop.f32.mrb[0].mxu0
    %v2459 = vpop.f32.mrb[0].mxu0
    %v2460 = vadd.f32 0.0, %v2459
    %v2461 = vpop.f32.mrb[0].mxu0
    %2462 = vdwg.mxu0
    %v2463 = vpack.c.bf16 %v2412, %v2409
    %v2464 = vpack.c.bf16 %v2460, %v2457
    %2467 = vrot.lane.b32.xlu0 %v2463, 64
    %v2468 = vpop.permute.xlu0 %2467
    %2469 = vrot.lane.b32.xlu0 %v2464, 64
    %v2470 = vpop.permute.xlu0 %2469
    %vm2473 = vcmask 1048064
    %2474 = vst.msk [vmem:[#allocation2] sm:$0xff] %vm2473, %v2468
    %2475 = vst.msk [vmem:[#allocation2 + $0x18] sm:$0xff] %vm2473, %v2470
    %v2477 = vsel %vm1969, %v1945, 0
    %v2480 = vsel %vm1969, %v1948, 0
    %2482 = vmatprep.subr.bf16.mxu0 0
    %2483 = vmatpush1.bf16.xpose.msra.mxu0 %v2480
    %2484 = vmatprep.subr.bf16.mxu0 0
    %2485 = vmatpush1.bf16.xpose.msra.mxu0 0
    %2486 = vmatprep.subr.bf16.mxu0 0
    %2487 = vmatpush1.bf16.xpose.msra.mxu0 0
    %2488 = vmatprep.subr.bf16.mxu0 0
    %2489 = vmatpush1.bf16.xpose.msra.mxu0 0
    %2490 = vmatprep.subr.bf16.mxu0 0
    %2491 = vmatpush1.bf16.xpose.msra.mxu0 0
    %2492 = vmatprep.subr.bf16.mxu0 0
    %2493 = vmatpush1.bf16.xpose.msra.mxu0 0
    %2494 = vmatprep.subr.bf16.mxu0 0
    %2495 = vmatpush1.bf16.xpose.msra.mxu0 0
    %2496 = vmatprep.subr.bf16.mxu0 0
    %2497 = vmatpush1.bf16.xpose.msra.mxu0 0
    %2498 = vmatprep.subr.bf16.mxu0 0
    %2499 = vmatpush1.bf16.xpose.msra.mxu0 0
    %2500 = vmatprep.subr.bf16.mxu0 0
    %2501 = vmatpush1.bf16.xpose.msra.mxu0 0
    %2502 = vmatprep.subr.bf16.mxu0 0
    %2503 = vmatpush1.bf16.xpose.msra.mxu0 0
    %2504 = vmatprep.subr.bf16.mxu0 0
    %2505 = vmatpush1.bf16.xpose.msra.mxu0 0
    %2506 = vmatprep.subr.bf16.mxu0 0
    %2507 = vmatpush1.bf16.xpose.msra.mxu0 0
    %2508 = vmatprep.subr.bf16.mxu0 0
    %2509 = vmatpush1.bf16.xpose.msra.mxu0 0
    %2510 = vmatprep.subr.bf16.mxu0 0
    %2511 = vmatpush1.bf16.xpose.msra.mxu0 0
    %2512 = vmatprep.subr.bf16.mxu0 0
    %2513 = vmatpush1.bf16.xpose.msra.mxu0 0
    %2514 = vmatprep.mubr.bf16.mxu0 0
    %2515 = vmatmul.mubr.bf16.gmra.mrb[0].mxu0 %v2477
    %v2516 = vpop.f32.mrb[0].mxu0
    %v2517 = vadd.f32 0.0, %v2516
    %v2518 = vpop.f32.mrb[0].mxu0
    %v2519 = vpop.f32.mrb[0].mxu0
    %v2520 = vadd.f32 0.0, %v2519
    %v2521 = vpop.f32.mrb[0].mxu0
    %2522 = vdwg.mxu0
    %v2524 = vsel %vm1969, %v1954, 0
    %v2527 = vsel %vm1969, %v1957, 0
    %2529 = vmatprep.subr.bf16.mxu0 0
    %2530 = vmatpush1.bf16.xpose.msra.mxu0 %v2527
    %2531 = vmatprep.subr.bf16.mxu0 0
    %2532 = vmatpush1.bf16.xpose.msra.mxu0 0
    %2533 = vmatprep.subr.bf16.mxu0 0
    %2534 = vmatpush1.bf16.xpose.msra.mxu0 0
    %2535 = vmatprep.subr.bf16.mxu0 0
    %2536 = vmatpush1.bf16.xpose.msra.mxu0 0
    %2537 = vmatprep.subr.bf16.mxu0 0
    %2538 = vmatpush1.bf16.xpose.msra.mxu0 0
    %2539 = vmatprep.subr.bf16.mxu0 0
    %2540 = vmatpush1.bf16.xpose.msra.mxu0 0
    %2541 = vmatprep.subr.bf16.mxu0 0
    %2542 = vmatpush1.bf16.xpose.msra.mxu0 0
    %2543 = vmatprep.subr.bf16.mxu0 0
    %2544 = vmatpush1.bf16.xpose.msra.mxu0 0
    %2545 = vmatprep.subr.bf16.mxu0 0
    %2546 = vmatpush1.bf16.xpose.msra.mxu0 0
    %2547 = vmatprep.subr.bf16.mxu0 0
    %2548 = vmatpush1.bf16.xpose.msra.mxu0 0
    %2549 = vmatprep.subr.bf16.mxu0 0
    %2550 = vmatpush1.bf16.xpose.msra.mxu0 0
    %2551 = vmatprep.subr.bf16.mxu0 0
    %2552 = vmatpush1.bf16.xpose.msra.mxu0 0
    %2553 = vmatprep.subr.bf16.mxu0 0
    %2554 = vmatpush1.bf16.xpose.msra.mxu0 0
    %2555 = vmatprep.subr.bf16.mxu0 0
    %2556 = vmatpush1.bf16.xpose.msra.mxu0 0
    %2557 = vmatprep.subr.bf16.mxu0 0
    %2558 = vmatpush1.bf16.xpose.msra.mxu0 0
    %2559 = vmatprep.subr.bf16.mxu0 0
    %2560 = vmatpush1.bf16.xpose.msra.mxu0 0
    %2561 = vmatprep.mubr.bf16.mxu0 0
    %2562 = vmatmul.mubr.bf16.gmra.mrb[0].mxu0 %v2524
    %v2563 = vpop.f32.mrb[0].mxu0
    %v2564 = vadd.f32 0.0, %v2563
    %v2565 = vpop.f32.mrb[0].mxu0
    %v2566 = vpop.f32.mrb[0].mxu0
    %v2567 = vadd.f32 0.0, %v2566
    %v2568 = vpop.f32.mrb[0].mxu0
    %2569 = vdwg.mxu0
    %v2570 = vsel %vm2066, %v2517, -inf
    %v2571 = vsel %vm2067, %v2520, -inf
    %v2572 = vsel %vm2066, %v2564, -inf
    %v2573 = vsel %vm2067, %v2567, -inf
    %v2574 = vsel %vm2072, %v2570, -inf
    %2575 = vmax.xlane.f32.xlu0 %v2574
    %v2576 = vpop.xlane.xlu0 %2575
    %v2577 = vsel %vm2072, %v2571, -inf
    %2578 = vmax.xlane.f32.xlu0 %v2577
    %v2579 = vpop.xlane.xlu0 %2578
    %v2580 = vsel %vm2072, %v2572, -inf
    %2581 = vmax.xlane.f32.xlu0 %v2580
    %v2582 = vpop.xlane.xlu0 %2581
    %v2583 = vsel %vm2072, %v2573, -inf
    %2584 = vmax.xlane.f32.xlu0 %v2583
    %v2585 = vpop.xlane.xlu0 %2584
    %v2586 = vsub.f32 %v2570, %v2576
    %v2587 = vsub.f32 %v2571, %v2579
    %v2588 = vsub.f32 %v2572, %v2582
    %v2589 = vsub.f32 %v2573, %v2585
    %v2590 = vmul.f32 %v2586, 1.442695
    %v2591 = vpow.pop %v2590
    %v2592 = vmul.f32 %v2587, 1.442695
    %v2593 = vpow.pop %v2592
    %v2594 = vmul.f32 %v2588, 1.442695
    %v2595 = vpow.pop %v2594
    %v2596 = vmul.f32 %v2589, 1.442695
    %v2597 = vpow.pop %v2596
    %v2598 = vsel %vm2072, %v2591, 0.0
    %2599 = vadd.xlane.f32.xlu0 %v2598
    %v2600 = vpop.xlane.xlu0 %2599
    %v2601 = vsel %vm2072, %v2593, 0.0
    %2602 = vadd.xlane.f32.xlu0 %v2601
    %v2603 = vpop.xlane.xlu0 %2602
    %v2604 = vsel %vm2072, %v2595, 0.0
    %2605 = vadd.xlane.f32.xlu0 %v2604
    %v2606 = vpop.xlane.xlu0 %2605
    %v2607 = vsel %vm2072, %v2597, 0.0
    %2608 = vadd.xlane.f32.xlu0 %v2607
    %v2609 = vpop.xlane.xlu0 %2608
    %v2610 = vrcp.pop %v2600
    %v2611 = vrcp.pop %v2603
    %v2612 = vrcp.pop %v2606
    %v2613 = vrcp.pop %v2609
    %v2614 = vmul.f32 %v2591, %v2610
    %v2615 = vmul.f32 %v2593, %v2611
    %v2616 = vmul.f32 %v2595, %v2612
    %v2617 = vmul.f32 %v2597, %v2613
    %v2618 = vpack.c.bf16 %v2615, %v2614
    %v2619 = vpack.c.bf16 %v2617, %v2616
    %v2621 = vsel %vm2072, %v2618, 0
    %2623 = vmatprep.subr.bf16.mxu0 0
    %2624 = vmatpush1.bf16.msra.mxu0 %v1951
    %2625 = vmatprep.subr.bf16.mxu0 0
    %2626 = vmatpush1.bf16.msra.mxu0 0
    %2627 = vmatprep.subr.bf16.mxu0 0
    %2628 = vmatpush1.bf16.msra.mxu0 0
    %2629 = vmatprep.subr.bf16.mxu0 0
    %2630 = vmatpush1.bf16.msra.mxu0 0
    %2631 = vmatprep.subr.bf16.mxu0 0
    %2632 = vmatpush1.bf16.msra.mxu0 0
    %2633 = vmatprep.subr.bf16.mxu0 0
    %2634 = vmatpush1.bf16.msra.mxu0 0
    %2635 = vmatprep.subr.bf16.mxu0 0
    %2636 = vmatpush1.bf16.msra.mxu0 0
    %2637 = vmatprep.subr.bf16.mxu0 0
    %2638 = vmatpush1.bf16.msra.mxu0 0
    %2639 = vmatprep.subr.bf16.mxu0 0
    %2640 = vmatpush1.bf16.msra.mxu0 0
    %2641 = vmatprep.subr.bf16.mxu0 0
    %2642 = vmatpush1.bf16.msra.mxu0 0
    %2643 = vmatprep.subr.bf16.mxu0 0
    %2644 = vmatpush1.bf16.msra.mxu0 0
    %2645 = vmatprep.subr.bf16.mxu0 0
    %2646 = vmatpush1.bf16.msra.mxu0 0
    %2647 = vmatprep.subr.bf16.mxu0 0
    %2648 = vmatpush1.bf16.msra.mxu0 0
    %2649 = vmatprep.subr.bf16.mxu0 0
    %2650 = vmatpush1.bf16.msra.mxu0 0
    %2651 = vmatprep.subr.bf16.mxu0 0
    %2652 = vmatpush1.bf16.msra.mxu0 0
    %2653 = vmatprep.subr.bf16.mxu0 0
    %2654 = vmatpush1.bf16.msra.mxu0 0
    %2655 = vmatprep.mubr.bf16.mxu0 0
    %2656 = vmatmul.mubr.bf16.gmra.mrb[0].mxu0 %v2621
    %v2657 = vpop.f32.mrb[0].mxu0
    %v2658 = vadd.f32 0.0, %v2657
    %v2659 = vpop.f32.mrb[0].mxu0
    %v2660 = vpop.f32.mrb[0].mxu0
    %v2661 = vadd.f32 0.0, %v2660
    %v2662 = vpop.f32.mrb[0].mxu0
    %2663 = vdwg.mxu0
    %v2665 = vsel %vm2072, %v2619, 0
    %2667 = vmatprep.subr.bf16.mxu0 0
    %2668 = vmatpush1.bf16.msra.mxu0 %v1960
    %2669 = vmatprep.subr.bf16.mxu0 0
    %2670 = vmatpush1.bf16.msra.mxu0 0
    %2671 = vmatprep.subr.bf16.mxu0 0
    %2672 = vmatpush1.bf16.msra.mxu0 0
    %2673 = vmatprep.subr.bf16.mxu0 0
    %2674 = vmatpush1.bf16.msra.mxu0 0
    %2675 = vmatprep.subr.bf16.mxu0 0
    %2676 = vmatpush1.bf16.msra.mxu0 0
    %2677 = vmatprep.subr.bf16.mxu0 0
    %2678 = vmatpush1.bf16.msra.mxu0 0
    %2679 = vmatprep.subr.bf16.mxu0 0
    %2680 = vmatpush1.bf16.msra.mxu0 0
    %2681 = vmatprep.subr.bf16.mxu0 0
    %2682 = vmatpush1.bf16.msra.mxu0 0
    %2683 = vmatprep.subr.bf16.mxu0 0
    %2684 = vmatpush1.bf16.msra.mxu0 0
    %2685 = vmatprep.subr.bf16.mxu0 0
    %2686 = vmatpush1.bf16.msra.mxu0 0
    %2687 = vmatprep.subr.bf16.mxu0 0
    %2688 = vmatpush1.bf16.msra.mxu0 0
    %2689 = vmatprep.subr.bf16.mxu0 0
    %2690 = vmatpush1.bf16.msra.mxu0 0
    %2691 = vmatprep.subr.bf16.mxu0 0
    %2692 = vmatpush1.bf16.msra.mxu0 0
    %2693 = vmatprep.subr.bf16.mxu0 0
    %2694 = vmatpush1.bf16.msra.mxu0 0
    %2695 = vmatprep.subr.bf16.mxu0 0
    %2696 = vmatpush1.bf16.msra.mxu0 0
    %2697 = vmatprep.subr.bf16.mxu0 0
    %2698 = vmatpush1.bf16.msra.mxu0 0
    %2699 = vmatprep.mubr.bf16.mxu0 0
    %2700 = vmatmul.mubr.bf16.gmra.mrb[0].mxu0 %v2665
    %v2701 = vpop.f32.mrb[0].mxu0
    %v2702 = vadd.f32 0.0, %v2701
    %v2703 = vpop.f32.mrb[0].mxu0
    %v2704 = vpop.f32.mrb[0].mxu0
    %v2705 = vadd.f32 0.0, %v2704
    %v2706 = vpop.f32.mrb[0].mxu0
    %2707 = vdwg.mxu0
    %v2708 = vpack.c.bf16 %v2661, %v2658
    %v2709 = vpack.c.bf16 %v2705, %v2702
    %2710 = vst.msk [vmem:[#allocation2 + $0x8] sm:$0xff] %vm1969, %v2708
    %2711 = vst.msk [vmem:[#allocation2 + $0x20] sm:$0xff] %vm1969, %v2709
    %2713 = vrot.lane.b32.xlu0 %v1945, 64
    %v2714 = vpop.permute.xlu0 %2713
    %2716 = vrot.lane.b32.xlu0 %v1948, 64
    %v2717 = vpop.permute.xlu0 %2716
    %v2719 = vsel %vm1969, %v2714, 0
    %v2722 = vsel %vm1969, %v2717, 0
    %2724 = vmatprep.subr.bf16.mxu0 0
    %2725 = vmatpush1.bf16.xpose.msra.mxu0 %v2722
    %2726 = vmatprep.subr.bf16.mxu0 0
    %2727 = vmatpush1.bf16.xpose.msra.mxu0 0
    %2728 = vmatprep.subr.bf16.mxu0 0
    %2729 = vmatpush1.bf16.xpose.msra.mxu0 0
    %2730 = vmatprep.subr.bf16.mxu0 0
    %2731 = vmatpush1.bf16.xpose.msra.mxu0 0
    %2732 = vmatprep.subr.bf16.mxu0 0
    %2733 = vmatpush1.bf16.xpose.msra.mxu0 0
    %2734 = vmatprep.subr.bf16.mxu0 0
    %2735 = vmatpush1.bf16.xpose.msra.mxu0 0
    %2736 = vmatprep.subr.bf16.mxu0 0
    %2737 = vmatpush1.bf16.xpose.msra.mxu0 0
    %2738 = vmatprep.subr.bf16.mxu0 0
    %2739 = vmatpush1.bf16.xpose.msra.mxu0 0
    %2740 = vmatprep.subr.bf16.mxu0 0
    %2741 = vmatpush1.bf16.xpose.msra.mxu0 0
    %2742 = vmatprep.subr.bf16.mxu0 0
    %2743 = vmatpush1.bf16.xpose.msra.mxu0 0
    %2744 = vmatprep.subr.bf16.mxu0 0
    %2745 = vmatpush1.bf16.xpose.msra.mxu0 0
    %2746 = vmatprep.subr.bf16.mxu0 0
    %2747 = vmatpush1.bf16.xpose.msra.mxu0 0
    %2748 = vmatprep.subr.bf16.mxu0 0
    %2749 = vmatpush1.bf16.xpose.msra.mxu0 0
    %2750 = vmatprep.subr.bf16.mxu0 0
    %2751 = vmatpush1.bf16.xpose.msra.mxu0 0
    %2752 = vmatprep.subr.bf16.mxu0 0
    %2753 = vmatpush1.bf16.xpose.msra.mxu0 0
    %2754 = vmatprep.subr.bf16.mxu0 0
    %2755 = vmatpush1.bf16.xpose.msra.mxu0 0
    %2756 = vmatprep.mubr.bf16.mxu0 0
    %2757 = vmatmul.mubr.bf16.gmra.mrb[0].mxu0 %v2719
    %v2758 = vpop.f32.mrb[0].mxu0
    %v2759 = vadd.f32 0.0, %v2758
    %v2760 = vpop.f32.mrb[0].mxu0
    %v2761 = vpop.f32.mrb[0].mxu0
    %v2762 = vadd.f32 0.0, %v2761
    %v2763 = vpop.f32.mrb[0].mxu0
    %2764 = vdwg.mxu0
    %2766 = vrot.lane.b32.xlu0 %v1954, 64
    %v2767 = vpop.permute.xlu0 %2766
    %2769 = vrot.lane.b32.xlu0 %v1957, 64
    %v2770 = vpop.permute.xlu0 %2769
    %v2772 = vsel %vm1969, %v2767, 0
    %v2775 = vsel %vm1969, %v2770, 0
    %2777 = vmatprep.subr.bf16.mxu0 0
    %2778 = vmatpush1.bf16.xpose.msra.mxu0 %v2775
    %2779 = vmatprep.subr.bf16.mxu0 0
    %2780 = vmatpush1.bf16.xpose.msra.mxu0 0
    %2781 = vmatprep.subr.bf16.mxu0 0
    %2782 = vmatpush1.bf16.xpose.msra.mxu0 0
    %2783 = vmatprep.subr.bf16.mxu0 0
    %2784 = vmatpush1.bf16.xpose.msra.mxu0 0
    %2785 = vmatprep.subr.bf16.mxu0 0
    %2786 = vmatpush1.bf16.xpose.msra.mxu0 0
    %2787 = vmatprep.subr.bf16.mxu0 0
    %2788 = vmatpush1.bf16.xpose.msra.mxu0 0
    %2789 = vmatprep.subr.bf16.mxu0 0
    %2790 = vmatpush1.bf16.xpose.msra.mxu0 0
    %2791 = vmatprep.subr.bf16.mxu0 0
    %2792 = vmatpush1.bf16.xpose.msra.mxu0 0
    %2793 = vmatprep.subr.bf16.mxu0 0
    %2794 = vmatpush1.bf16.xpose.msra.mxu0 0
    %2795 = vmatprep.subr.bf16.mxu0 0
    %2796 = vmatpush1.bf16.xpose.msra.mxu0 0
    %2797 = vmatprep.subr.bf16.mxu0 0
    %2798 = vmatpush1.bf16.xpose.msra.mxu0 0
    %2799 = vmatprep.subr.bf16.mxu0 0
    %2800 = vmatpush1.bf16.xpose.msra.mxu0 0
    %2801 = vmatprep.subr.bf16.mxu0 0
    %2802 = vmatpush1.bf16.xpose.msra.mxu0 0
    %2803 = vmatprep.subr.bf16.mxu0 0
    %2804 = vmatpush1.bf16.xpose.msra.mxu0 0
    %2805 = vmatprep.subr.bf16.mxu0 0
    %2806 = vmatpush1.bf16.xpose.msra.mxu0 0
    %2807 = vmatprep.subr.bf16.mxu0 0
    %2808 = vmatpush1.bf16.xpose.msra.mxu0 0
    %2809 = vmatprep.mubr.bf16.mxu0 0
    %2810 = vmatmul.mubr.bf16.gmra.mrb[0].mxu0 %v2772
    %v2811 = vpop.f32.mrb[0].mxu0
    %v2812 = vadd.f32 0.0, %v2811
    %v2813 = vpop.f32.mrb[0].mxu0
    %v2814 = vpop.f32.mrb[0].mxu0
    %v2815 = vadd.f32 0.0, %v2814
    %v2816 = vpop.f32.mrb[0].mxu0
    %2817 = vdwg.mxu0
    %v2818 = vsel %vm2066, %v2759, -inf
    %v2819 = vsel %vm2067, %v2762, -inf
    %v2820 = vsel %vm2066, %v2812, -inf
    %v2821 = vsel %vm2067, %v2815, -inf
    %v2822 = vsel %vm2072, %v2818, -inf
    %2823 = vmax.xlane.f32.xlu0 %v2822
    %v2824 = vpop.xlane.xlu0 %2823
    %v2825 = vsel %vm2072, %v2819, -inf
    %2826 = vmax.xlane.f32.xlu0 %v2825
    %v2827 = vpop.xlane.xlu0 %2826
    %v2828 = vsel %vm2072, %v2820, -inf
    %2829 = vmax.xlane.f32.xlu0 %v2828
    %v2830 = vpop.xlane.xlu0 %2829
    %v2831 = vsel %vm2072, %v2821, -inf
    %2832 = vmax.xlane.f32.xlu0 %v2831
    %v2833 = vpop.xlane.xlu0 %2832
    %v2834 = vsub.f32 %v2818, %v2824
    %v2835 = vsub.f32 %v2819, %v2827
    %v2836 = vsub.f32 %v2820, %v2830
    %v2837 = vsub.f32 %v2821, %v2833
    %v2838 = vmul.f32 %v2834, 1.442695
    %v2839 = vpow.pop %v2838
    %v2840 = vmul.f32 %v2835, 1.442695
    %v2841 = vpow.pop %v2840
    %v2842 = vmul.f32 %v2836, 1.442695
    %v2843 = vpow.pop %v2842
    %v2844 = vmul.f32 %v2837, 1.442695
    %v2845 = vpow.pop %v2844
    %v2846 = vsel %vm2072, %v2839, 0.0
    %2847 = vadd.xlane.f32.xlu0 %v2846
    %v2848 = vpop.xlane.xlu0 %2847
    %v2849 = vsel %vm2072, %v2841, 0.0
    %2850 = vadd.xlane.f32.xlu0 %v2849
    %v2851 = vpop.xlane.xlu0 %2850
    %v2852 = vsel %vm2072, %v2843, 0.0
    %2853 = vadd.xlane.f32.xlu0 %v2852
    %v2854 = vpop.xlane.xlu0 %2853
    %v2855 = vsel %vm2072, %v2845, 0.0
    %2856 = vadd.xlane.f32.xlu0 %v2855
    %v2857 = vpop.xlane.xlu0 %2856
    %v2858 = vrcp.pop %v2848
    %v2859 = vrcp.pop %v2851
    %v2860 = vrcp.pop %v2854
    %v2861 = vrcp.pop %v2857
    %v2862 = vmul.f32 %v2839, %v2858
    %v2863 = vmul.f32 %v2841, %v2859
    %v2864 = vmul.f32 %v2843, %v2860
    %v2865 = vmul.f32 %v2845, %v2861
    %v2866 = vpack.c.bf16 %v2863, %v2862
    %v2867 = vpack.c.bf16 %v2865, %v2864
    %2869 = vrot.lane.b32.xlu0 %v1951, 64
    %v2870 = vpop.permute.xlu0 %2869
    %v2873 = vsel %vm2072, %v2866, 0
    %2875 = vmatprep.subr.bf16.mxu0 0
    %2876 = vmatpush1.bf16.msra.mxu0 %v2870
    %2877 = vmatprep.subr.bf16.mxu0 0
    %2878 = vmatpush1.bf16.msra.mxu0 0
    %2879 = vmatprep.subr.bf16.mxu0 0
    %2880 = vmatpush1.bf16.msra.mxu0 0
    %2881 = vmatprep.subr.bf16.mxu0 0
    %2882 = vmatpush1.bf16.msra.mxu0 0
    %2883 = vmatprep.subr.bf16.mxu0 0
    %2884 = vmatpush1.bf16.msra.mxu0 0
    %2885 = vmatprep.subr.bf16.mxu0 0
    %2886 = vmatpush1.bf16.msra.mxu0 0
    %2887 = vmatprep.subr.bf16.mxu0 0
    %2888 = vmatpush1.bf16.msra.mxu0 0
    %2889 = vmatprep.subr.bf16.mxu0 0
    %2890 = vmatpush1.bf16.msra.mxu0 0
    %2891 = vmatprep.subr.bf16.mxu0 0
    %2892 = vmatpush1.bf16.msra.mxu0 0
    %2893 = vmatprep.subr.bf16.mxu0 0
    %2894 = vmatpush1.bf16.msra.mxu0 0
    %2895 = vmatprep.subr.bf16.mxu0 0
    %2896 = vmatpush1.bf16.msra.mxu0 0
    %2897 = vmatprep.subr.bf16.mxu0 0
    %2898 = vmatpush1.bf16.msra.mxu0 0
    %2899 = vmatprep.subr.bf16.mxu0 0
    %2900 = vmatpush1.bf16.msra.mxu0 0
    %2901 = vmatprep.subr.bf16.mxu0 0
    %2902 = vmatpush1.bf16.msra.mxu0 0
    %2903 = vmatprep.subr.bf16.mxu0 0
    %2904 = vmatpush1.bf16.msra.mxu0 0
    %2905 = vmatprep.subr.bf16.mxu0 0
    %2906 = vmatpush1.bf16.msra.mxu0 0
    %2907 = vmatprep.mubr.bf16.mxu0 0
    %2908 = vmatmul.mubr.bf16.gmra.mrb[0].mxu0 %v2873
    %v2909 = vpop.f32.mrb[0].mxu0
    %v2910 = vadd.f32 0.0, %v2909
    %v2911 = vpop.f32.mrb[0].mxu0
    %v2912 = vpop.f32.mrb[0].mxu0
    %v2913 = vadd.f32 0.0, %v2912
    %v2914 = vpop.f32.mrb[0].mxu0
    %2915 = vdwg.mxu0
    %2917 = vrot.lane.b32.xlu0 %v1960, 64
    %v2918 = vpop.permute.xlu0 %2917
    %v2921 = vsel %vm2072, %v2867, 0
    %2923 = vmatprep.subr.bf16.mxu0 0
    %2924 = vmatpush1.bf16.msra.mxu0 %v2918
    %2925 = vmatprep.subr.bf16.mxu0 0
    %2926 = vmatpush1.bf16.msra.mxu0 0
    %2927 = vmatprep.subr.bf16.mxu0 0
    %2928 = vmatpush1.bf16.msra.mxu0 0
    %2929 = vmatprep.subr.bf16.mxu0 0
    %2930 = vmatpush1.bf16.msra.mxu0 0
    %2931 = vmatprep.subr.bf16.mxu0 0
    %2932 = vmatpush1.bf16.msra.mxu0 0
    %2933 = vmatprep.subr.bf16.mxu0 0
    %2934 = vmatpush1.bf16.msra.mxu0 0
    %2935 = vmatprep.subr.bf16.mxu0 0
    %2936 = vmatpush1.bf16.msra.mxu0 0
    %2937 = vmatprep.subr.bf16.mxu0 0
    %2938 = vmatpush1.bf16.msra.mxu0 0
    %2939 = vmatprep.subr.bf16.mxu0 0
    %2940 = vmatpush1.bf16.msra.mxu0 0
    %2941 = vmatprep.subr.bf16.mxu0 0
    %2942 = vmatpush1.bf16.msra.mxu0 0
    %2943 = vmatprep.subr.bf16.mxu0 0
    %2944 = vmatpush1.bf16.msra.mxu0 0
    %2945 = vmatprep.subr.bf16.mxu0 0
    %2946 = vmatpush1.bf16.msra.mxu0 0
    %2947 = vmatprep.subr.bf16.mxu0 0
    %2948 = vmatpush1.bf16.msra.mxu0 0
    %2949 = vmatprep.subr.bf16.mxu0 0
    %2950 = vmatpush1.bf16.msra.mxu0 0
    %2951 = vmatprep.subr.bf16.mxu0 0
    %2952 = vmatpush1.bf16.msra.mxu0 0
    %2953 = vmatprep.subr.bf16.mxu0 0
    %2954 = vmatpush1.bf16.msra.mxu0 0
    %2955 = vmatprep.mubr.bf16.mxu0 0
    %2956 = vmatmul.mubr.bf16.gmra.mrb[0].mxu0 %v2921
    %v2957 = vpop.f32.mrb[0].mxu0
    %v2958 = vadd.f32 0.0, %v2957
    %v2959 = vpop.f32.mrb[0].mxu0
    %v2960 = vpop.f32.mrb[0].mxu0
    %v2961 = vadd.f32 0.0, %v2960
    %v2962 = vpop.f32.mrb[0].mxu0
    %2963 = vdwg.mxu0
    %v2964 = vpack.c.bf16 %v2913, %v2910
    %v2965 = vpack.c.bf16 %v2961, %v2958
    %2968 = vrot.lane.b32.xlu0 %v2964, 64
    %v2969 = vpop.permute.xlu0 %2968
    %2970 = vrot.lane.b32.xlu0 %v2965, 64
    %v2971 = vpop.permute.xlu0 %2970
    %2974 = vst.msk [vmem:[#allocation2 + $0x8] sm:$0xff] %vm2473, %v2969
    %2975 = vst.msk [vmem:[#allocation2 + $0x20] sm:$0xff] %vm2473, %v2971
    %v2977 = vsel %vm1969, %v1946, 0
    %v2980 = vsel %vm1969, %v1949, 0
    %2982 = vmatprep.subr.bf16.mxu0 0
    %2983 = vmatpush1.bf16.xpose.msra.mxu0 %v2980
    %2984 = vmatprep.subr.bf16.mxu0 0
    %2985 = vmatpush1.bf16.xpose.msra.mxu0 0
    %2986 = vmatprep.subr.bf16.mxu0 0
    %2987 = vmatpush1.bf16.xpose.msra.mxu0 0
    %2988 = vmatprep.subr.bf16.mxu0 0
    %2989 = vmatpush1.bf16.xpose.msra.mxu0 0
    %2990 = vmatprep.subr.bf16.mxu0 0
    %2991 = vmatpush1.bf16.xpose.msra.mxu0 0
    %2992 = vmatprep.subr.bf16.mxu0 0
    %2993 = vmatpush1.bf16.xpose.msra.mxu0 0
    %2994 = vmatprep.subr.bf16.mxu0 0
    %2995 = vmatpush1.bf16.xpose.msra.mxu0 0
    %2996 = vmatprep.subr.bf16.mxu0 0
    %2997 = vmatpush1.bf16.xpose.msra.mxu0 0
    %2998 = vmatprep.subr.bf16.mxu0 0
    %2999 = vmatpush1.bf16.xpose.msra.mxu0 0
    %3000 = vmatprep.subr.bf16.mxu0 0
    %3001 = vmatpush1.bf16.xpose.msra.mxu0 0
    %3002 = vmatprep.subr.bf16.mxu0 0
    %3003 = vmatpush1.bf16.xpose.msra.mxu0 0
    %3004 = vmatprep.subr.bf16.mxu0 0
    %3005 = vmatpush1.bf16.xpose.msra.mxu0 0
    %3006 = vmatprep.subr.bf16.mxu0 0
    %3007 = vmatpush1.bf16.xpose.msra.mxu0 0
    %3008 = vmatprep.subr.bf16.mxu0 0
    %3009 = vmatpush1.bf16.xpose.msra.mxu0 0
    %3010 = vmatprep.subr.bf16.mxu0 0
    %3011 = vmatpush1.bf16.xpose.msra.mxu0 0
    %3012 = vmatprep.subr.bf16.mxu0 0
    %3013 = vmatpush1.bf16.xpose.msra.mxu0 0
    %3014 = vmatprep.mubr.bf16.mxu0 0
    %3015 = vmatmul.mubr.bf16.gmra.mrb[0].mxu0 %v2977
    %v3016 = vpop.f32.mrb[0].mxu0
    %v3017 = vadd.f32 0.0, %v3016
    %v3018 = vpop.f32.mrb[0].mxu0
    %v3019 = vpop.f32.mrb[0].mxu0
    %v3020 = vadd.f32 0.0, %v3019
    %v3021 = vpop.f32.mrb[0].mxu0
    %3022 = vdwg.mxu0
    %v3024 = vsel %vm1969, %v1955, 0
    %v3027 = vsel %vm1969, %v1958, 0
    %3029 = vmatprep.subr.bf16.mxu0 0
    %3030 = vmatpush1.bf16.xpose.msra.mxu0 %v3027
    %3031 = vmatprep.subr.bf16.mxu0 0
    %3032 = vmatpush1.bf16.xpose.msra.mxu0 0
    %3033 = vmatprep.subr.bf16.mxu0 0
    %3034 = vmatpush1.bf16.xpose.msra.mxu0 0
    %3035 = vmatprep.subr.bf16.mxu0 0
    %3036 = vmatpush1.bf16.xpose.msra.mxu0 0
    %3037 = vmatprep.subr.bf16.mxu0 0
    %3038 = vmatpush1.bf16.xpose.msra.mxu0 0
    %3039 = vmatprep.subr.bf16.mxu0 0
    %3040 = vmatpush1.bf16.xpose.msra.mxu0 0
    %3041 = vmatprep.subr.bf16.mxu0 0
    %3042 = vmatpush1.bf16.xpose.msra.mxu0 0
    %3043 = vmatprep.subr.bf16.mxu0 0
    %3044 = vmatpush1.bf16.xpose.msra.mxu0 0
    %3045 = vmatprep.subr.bf16.mxu0 0
    %3046 = vmatpush1.bf16.xpose.msra.mxu0 0
    %3047 = vmatprep.subr.bf16.mxu0 0
    %3048 = vmatpush1.bf16.xpose.msra.mxu0 0
    %3049 = vmatprep.subr.bf16.mxu0 0
    %3050 = vmatpush1.bf16.xpose.msra.mxu0 0
    %3051 = vmatprep.subr.bf16.mxu0 0
    %3052 = vmatpush1.bf16.xpose.msra.mxu0 0
    %3053 = vmatprep.subr.bf16.mxu0 0
    %3054 = vmatpush1.bf16.xpose.msra.mxu0 0
    %3055 = vmatprep.subr.bf16.mxu0 0
    %3056 = vmatpush1.bf16.xpose.msra.mxu0 0
    %3057 = vmatprep.subr.bf16.mxu0 0
    %3058 = vmatpush1.bf16.xpose.msra.mxu0 0
    %3059 = vmatprep.subr.bf16.mxu0 0
    %3060 = vmatpush1.bf16.xpose.msra.mxu0 0
    %3061 = vmatprep.mubr.bf16.mxu0 0
    %3062 = vmatmul.mubr.bf16.gmra.mrb[0].mxu0 %v3024
    %v3063 = vpop.f32.mrb[0].mxu0
    %v3064 = vadd.f32 0.0, %v3063
    %v3065 = vpop.f32.mrb[0].mxu0
    %v3066 = vpop.f32.mrb[0].mxu0
    %v3067 = vadd.f32 0.0, %v3066
    %v3068 = vpop.f32.mrb[0].mxu0
    %3069 = vdwg.mxu0
    %v3070 = vsel %vm2066, %v3017, -inf
    %v3071 = vsel %vm2067, %v3020, -inf
    %v3072 = vsel %vm2066, %v3064, -inf
    %v3073 = vsel %vm2067, %v3067, -inf
    %v3074 = vsel %vm2072, %v3070, -inf
    %3075 = vmax.xlane.f32.xlu0 %v3074
    %v3076 = vpop.xlane.xlu0 %3075
    %v3077 = vsel %vm2072, %v3071, -inf
    %3078 = vmax.xlane.f32.xlu0 %v3077
    %v3079 = vpop.xlane.xlu0 %3078
    %v3080 = vsel %vm2072, %v3072, -inf
    %3081 = vmax.xlane.f32.xlu0 %v3080
    %v3082 = vpop.xlane.xlu0 %3081
    %v3083 = vsel %vm2072, %v3073, -inf
    %3084 = vmax.xlane.f32.xlu0 %v3083
    %v3085 = vpop.xlane.xlu0 %3084
    %v3086 = vsub.f32 %v3070, %v3076
    %v3087 = vsub.f32 %v3071, %v3079
    %v3088 = vsub.f32 %v3072, %v3082
    %v3089 = vsub.f32 %v3073, %v3085
    %v3090 = vmul.f32 %v3086, 1.442695
    %v3091 = vpow.pop %v3090
    %v3092 = vmul.f32 %v3087, 1.442695
    %v3093 = vpow.pop %v3092
    %v3094 = vmul.f32 %v3088, 1.442695
    %v3095 = vpow.pop %v3094
    %v3096 = vmul.f32 %v3089, 1.442695
    %v3097 = vpow.pop %v3096
    %v3098 = vsel %vm2072, %v3091, 0.0
    %3099 = vadd.xlane.f32.xlu0 %v3098
    %v3100 = vpop.xlane.xlu0 %3099
    %v3101 = vsel %vm2072, %v3093, 0.0
    %3102 = vadd.xlane.f32.xlu0 %v3101
    %v3103 = vpop.xlane.xlu0 %3102
    %v3104 = vsel %vm2072, %v3095, 0.0
    %3105 = vadd.xlane.f32.xlu0 %v3104
    %v3106 = vpop.xlane.xlu0 %3105
    %v3107 = vsel %vm2072, %v3097, 0.0
    %3108 = vadd.xlane.f32.xlu0 %v3107
    %v3109 = vpop.xlane.xlu0 %3108
    %v3110 = vrcp.pop %v3100
    %v3111 = vrcp.pop %v3103
    %v3112 = vrcp.pop %v3106
    %v3113 = vrcp.pop %v3109
    %v3114 = vmul.f32 %v3091, %v3110
    %v3115 = vmul.f32 %v3093, %v3111
    %v3116 = vmul.f32 %v3095, %v3112
    %v3117 = vmul.f32 %v3097, %v3113
    %v3118 = vpack.c.bf16 %v3115, %v3114
    %v3119 = vpack.c.bf16 %v3117, %v3116
    %v3121 = vsel %vm2072, %v3118, 0
    %3123 = vmatprep.subr.bf16.mxu0 0
    %3124 = vmatpush1.bf16.msra.mxu0 %v1952
    %3125 = vmatprep.subr.bf16.mxu0 0
    %3126 = vmatpush1.bf16.msra.mxu0 0
    %3127 = vmatprep.subr.bf16.mxu0 0
    %3128 = vmatpush1.bf16.msra.mxu0 0
    %3129 = vmatprep.subr.bf16.mxu0 0
    %3130 = vmatpush1.bf16.msra.mxu0 0
    %3131 = vmatprep.subr.bf16.mxu0 0
    %3132 = vmatpush1.bf16.msra.mxu0 0
    %3133 = vmatprep.subr.bf16.mxu0 0
    %3134 = vmatpush1.bf16.msra.mxu0 0
    %3135 = vmatprep.subr.bf16.mxu0 0
    %3136 = vmatpush1.bf16.msra.mxu0 0
    %3137 = vmatprep.subr.bf16.mxu0 0
    %3138 = vmatpush1.bf16.msra.mxu0 0
    %3139 = vmatprep.subr.bf16.mxu0 0
    %3140 = vmatpush1.bf16.msra.mxu0 0
    %3141 = vmatprep.subr.bf16.mxu0 0
    %3142 = vmatpush1.bf16.msra.mxu0 0
    %3143 = vmatprep.subr.bf16.mxu0 0
    %3144 = vmatpush1.bf16.msra.mxu0 0
    %3145 = vmatprep.subr.bf16.mxu0 0
    %3146 = vmatpush1.bf16.msra.mxu0 0
    %3147 = vmatprep.subr.bf16.mxu0 0
    %3148 = vmatpush1.bf16.msra.mxu0 0
    %3149 = vmatprep.subr.bf16.mxu0 0
    %3150 = vmatpush1.bf16.msra.mxu0 0
    %3151 = vmatprep.subr.bf16.mxu0 0
    %3152 = vmatpush1.bf16.msra.mxu0 0
    %3153 = vmatprep.subr.bf16.mxu0 0
    %3154 = vmatpush1.bf16.msra.mxu0 0
    %3155 = vmatprep.mubr.bf16.mxu0 0
    %3156 = vmatmul.mubr.bf16.gmra.mrb[0].mxu0 %v3121
    %v3157 = vpop.f32.mrb[0].mxu0
    %v3158 = vadd.f32 0.0, %v3157
    %v3159 = vpop.f32.mrb[0].mxu0
    %v3160 = vpop.f32.mrb[0].mxu0
    %v3161 = vadd.f32 0.0, %v3160
    %v3162 = vpop.f32.mrb[0].mxu0
    %3163 = vdwg.mxu0
    %v3165 = vsel %vm2072, %v3119, 0
    %3167 = vmatprep.subr.bf16.mxu0 0
    %3168 = vmatpush1.bf16.msra.mxu0 %v1961
    %3169 = vmatprep.subr.bf16.mxu0 0
    %3170 = vmatpush1.bf16.msra.mxu0 0
    %3171 = vmatprep.subr.bf16.mxu0 0
    %3172 = vmatpush1.bf16.msra.mxu0 0
    %3173 = vmatprep.subr.bf16.mxu0 0
    %3174 = vmatpush1.bf16.msra.mxu0 0
    %3175 = vmatprep.subr.bf16.mxu0 0
    %3176 = vmatpush1.bf16.msra.mxu0 0
    %3177 = vmatprep.subr.bf16.mxu0 0
    %3178 = vmatpush1.bf16.msra.mxu0 0
    %3179 = vmatprep.subr.bf16.mxu0 0
    %3180 = vmatpush1.bf16.msra.mxu0 0
    %3181 = vmatprep.subr.bf16.mxu0 0
    %3182 = vmatpush1.bf16.msra.mxu0 0
    %3183 = vmatprep.subr.bf16.mxu0 0
    %3184 = vmatpush1.bf16.msra.mxu0 0
    %3185 = vmatprep.subr.bf16.mxu0 0
    %3186 = vmatpush1.bf16.msra.mxu0 0
    %3187 = vmatprep.subr.bf16.mxu0 0
    %3188 = vmatpush1.bf16.msra.mxu0 0
    %3189 = vmatprep.subr.bf16.mxu0 0
    %3190 = vmatpush1.bf16.msra.mxu0 0
    %3191 = vmatprep.subr.bf16.mxu0 0
    %3192 = vmatpush1.bf16.msra.mxu0 0
    %3193 = vmatprep.subr.bf16.mxu0 0
    %3194 = vmatpush1.bf16.msra.mxu0 0
    %3195 = vmatprep.subr.bf16.mxu0 0
    %3196 = vmatpush1.bf16.msra.mxu0 0
    %3197 = vmatprep.subr.bf16.mxu0 0
    %3198 = vmatpush1.bf16.msra.mxu0 0
    %3199 = vmatprep.mubr.bf16.mxu0 0
    %3200 = vmatmul.mubr.bf16.gmra.mrb[0].mxu0 %v3165
    %v3201 = vpop.f32.mrb[0].mxu0
    %v3202 = vadd.f32 0.0, %v3201
    %v3203 = vpop.f32.mrb[0].mxu0
    %v3204 = vpop.f32.mrb[0].mxu0
    %v3205 = vadd.f32 0.0, %v3204
    %v3206 = vpop.f32.mrb[0].mxu0
    %3207 = vdwg.mxu0
    %v3208 = vpack.c.bf16 %v3161, %v3158
    %v3209 = vpack.c.bf16 %v3205, %v3202
    %3210 = vst.msk [vmem:[#allocation2 + $0x10] sm:$0xff] %vm1969, %v3208
    %3211 = vst.msk [vmem:[#allocation2 + $0x28] sm:$0xff] %vm1969, %v3209
    %3213 = vrot.lane.b32.xlu0 %v1946, 64
    %v3214 = vpop.permute.xlu0 %3213
    %3216 = vrot.lane.b32.xlu0 %v1949, 64
    %v3217 = vpop.permute.xlu0 %3216
    %v3219 = vsel %vm1969, %v3214, 0
    %v3222 = vsel %vm1969, %v3217, 0
    %3224 = vmatprep.subr.bf16.mxu0 0
    %3225 = vmatpush1.bf16.xpose.msra.mxu0 %v3222
    %3226 = vmatprep.subr.bf16.mxu0 0
    %3227 = vmatpush1.bf16.xpose.msra.mxu0 0
    %3228 = vmatprep.subr.bf16.mxu0 0
    %3229 = vmatpush1.bf16.xpose.msra.mxu0 0
    %3230 = vmatprep.subr.bf16.mxu0 0
    %3231 = vmatpush1.bf16.xpose.msra.mxu0 0
    %3232 = vmatprep.subr.bf16.mxu0 0
    %3233 = vmatpush1.bf16.xpose.msra.mxu0 0
    %3234 = vmatprep.subr.bf16.mxu0 0
    %3235 = vmatpush1.bf16.xpose.msra.mxu0 0
    %3236 = vmatprep.subr.bf16.mxu0 0
    %3237 = vmatpush1.bf16.xpose.msra.mxu0 0
    %3238 = vmatprep.subr.bf16.mxu0 0
    %3239 = vmatpush1.bf16.xpose.msra.mxu0 0
    %3240 = vmatprep.subr.bf16.mxu0 0
    %3241 = vmatpush1.bf16.xpose.msra.mxu0 0
    %3242 = vmatprep.subr.bf16.mxu0 0
    %3243 = vmatpush1.bf16.xpose.msra.mxu0 0
    %3244 = vmatprep.subr.bf16.mxu0 0
    %3245 = vmatpush1.bf16.xpose.msra.mxu0 0
    %3246 = vmatprep.subr.bf16.mxu0 0
    %3247 = vmatpush1.bf16.xpose.msra.mxu0 0
    %3248 = vmatprep.subr.bf16.mxu0 0
    %3249 = vmatpush1.bf16.xpose.msra.mxu0 0
    %3250 = vmatprep.subr.bf16.mxu0 0
    %3251 = vmatpush1.bf16.xpose.msra.mxu0 0
    %3252 = vmatprep.subr.bf16.mxu0 0
    %3253 = vmatpush1.bf16.xpose.msra.mxu0 0
    %3254 = vmatprep.subr.bf16.mxu0 0
    %3255 = vmatpush1.bf16.xpose.msra.mxu0 0
    %3256 = vmatprep.mubr.bf16.mxu0 0
    %3257 = vmatmul.mubr.bf16.gmra.mrb[0].mxu0 %v3219
    %v3258 = vpop.f32.mrb[0].mxu0
    %v3259 = vadd.f32 0.0, %v3258
    %v3260 = vpop.f32.mrb[0].mxu0
    %v3261 = vpop.f32.mrb[0].mxu0
    %v3262 = vadd.f32 0.0, %v3261
    %v3263 = vpop.f32.mrb[0].mxu0
    %3264 = vdwg.mxu0
    %3266 = vrot.lane.b32.xlu0 %v1955, 64
    %v3267 = vpop.permute.xlu0 %3266
    %3269 = vrot.lane.b32.xlu0 %v1958, 64
    %v3270 = vpop.permute.xlu0 %3269
    %v3272 = vsel %vm1969, %v3267, 0
    %v3275 = vsel %vm1969, %v3270, 0
    %3277 = vmatprep.subr.bf16.mxu0 0
    %3278 = vmatpush1.bf16.xpose.msra.mxu0 %v3275
    %3279 = vmatprep.subr.bf16.mxu0 0
    %3280 = vmatpush1.bf16.xpose.msra.mxu0 0
    %3281 = vmatprep.subr.bf16.mxu0 0
    %3282 = vmatpush1.bf16.xpose.msra.mxu0 0
    %3283 = vmatprep.subr.bf16.mxu0 0
    %3284 = vmatpush1.bf16.xpose.msra.mxu0 0
    %3285 = vmatprep.subr.bf16.mxu0 0
    %3286 = vmatpush1.bf16.xpose.msra.mxu0 0
    %3287 = vmatprep.subr.bf16.mxu0 0
    %3288 = vmatpush1.bf16.xpose.msra.mxu0 0
    %3289 = vmatprep.subr.bf16.mxu0 0
    %3290 = vmatpush1.bf16.xpose.msra.mxu0 0
    %3291 = vmatprep.subr.bf16.mxu0 0
    %3292 = vmatpush1.bf16.xpose.msra.mxu0 0
    %3293 = vmatprep.subr.bf16.mxu0 0
    %3294 = vmatpush1.bf16.xpose.msra.mxu0 0
    %3295 = vmatprep.subr.bf16.mxu0 0
    %3296 = vmatpush1.bf16.xpose.msra.mxu0 0
    %3297 = vmatprep.subr.bf16.mxu0 0
    %3298 = vmatpush1.bf16.xpose.msra.mxu0 0
    %3299 = vmatprep.subr.bf16.mxu0 0
    %3300 = vmatpush1.bf16.xpose.msra.mxu0 0
    %3301 = vmatprep.subr.bf16.mxu0 0
    %3302 = vmatpush1.bf16.xpose.msra.mxu0 0
    %3303 = vmatprep.subr.bf16.mxu0 0
    %3304 = vmatpush1.bf16.xpose.msra.mxu0 0
    %3305 = vmatprep.subr.bf16.mxu0 0
    %3306 = vmatpush1.bf16.xpose.msra.mxu0 0
    %3307 = vmatprep.subr.bf16.mxu0 0
    %3308 = vmatpush1.bf16.xpose.msra.mxu0 0
    %3309 = vmatprep.mubr.bf16.mxu0 0
    %3310 = vmatmul.mubr.bf16.gmra.mrb[0].mxu0 %v3272
    %v3311 = vpop.f32.mrb[0].mxu0
    %v3312 = vadd.f32 0.0, %v3311
    %v3313 = vpop.f32.mrb[0].mxu0
    %v3314 = vpop.f32.mrb[0].mxu0
    %v3315 = vadd.f32 0.0, %v3314
    %v3316 = vpop.f32.mrb[0].mxu0
    %3317 = vdwg.mxu0
    %v3318 = vsel %vm2066, %v3259, -inf
    %v3319 = vsel %vm2067, %v3262, -inf
    %v3320 = vsel %vm2066, %v3312, -inf
    %v3321 = vsel %vm2067, %v3315, -inf
    %v3322 = vsel %vm2072, %v3318, -inf
    %3323 = vmax.xlane.f32.xlu0 %v3322
    %v3324 = vpop.xlane.xlu0 %3323
    %v3325 = vsel %vm2072, %v3319, -inf
    %3326 = vmax.xlane.f32.xlu0 %v3325
    %v3327 = vpop.xlane.xlu0 %3326
    %v3328 = vsel %vm2072, %v3320, -inf
    %3329 = vmax.xlane.f32.xlu0 %v3328
    %v3330 = vpop.xlane.xlu0 %3329
    %v3331 = vsel %vm2072, %v3321, -inf
    %3332 = vmax.xlane.f32.xlu0 %v3331
    %v3333 = vpop.xlane.xlu0 %3332
    %v3334 = vsub.f32 %v3318, %v3324
    %v3335 = vsub.f32 %v3319, %v3327
    %v3336 = vsub.f32 %v3320, %v3330
    %v3337 = vsub.f32 %v3321, %v3333
    %v3338 = vmul.f32 %v3334, 1.442695
    %v3339 = vpow.pop %v3338
    %v3340 = vmul.f32 %v3335, 1.442695
    %v3341 = vpow.pop %v3340
    %v3342 = vmul.f32 %v3336, 1.442695
    %v3343 = vpow.pop %v3342
    %v3344 = vmul.f32 %v3337, 1.442695
    %v3345 = vpow.pop %v3344
    %v3346 = vsel %vm2072, %v3339, 0.0
    %3347 = vadd.xlane.f32.xlu0 %v3346
    %v3348 = vpop.xlane.xlu0 %3347
    %v3349 = vsel %vm2072, %v3341, 0.0
    %3350 = vadd.xlane.f32.xlu0 %v3349
    %v3351 = vpop.xlane.xlu0 %3350
    %v3352 = vsel %vm2072, %v3343, 0.0
    %3353 = vadd.xlane.f32.xlu0 %v3352
    %v3354 = vpop.xlane.xlu0 %3353
    %v3355 = vsel %vm2072, %v3345, 0.0
    %3356 = vadd.xlane.f32.xlu0 %v3355
    %v3357 = vpop.xlane.xlu0 %3356
    %v3358 = vrcp.pop %v3348
    %v3359 = vrcp.pop %v3351
    %v3360 = vrcp.pop %v3354
    %v3361 = vrcp.pop %v3357
    %v3362 = vmul.f32 %v3339, %v3358
    %v3363 = vmul.f32 %v3341, %v3359
    %v3364 = vmul.f32 %v3343, %v3360
    %v3365 = vmul.f32 %v3345, %v3361
    %v3366 = vpack.c.bf16 %v3363, %v3362
    %v3367 = vpack.c.bf16 %v3365, %v3364
    %3369 = vrot.lane.b32.xlu0 %v1952, 64
    %v3370 = vpop.permute.xlu0 %3369
    %v3373 = vsel %vm2072, %v3366, 0
    %3375 = vmatprep.subr.bf16.mxu0 0
    %3376 = vmatpush1.bf16.msra.mxu0 %v3370
    %3377 = vmatprep.subr.bf16.mxu0 0
    %3378 = vmatpush1.bf16.msra.mxu0 0
    %3379 = vmatprep.subr.bf16.mxu0 0
    %3380 = vmatpush1.bf16.msra.mxu0 0
    %3381 = vmatprep.subr.bf16.mxu0 0
    %3382 = vmatpush1.bf16.msra.mxu0 0
    %3383 = vmatprep.subr.bf16.mxu0 0
    %3384 = vmatpush1.bf16.msra.mxu0 0
    %3385 = vmatprep.subr.bf16.mxu0 0
    %3386 = vmatpush1.bf16.msra.mxu0 0
    %3387 = vmatprep.subr.bf16.mxu0 0
    %3388 = vmatpush1.bf16.msra.mxu0 0
    %3389 = vmatprep.subr.bf16.mxu0 0
    %3390 = vmatpush1.bf16.msra.mxu0 0
    %3391 = vmatprep.subr.bf16.mxu0 0
    %3392 = vmatpush1.bf16.msra.mxu0 0
    %3393 = vmatprep.subr.bf16.mxu0 0
    %3394 = vmatpush1.bf16.msra.mxu0 0
    %3395 = vmatprep.subr.bf16.mxu0 0
    %3396 = vmatpush1.bf16.msra.mxu0 0
    %3397 = vmatprep.subr.bf16.mxu0 0
    %3398 = vmatpush1.bf16.msra.mxu0 0
    %3399 = vmatprep.subr.bf16.mxu0 0
    %3400 = vmatpush1.bf16.msra.mxu0 0
    %3401 = vmatprep.subr.bf16.mxu0 0
    %3402 = vmatpush1.bf16.msra.mxu0 0
    %3403 = vmatprep.subr.bf16.mxu0 0
    %3404 = vmatpush1.bf16.msra.mxu0 0
    %3405 = vmatprep.subr.bf16.mxu0 0
    %3406 = vmatpush1.bf16.msra.mxu0 0
    %3407 = vmatprep.mubr.bf16.mxu0 0
    %3408 = vmatmul.mubr.bf16.gmra.mrb[0].mxu0 %v3373
    %v3409 = vpop.f32.mrb[0].mxu0
    %v3410 = vadd.f32 0.0, %v3409
    %v3411 = vpop.f32.mrb[0].mxu0
    %v3412 = vpop.f32.mrb[0].mxu0
    %v3413 = vadd.f32 0.0, %v3412
    %v3414 = vpop.f32.mrb[0].mxu0
    %3415 = vdwg.mxu0
    %3417 = vrot.lane.b32.xlu0 %v1961, 64
    %v3418 = vpop.permute.xlu0 %3417
    %v3421 = vsel %vm2072, %v3367, 0
    %3423 = vmatprep.subr.bf16.mxu0 0
    %3424 = vmatpush1.bf16.msra.mxu0 %v3418
    %3425 = vmatprep.subr.bf16.mxu0 0
    %3426 = vmatpush1.bf16.msra.mxu0 0
    %3427 = vmatprep.subr.bf16.mxu0 0
    %3428 = vmatpush1.bf16.msra.mxu0 0
    %3429 = vmatprep.subr.bf16.mxu0 0
    %3430 = vmatpush1.bf16.msra.mxu0 0
    %3431 = vmatprep.subr.bf16.mxu0 0
    %3432 = vmatpush1.bf16.msra.mxu0 0
    %3433 = vmatprep.subr.bf16.mxu0 0
    %3434 = vmatpush1.bf16.msra.mxu0 0
    %3435 = vmatprep.subr.bf16.mxu0 0
    %3436 = vmatpush1.bf16.msra.mxu0 0
    %3437 = vmatprep.subr.bf16.mxu0 0
    %3438 = vmatpush1.bf16.msra.mxu0 0
    %3439 = vmatprep.subr.bf16.mxu0 0
    %3440 = vmatpush1.bf16.msra.mxu0 0
    %3441 = vmatprep.subr.bf16.mxu0 0
    %3442 = vmatpush1.bf16.msra.mxu0 0
    %3443 = vmatprep.subr.bf16.mxu0 0
    %3444 = vmatpush1.bf16.msra.mxu0 0
    %3445 = vmatprep.subr.bf16.mxu0 0
    %3446 = vmatpush1.bf16.msra.mxu0 0
    %3447 = vmatprep.subr.bf16.mxu0 0
    %3448 = vmatpush1.bf16.msra.mxu0 0
    %3449 = vmatprep.subr.bf16.mxu0 0
    %3450 = vmatpush1.bf16.msra.mxu0 0
    %3451 = vmatprep.subr.bf16.mxu0 0
    %3452 = vmatpush1.bf16.msra.mxu0 0
    %3453 = vmatprep.subr.bf16.mxu0 0
    %3454 = vmatpush1.bf16.msra.mxu0 0
    %3455 = vmatprep.mubr.bf16.mxu0 0
    %3456 = vmatmul.mubr.bf16.gmra.mrb[0].mxu0 %v3421
    %v3457 = vpop.f32.mrb[0].mxu0
    %v3458 = vadd.f32 0.0, %v3457
    %v3459 = vpop.f32.mrb[0].mxu0
    %v3460 = vpop.f32.mrb[0].mxu0
    %v3461 = vadd.f32 0.0, %v3460
    %v3462 = vpop.f32.mrb[0].mxu0
    %3463 = vdwg.mxu0
    %v3464 = vpack.c.bf16 %v3413, %v3410
    %v3465 = vpack.c.bf16 %v3461, %v3458
    %3468 = vrot.lane.b32.xlu0 %v3464, 64
    %v3469 = vpop.permute.xlu0 %3468
    %3470 = vrot.lane.b32.xlu0 %v3465, 64
    %v3471 = vpop.permute.xlu0 %3470
    %3474 = vst.msk [vmem:[#allocation2 + $0x10] sm:$0xff] %vm2473, %v3469
    %3475 = vst.msk [vmem:[#allocation2 + $0x28] sm:$0xff] %vm2473, %v3471
    %v3476 = vld [vmem:[#allocation2] sm:$0xff]
    %v3477 = vld [vmem:[#allocation2 + $0x8] sm:$0xff]
    %v3478 = vld [vmem:[#allocation2 + $0x10] sm:$0xff]
    %v3479 = vld [vmem:[#allocation2 + $0x18] sm:$0xff]
    %v3480 = vld [vmem:[#allocation2 + $0x20] sm:$0xff]
    %v3481 = vld [vmem:[#allocation2 + $0x28] sm:$0xff]
    %v3482 = vld [vmem:[#allocation8] sm:$0xff]
    %v3483 = vld [vmem:[#allocation8 + $0x8] sm:$0xf]
    %v3484 = vld [vmem:[#allocation8 + $0xc] sm:$0xff]
    %v3485 = vld [vmem:[#allocation8 + $0x14] sm:$0xf]
    %v3486 = vld [vmem:[#allocation8 + $0x18] sm:$0xff]
    %v3487 = vld [vmem:[#allocation8 + $0x20] sm:$0xf]
    %v3488 = vld [vmem:[#allocation8 + $0x24] sm:$0xff]
    %v3489 = vld [vmem:[#allocation8 + $0x2c] sm:$0xf]
    %v3490 = vld [vmem:[#allocation8 + $0x30] sm:$0xff]
    %v3491 = vld [vmem:[#allocation8 + $0x38] sm:$0xf]
    %v3492 = vld [vmem:[#allocation8 + $0x3c] sm:$0xff]
    %v3493 = vld [vmem:[#allocation8 + $0x44] sm:$0xf]
    %v3494 = vld [vmem:[#allocation8 + $0x48] sm:$0xff]
    %v3495 = vld [vmem:[#allocation8 + $0x50] sm:$0xf]
    %v3496 = vld [vmem:[#allocation8 + $0x54] sm:$0xff]
    %v3497 = vld [vmem:[#allocation8 + $0x5c] sm:$0xf]
    %v3498 = vld [vmem:[#allocation8 + $0x60] sm:$0xff]
    %v3499 = vld [vmem:[#allocation8 + $0x68] sm:$0xf]
    %v3500 = vld [vmem:[#allocation8 + $0x6c] sm:$0xff]
    %v3501 = vld [vmem:[#allocation8 + $0x74] sm:$0xf]
    %v3502 = vld [vmem:[#allocation8 + $0x78] sm:$0xff]
    %v3503 = vld [vmem:[#allocation8 + $0x80] sm:$0xf]
    %v3504 = vld [vmem:[#allocation8 + $0x84] sm:$0xff]
    %v3505 = vld [vmem:[#allocation8 + $0x8c] sm:$0xf]
    %v3506 = vld [vmem:[#allocation8 + $0x90] sm:$0xff]
    %v3507 = vld [vmem:[#allocation8 + $0x98] sm:$0xf]
    %v3508 = vld [vmem:[#allocation8 + $0x9c] sm:$0xff]
    %v3509 = vld [vmem:[#allocation8 + $0xa4] sm:$0xf]
    %v3510 = vld [vmem:[#allocation8 + $0xa8] sm:$0xff]
    %v3511 = vld [vmem:[#allocation8 + $0xb0] sm:$0xf]
    %v3512 = vld [vmem:[#allocation8 + $0xb4] sm:$0xff]
    %v3513 = vld [vmem:[#allocation8 + $0xbc] sm:$0xf]
    %v3514 = vld [vmem:[#allocation8 + $0xc0] sm:$0xff]
    %v3515 = vld [vmem:[#allocation8 + $0xc8] sm:$0xf]
    %v3516 = vld [vmem:[#allocation8 + $0xcc] sm:$0xff]
    %v3517 = vld [vmem:[#allocation8 + $0xd4] sm:$0xf]
    %v3518 = vld [vmem:[#allocation8 + $0xd8] sm:$0xff]
    %v3519 = vld [vmem:[#allocation8 + $0xe0] sm:$0xf]
    %v3520 = vld [vmem:[#allocation8 + $0xe4] sm:$0xff]
    %v3521 = vld [vmem:[#allocation8 + $0xec] sm:$0xf]
    %v3522 = vld [vmem:[#allocation8 + $0xf0] sm:$0xff]
    %v3523 = vld [vmem:[#allocation8 + $0xf8] sm:$0xf]
    %v3524 = vld [vmem:[#allocation8 + $0xfc] sm:$0xff]
    %v3525 = vld [vmem:[#allocation8 + $0x104] sm:$0xf]
    %v3526 = vld [vmem:[#allocation8 + $0x108] sm:$0xff]
    %v3527 = vld [vmem:[#allocation8 + $0x110] sm:$0xf]
    %v3528 = vld [vmem:[#allocation8 + $0x114] sm:$0xff]
    %v3529 = vld [vmem:[#allocation8 + $0x11c] sm:$0xf]
    %v3530 = vld [vmem:[#allocation8 + $0x120] sm:$0xff]
    %v3531 = vld [vmem:[#allocation8 + $0x128] sm:$0xf]
    %v3532 = vld [vmem:[#allocation8 + $0x12c] sm:$0xff]
    %v3533 = vld [vmem:[#allocation8 + $0x134] sm:$0xf]
    %v3534 = vld [vmem:[#allocation8 + $0x138] sm:$0xff]
    %v3535 = vld [vmem:[#allocation8 + $0x140] sm:$0xf]
    %v3536 = vld [vmem:[#allocation8 + $0x144] sm:$0xff]
    %v3537 = vld [vmem:[#allocation8 + $0x14c] sm:$0xf]
    %v3538 = vld [vmem:[#allocation8 + $0x150] sm:$0xff]
    %v3539 = vld [vmem:[#allocation8 + $0x158] sm:$0xf]
    %v3540 = vld [vmem:[#allocation8 + $0x15c] sm:$0xff]
    %v3541 = vld [vmem:[#allocation8 + $0x164] sm:$0xf]
    %v3542 = vld [vmem:[#allocation8 + $0x168] sm:$0xff]
    %v3543 = vld [vmem:[#allocation8 + $0x170] sm:$0xf]
    %v3544 = vld [vmem:[#allocation8 + $0x174] sm:$0xff]
    %v3545 = vld [vmem:[#allocation8 + $0x17c] sm:$0xf]
    %v3546 = vld [vmem:[#allocation8 + $0x180] sm:$0xff]
    %v3547 = vld [vmem:[#allocation8 + $0x188] sm:$0xf]
    %v3548 = vld [vmem:[#allocation8 + $0x18c] sm:$0xff]
    %v3549 = vld [vmem:[#allocation8 + $0x194] sm:$0xf]
    %v3550 = vld [vmem:[#allocation8 + $0x198] sm:$0xff]
    %v3551 = vld [vmem:[#allocation8 + $0x1a0] sm:$0xf]
    %v3552 = vld [vmem:[#allocation8 + $0x1a4] sm:$0xff]
    %v3553 = vld [vmem:[#allocation8 + $0x1ac] sm:$0xf]
    %v3554 = vld [vmem:[#allocation8 + $0x1b0] sm:$0xff]
    %v3555 = vld [vmem:[#allocation8 + $0x1b8] sm:$0xf]
    %v3556 = vld [vmem:[#allocation8 + $0x1bc] sm:$0xff]
    %v3557 = vld [vmem:[#allocation8 + $0x1c4] sm:$0xf]
    %v3558 = vld [vmem:[#allocation8 + $0x1c8] sm:$0xff]
    %v3559 = vld [vmem:[#allocation8 + $0x1d0] sm:$0xf]
    %v3560 = vld [vmem:[#allocation8 + $0x1d4] sm:$0xff]
    %v3561 = vld [vmem:[#allocation8 + $0x1dc] sm:$0xf]
    %v3562 = vld [vmem:[#allocation8 + $0x1e0] sm:$0xff]
    %v3563 = vld [vmem:[#allocation8 + $0x1e8] sm:$0xf]
    %v3564 = vld [vmem:[#allocation8 + $0x1ec] sm:$0xff]
    %v3565 = vld [vmem:[#allocation8 + $0x1f4] sm:$0xf]
    %v3566 = vld [vmem:[#allocation8 + $0x1f8] sm:$0xff]
    %v3567 = vld [vmem:[#allocation8 + $0x200] sm:$0xf]
    %v3568 = vld [vmem:[#allocation8 + $0x204] sm:$0xff]
    %v3569 = vld [vmem:[#allocation8 + $0x20c] sm:$0xf]
    %v3570 = vld [vmem:[#allocation8 + $0x210] sm:$0xff]
    %v3571 = vld [vmem:[#allocation8 + $0x218] sm:$0xf]
    %v3572 = vld [vmem:[#allocation8 + $0x21c] sm:$0xff]
    %v3573 = vld [vmem:[#allocation8 + $0x224] sm:$0xf]
    %v3574 = vld [vmem:[#allocation8 + $0x228] sm:$0xff]
    %v3575 = vld [vmem:[#allocation8 + $0x230] sm:$0xf]
    %v3576 = vld [vmem:[#allocation8 + $0x234] sm:$0xff]
    %v3577 = vld [vmem:[#allocation8 + $0x23c] sm:$0xf]
    %v3578 = vld [vmem:[%s3] sm:$0x7]
    %v3580 = vlaneseq
    %v3581 = vshrl.u32 %v3580, 7
    %v3582 = vsub.s32 0, %v3581
    %v3583 = vrot.slane %v3578, %v3582
    %v3584 = vlaneseq
    %v3585 = vshrl.u32 %v3584, 7
    %v3586 = vsub.s32 1, %v3585
    %v3587 = vrot.slane %v3578, %v3586
    %v3588 = vlaneseq
    %v3589 = vshrl.u32 %v3588, 7
    %v3590 = vsub.s32 2, %v3589
    %v3591 = vrot.slane %v3578, %v3590
    %v3691 = vunpack.c.l.b16 %v3482
    %v3692 = vunpack.c.h.b16 %v3482
    %v3693 = vunpack.c.l.b16 %v3483
    %v3694 = vunpack.c.l.b16 %v3484
    %v3695 = vunpack.c.h.b16 %v3484
    %v3696 = vunpack.c.l.b16 %v3485
    %v3697 = vunpack.c.l.b16 %v3486
    %v3698 = vunpack.c.h.b16 %v3486
    %v3699 = vunpack.c.l.b16 %v3487
    %v3700 = vunpack.c.l.b16 %v3488
    %v3701 = vunpack.c.h.b16 %v3488
    %v3702 = vunpack.c.l.b16 %v3489
    %v3703 = vunpack.c.l.b16 %v3490
    %v3704 = vunpack.c.h.b16 %v3490
    %v3705 = vunpack.c.l.b16 %v3491
    %v3706 = vunpack.c.l.b16 %v3492
    %v3707 = vunpack.c.h.b16 %v3492
    %v3708 = vunpack.c.l.b16 %v3493
    %v3709 = vunpack.c.l.b16 %v3494
    %v3710 = vunpack.c.h.b16 %v3494
    %v3711 = vunpack.c.l.b16 %v3495
    %v3712 = vunpack.c.l.b16 %v3496
    %v3713 = vunpack.c.h.b16 %v3496
    %v3714 = vunpack.c.l.b16 %v3497
    %v3715 = vunpack.c.l.b16 %v3498
    %v3716 = vunpack.c.h.b16 %v3498
    %v3717 = vunpack.c.l.b16 %v3499
    %v3718 = vunpack.c.l.b16 %v3500
    %v3719 = vunpack.c.h.b16 %v3500
    %v3720 = vunpack.c.l.b16 %v3501
    %v3721 = vunpack.c.l.b16 %v3502
    %v3722 = vunpack.c.h.b16 %v3502
    %v3723 = vunpack.c.l.b16 %v3503
    %v3724 = vunpack.c.l.b16 %v3504
    %v3725 = vunpack.c.h.b16 %v3504
    %v3726 = vunpack.c.l.b16 %v3505
    %v3727 = vunpack.c.l.b16 %v3506
    %v3728 = vunpack.c.h.b16 %v3506
    %v3729 = vunpack.c.l.b16 %v3507
    %v3730 = vunpack.c.l.b16 %v3508
    %v3731 = vunpack.c.h.b16 %v3508
    %v3732 = vunpack.c.l.b16 %v3509
    %v3733 = vunpack.c.l.b16 %v3510
    %v3734 = vunpack.c.h.b16 %v3510
    %v3735 = vunpack.c.l.b16 %v3511
    %v3736 = vunpack.c.l.b16 %v3512
    %v3737 = vunpack.c.h.b16 %v3512
    %v3738 = vunpack.c.l.b16 %v3513
    %v3739 = vunpack.c.l.b16 %v3514
    %v3740 = vunpack.c.h.b16 %v3514
    %v3741 = vunpack.c.l.b16 %v3515
    %v3742 = vunpack.c.l.b16 %v3516
    %v3743 = vunpack.c.h.b16 %v3516
    %v3744 = vunpack.c.l.b16 %v3517
    %v3745 = vunpack.c.l.b16 %v3518
    %v3746 = vunpack.c.h.b16 %v3518
    %v3747 = vunpack.c.l.b16 %v3519
    %v3748 = vunpack.c.l.b16 %v3520
    %v3749 = vunpack.c.h.b16 %v3520
    %v3750 = vunpack.c.l.b16 %v3521
    %v3751 = vunpack.c.l.b16 %v3522
    %v3752 = vunpack.c.h.b16 %v3522
    %v3753 = vunpack.c.l.b16 %v3523
    %v3754 = vunpack.c.l.b16 %v3524
    %v3755 = vunpack.c.h.b16 %v3524
    %v3756 = vunpack.c.l.b16 %v3525
    %v3757 = vunpack.c.l.b16 %v3526
    %v3758 = vunpack.c.h.b16 %v3526
    %v3759 = vunpack.c.l.b16 %v3527
    %v3760 = vunpack.c.l.b16 %v3528
    %v3761 = vunpack.c.h.b16 %v3528
    %v3762 = vunpack.c.l.b16 %v3529
    %v3763 = vunpack.c.l.b16 %v3530
    %v3764 = vunpack.c.h.b16 %v3530
    %v3765 = vunpack.c.l.b16 %v3531
    %v3766 = vunpack.c.l.b16 %v3532
    %v3767 = vunpack.c.h.b16 %v3532
    %v3768 = vunpack.c.l.b16 %v3533
    %v3769 = vunpack.c.l.b16 %v3534
    %v3770 = vunpack.c.h.b16 %v3534
    %v3771 = vunpack.c.l.b16 %v3535
    %v3772 = vunpack.c.l.b16 %v3536
    %v3773 = vunpack.c.h.b16 %v3536
    %v3774 = vunpack.c.l.b16 %v3537
    %v3775 = vunpack.c.l.b16 %v3538
    %v3776 = vunpack.c.h.b16 %v3538
    %v3777 = vunpack.c.l.b16 %v3539
    %v3778 = vunpack.c.l.b16 %v3540
    %v3779 = vunpack.c.h.b16 %v3540
    %v3780 = vunpack.c.l.b16 %v3541
    %v3781 = vunpack.c.l.b16 %v3542
    %v3782 = vunpack.c.h.b16 %v3542
    %v3783 = vunpack.c.l.b16 %v3543
    %v3784 = vunpack.c.l.b16 %v3544
    %v3785 = vunpack.c.h.b16 %v3544
    %v3786 = vunpack.c.l.b16 %v3545
    %v3787 = vunpack.c.l.b16 %v3546
    %v3788 = vunpack.c.h.b16 %v3546
    %v3789 = vunpack.c.l.b16 %v3547
    %v3790 = vunpack.c.l.b16 %v3548
    %v3791 = vunpack.c.h.b16 %v3548
    %v3792 = vunpack.c.l.b16 %v3549
    %v3793 = vunpack.c.l.b16 %v3550
    %v3794 = vunpack.c.h.b16 %v3550
    %v3795 = vunpack.c.l.b16 %v3551
    %v3796 = vunpack.c.l.b16 %v3552
    %v3797 = vunpack.c.h.b16 %v3552
    %v3798 = vunpack.c.l.b16 %v3553
    %v3799 = vunpack.c.l.b16 %v3554
    %v3800 = vunpack.c.h.b16 %v3554
    %v3801 = vunpack.c.l.b16 %v3555
    %v3802 = vunpack.c.l.b16 %v3556
    %v3803 = vunpack.c.h.b16 %v3556
    %v3804 = vunpack.c.l.b16 %v3557
    %v3805 = vunpack.c.l.b16 %v3558
    %v3806 = vunpack.c.h.b16 %v3558
    %v3807 = vunpack.c.l.b16 %v3559
    %v3808 = vunpack.c.l.b16 %v3560
    %v3809 = vunpack.c.h.b16 %v3560
    %v3810 = vunpack.c.l.b16 %v3561
    %v3811 = vunpack.c.l.b16 %v3562
    %v3812 = vunpack.c.h.b16 %v3562
    %v3813 = vunpack.c.l.b16 %v3563
    %v3814 = vunpack.c.l.b16 %v3564
    %v3815 = vunpack.c.h.b16 %v3564
    %v3816 = vunpack.c.l.b16 %v3565
    %v3817 = vunpack.c.l.b16 %v3566
    %v3818 = vunpack.c.h.b16 %v3566
    %v3819 = vunpack.c.l.b16 %v3567
    %v3820 = vunpack.c.l.b16 %v3568
    %v3821 = vunpack.c.h.b16 %v3568
    %v3822 = vunpack.c.l.b16 %v3569
    %v3823 = vunpack.c.l.b16 %v3570
    %v3824 = vunpack.c.h.b16 %v3570
    %v3825 = vunpack.c.l.b16 %v3571
    %v3826 = vunpack.c.l.b16 %v3572
    %v3827 = vunpack.c.h.b16 %v3572
    %v3828 = vunpack.c.l.b16 %v3573
    %v3829 = vunpack.c.l.b16 %v3574
    %v3830 = vunpack.c.h.b16 %v3574
    %v3831 = vunpack.c.l.b16 %v3575
    %v3832 = vunpack.c.l.b16 %v3576
    %v3833 = vunpack.c.h.b16 %v3576
    %v3834 = vunpack.c.l.b16 %v3577
    %v3835 = vpack.c.b16 %v3694, %v3691
    %v3836 = vpack.c.b16 %v3695, %v3692
    %v3837 = vpack.c.b16 %v3696, %v3693
    %v3838 = vpack.c.b16 %v3700, %v3697
    %v3839 = vpack.c.b16 %v3701, %v3698
    %v3840 = vpack.c.b16 %v3702, %v3699
    %v3841 = vpack.c.b16 %v3706, %v3703
    %v3842 = vpack.c.b16 %v3707, %v3704
    %v3843 = vpack.c.b16 %v3708, %v3705
    %v3844 = vpack.c.b16 %v3712, %v3709
    %v3845 = vpack.c.b16 %v3713, %v3710
    %v3846 = vpack.c.b16 %v3714, %v3711
    %v3847 = vpack.c.b16 %v3718, %v3715
    %v3848 = vpack.c.b16 %v3719, %v3716
    %v3849 = vpack.c.b16 %v3720, %v3717
    %v3850 = vpack.c.b16 %v3724, %v3721
    %v3851 = vpack.c.b16 %v3725, %v3722
    %v3852 = vpack.c.b16 %v3726, %v3723
    %v3853 = vpack.c.b16 %v3730, %v3727
    %v3854 = vpack.c.b16 %v3731, %v3728
    %v3855 = vpack.c.b16 %v3732, %v3729
    %v3856 = vpack.c.b16 %v3736, %v3733
    %v3857 = vpack.c.b16 %v3737, %v3734
    %v3858 = vpack.c.b16 %v3738, %v3735
    %v3859 = vpack.c.b16 %v3742, %v3739
    %v3860 = vpack.c.b16 %v3743, %v3740
    %v3861 = vpack.c.b16 %v3744, %v3741
    %v3862 = vpack.c.b16 %v3748, %v3745
    %v3863 = vpack.c.b16 %v3749, %v3746
    %v3864 = vpack.c.b16 %v3750, %v3747
    %v3865 = vpack.c.b16 %v3754, %v3751
    %v3866 = vpack.c.b16 %v3755, %v3752
    %v3867 = vpack.c.b16 %v3756, %v3753
    %v3868 = vpack.c.b16 %v3760, %v3757
    %v3869 = vpack.c.b16 %v3761, %v3758
    %v3870 = vpack.c.b16 %v3762, %v3759
    %v3871 = vpack.c.b16 %v3766, %v3763
    %v3872 = vpack.c.b16 %v3767, %v3764
    %v3873 = vpack.c.b16 %v3768, %v3765
    %v3874 = vpack.c.b16 %v3772, %v3769
    %v3875 = vpack.c.b16 %v3773, %v3770
    %v3876 = vpack.c.b16 %v3774, %v3771
    %v3877 = vpack.c.b16 %v3778, %v3775
    %v3878 = vpack.c.b16 %v3779, %v3776
    %v3879 = vpack.c.b16 %v3780, %v3777
    %v3880 = vpack.c.b16 %v3784, %v3781
    %v3881 = vpack.c.b16 %v3785, %v3782
    %v3882 = vpack.c.b16 %v3786, %v3783
    %v3883 = vpack.c.b16 %v3790, %v3787
    %v3884 = vpack.c.b16 %v3791, %v3788
    %v3885 = vpack.c.b16 %v3792, %v3789
    %v3886 = vpack.c.b16 %v3796, %v3793
    %v3887 = vpack.c.b16 %v3797, %v3794
    %v3888 = vpack.c.b16 %v3798, %v3795
    %v3889 = vpack.c.b16 %v3802, %v3799
    %v3890 = vpack.c.b16 %v3803, %v3800
    %v3891 = vpack.c.b16 %v3804, %v3801
    %v3892 = vpack.c.b16 %v3808, %v3805
    %v3893 = vpack.c.b16 %v3809, %v3806
    %v3894 = vpack.c.b16 %v3810, %v3807
    %v3895 = vpack.c.b16 %v3814, %v3811
    %v3896 = vpack.c.b16 %v3815, %v3812
    %v3897 = vpack.c.b16 %v3816, %v3813
    %v3898 = vpack.c.b16 %v3820, %v3817
    %v3899 = vpack.c.b16 %v3821, %v3818
    %v3900 = vpack.c.b16 %v3822, %v3819
    %v3901 = vpack.c.b16 %v3826, %v3823
    %v3902 = vpack.c.b16 %v3827, %v3824
    %v3903 = vpack.c.b16 %v3828, %v3825
    %v3904 = vpack.c.b16 %v3832, %v3829
    %v3905 = vpack.c.b16 %v3833, %v3830
    %v3906 = vpack.c.b16 %v3834, %v3831
    %3979 = vmatprep.subr.bf16.mxu0 %v3836
    %3980 = vmatpush1.bf16.msra.mxu0 %v3835
    %3981 = vmatprep.subr.bf16.mxu0 %v3839
    %3982 = vmatpush1.bf16.msra.mxu0 %v3838
    %3983 = vmatprep.subr.bf16.mxu0 %v3842
    %3984 = vmatpush1.bf16.msra.mxu0 %v3841
    %3985 = vmatprep.subr.bf16.mxu0 %v3845
    %3986 = vmatpush1.bf16.msra.mxu0 %v3844
    %3987 = vmatprep.subr.bf16.mxu0 %v3848
    %3988 = vmatpush1.bf16.msra.mxu0 %v3847
    %3989 = vmatprep.subr.bf16.mxu0 %v3851
    %3990 = vmatpush1.bf16.msra.mxu0 %v3850
    %3991 = vmatprep.subr.bf16.mxu0 %v3854
    %3992 = vmatpush1.bf16.msra.mxu0 %v3853
    %3993 = vmatprep.subr.bf16.mxu0 %v3857
    %3994 = vmatpush1.bf16.msra.mxu0 %v3856
    %3995 = vmatprep.subr.bf16.mxu0 %v3860
    %3996 = vmatpush1.bf16.msra.mxu0 %v3859
    %3997 = vmatprep.subr.bf16.mxu0 %v3863
    %3998 = vmatpush1.bf16.msra.mxu0 %v3862
    %3999 = vmatprep.subr.bf16.mxu0 %v3866
    %4000 = vmatpush1.bf16.msra.mxu0 %v3865
    %4001 = vmatprep.subr.bf16.mxu0 %v3869
    %4002 = vmatpush1.bf16.msra.mxu0 %v3868
    %4003 = vmatprep.subr.bf16.mxu0 %v3872
    %4004 = vmatpush1.bf16.msra.mxu0 %v3871
    %4005 = vmatprep.subr.bf16.mxu0 %v3875
    %4006 = vmatpush1.bf16.msra.mxu0 %v3874
    %4007 = vmatprep.subr.bf16.mxu0 %v3878
    %4008 = vmatpush1.bf16.msra.mxu0 %v3877
    %4009 = vmatprep.subr.bf16.mxu0 %v3881
    %4010 = vmatpush1.bf16.msra.mxu0 %v3880
    %4011 = vmatprep.mubr.bf16.mxu0 %v3477
    %4012 = vmatmul.mubr.bf16.gmra.mrb[0].mxu0 %v3476
    %v4013 = vpop.f32.mrb[0].mxu0
    %v4014 = vadd.f32 %v3583, %v4013
    %v4015 = vpop.f32.mrb[0].mxu0
    %v4016 = vadd.f32 %v3587, %v4015
    %v4017 = vpop.f32.mrb[0].mxu0
    %v4018 = vadd.f32 %v3583, %v4017
    %v4019 = vpop.f32.mrb[0].mxu0
    %v4020 = vadd.f32 %v3587, %v4019
    %4021 = vmatprep.mubr.bf16.mxu0 %v3480
    %4022 = vmatmul.mubr.bf16.gmra.mrb[0].mxu0 %v3479
    %v4023 = vpop.f32.mrb[0].mxu0
    %v4024 = vadd.f32 %v3583, %v4023
    %v4025 = vpop.f32.mrb[0].mxu0
    %v4026 = vadd.f32 %v3587, %v4025
    %v4027 = vpop.f32.mrb[0].mxu0
    %v4028 = vadd.f32 %v3583, %v4027
    %v4029 = vpop.f32.mrb[0].mxu0
    %v4030 = vadd.f32 %v3587, %v4029
    %4031 = vdwg.mxu0
    %4032 = vmatprep.subr.bf16.mxu0 %v3884
    %4033 = vmatpush1.bf16.msra.mxu0 %v3883
    %4034 = vmatprep.subr.bf16.mxu0 %v3887
    %4035 = vmatpush1.bf16.msra.mxu0 %v3886
    %4036 = vmatprep.subr.bf16.mxu0 %v3890
    %4037 = vmatpush1.bf16.msra.mxu0 %v3889
    %4038 = vmatprep.subr.bf16.mxu0 %v3893
    %4039 = vmatpush1.bf16.msra.mxu0 %v3892
    %4040 = vmatprep.subr.bf16.mxu0 %v3896
    %4041 = vmatpush1.bf16.msra.mxu0 %v3895
    %4042 = vmatprep.subr.bf16.mxu0 %v3899
    %4043 = vmatpush1.bf16.msra.mxu0 %v3898
    %4044 = vmatprep.subr.bf16.mxu0 %v3902
    %4045 = vmatpush1.bf16.msra.mxu0 %v3901
    %4046 = vmatprep.subr.bf16.mxu0 %v3905
    %4047 = vmatpush1.bf16.msra.mxu0 %v3904
    %4048 = vmatprep.subr.bf16.mxu0 0
    %4049 = vmatpush1.bf16.msra.mxu0 0
    %4050 = vmatprep.subr.bf16.mxu0 0
    %4051 = vmatpush1.bf16.msra.mxu0 0
    %4052 = vmatprep.subr.bf16.mxu0 0
    %4053 = vmatpush1.bf16.msra.mxu0 0
    %4054 = vmatprep.subr.bf16.mxu0 0
    %4055 = vmatpush1.bf16.msra.mxu0 0
    %4056 = vmatprep.subr.bf16.mxu0 0
    %4057 = vmatpush1.bf16.msra.mxu0 0
    %4058 = vmatprep.subr.bf16.mxu0 0
    %4059 = vmatpush1.bf16.msra.mxu0 0
    %4060 = vmatprep.subr.bf16.mxu0 0
    %4061 = vmatpush1.bf16.msra.mxu0 0
    %4062 = vmatprep.subr.bf16.mxu0 0
    %4063 = vmatpush1.bf16.msra.mxu0 0
    %4064 = vmatprep.mubr.bf16.mxu0 0
    %4065 = vmatmul.mubr.bf16.gmra.mrb[0].mxu0 %v3478
    %v4066 = vpop.f32.mrb[0].mxu0
    %v4067 = vadd.f32 %v4014, %v4066
    %v4068 = vpop.f32.mrb[0].mxu0
    %v4069 = vadd.f32 %v4016, %v4068
    %v4070 = vpop.f32.mrb[0].mxu0
    %v4071 = vadd.f32 %v4018, %v4070
    %v4072 = vpop.f32.mrb[0].mxu0
    %v4073 = vadd.f32 %v4020, %v4072
    %4074 = vmatprep.mubr.bf16.mxu0 0
    %4075 = vmatmul.mubr.bf16.gmra.mrb[0].mxu0 %v3481
    %v4076 = vpop.f32.mrb[0].mxu0
    %v4077 = vadd.f32 %v4024, %v4076
    %v4078 = vpop.f32.mrb[0].mxu0
    %v4079 = vadd.f32 %v4026, %v4078
    %v4080 = vpop.f32.mrb[0].mxu0
    %v4081 = vadd.f32 %v4028, %v4080
    %v4082 = vpop.f32.mrb[0].mxu0
    %v4083 = vadd.f32 %v4030, %v4082
    %4084 = vdwg.mxu0
    %4085 = vmatprep.subr.bf16.mxu0 0
    %4086 = vmatpush1.bf16.msra.mxu0 %v3837
    %4087 = vmatprep.subr.bf16.mxu0 0
    %4088 = vmatpush1.bf16.msra.mxu0 %v3840
    %4089 = vmatprep.subr.bf16.mxu0 0
    %4090 = vmatpush1.bf16.msra.mxu0 %v3843
    %4091 = vmatprep.subr.bf16.mxu0 0
    %4092 = vmatpush1.bf16.msra.mxu0 %v3846
    %4093 = vmatprep.subr.bf16.mxu0 0
    %4094 = vmatpush1.bf16.msra.mxu0 %v3849
    %4095 = vmatprep.subr.bf16.mxu0 0
    %4096 = vmatpush1.bf16.msra.mxu0 %v3852
    %4097 = vmatprep.subr.bf16.mxu0 0
    %4098 = vmatpush1.bf16.msra.mxu0 %v3855
    %4099 = vmatprep.subr.bf16.mxu0 0
    %4100 = vmatpush1.bf16.msra.mxu0 %v3858
    %4101 = vmatprep.subr.bf16.mxu0 0
    %4102 = vmatpush1.bf16.msra.mxu0 %v3861
    %4103 = vmatprep.subr.bf16.mxu0 0
    %4104 = vmatpush1.bf16.msra.mxu0 %v3864
    %4105 = vmatprep.subr.bf16.mxu0 0
    %4106 = vmatpush1.bf16.msra.mxu0 %v3867
    %4107 = vmatprep.subr.bf16.mxu0 0
    %4108 = vmatpush1.bf16.msra.mxu0 %v3870
    %4109 = vmatprep.subr.bf16.mxu0 0
    %4110 = vmatpush1.bf16.msra.mxu0 %v3873
    %4111 = vmatprep.subr.bf16.mxu0 0
    %4112 = vmatpush1.bf16.msra.mxu0 %v3876
    %4113 = vmatprep.subr.bf16.mxu0 0
    %4114 = vmatpush1.bf16.msra.mxu0 %v3879
    %4115 = vmatprep.subr.bf16.mxu0 0
    %4116 = vmatpush1.bf16.msra.mxu0 %v3882
    %4117 = vmatprep.mubr.bf16.mxu0 %v3477
    %4118 = vmatmul.mubr.bf16.gmra.mrb[0].mxu0 %v3476
    %v4119 = vpop.f32.mrb[0].mxu0
    %v4120 = vadd.f32 %v3591, %v4119
    %v4121 = vpop.f32.mrb[0].mxu0
    %v4122 = vpop.f32.mrb[0].mxu0
    %v4123 = vadd.f32 %v3591, %v4122
    %v4124 = vpop.f32.mrb[0].mxu0
    %4125 = vmatprep.mubr.bf16.mxu0 %v3480
    %4126 = vmatmul.mubr.bf16.gmra.mrb[0].mxu0 %v3479
    %v4127 = vpop.f32.mrb[0].mxu0
    %v4128 = vadd.f32 %v3591, %v4127
    %v4129 = vpop.f32.mrb[0].mxu0
    %v4130 = vpop.f32.mrb[0].mxu0
    %v4131 = vadd.f32 %v3591, %v4130
    %v4132 = vpop.f32.mrb[0].mxu0
    %4133 = vdwg.mxu0
    %4134 = vmatprep.subr.bf16.mxu0 0
    %4135 = vmatpush1.bf16.msra.mxu0 %v3885
    %4136 = vmatprep.subr.bf16.mxu0 0
    %4137 = vmatpush1.bf16.msra.mxu0 %v3888
    %4138 = vmatprep.subr.bf16.mxu0 0
    %4139 = vmatpush1.bf16.msra.mxu0 %v3891
    %4140 = vmatprep.subr.bf16.mxu0 0
    %4141 = vmatpush1.bf16.msra.mxu0 %v3894
    %4142 = vmatprep.subr.bf16.mxu0 0
    %4143 = vmatpush1.bf16.msra.mxu0 %v3897
    %4144 = vmatprep.subr.bf16.mxu0 0
    %4145 = vmatpush1.bf16.msra.mxu0 %v3900
    %4146 = vmatprep.subr.bf16.mxu0 0
    %4147 = vmatpush1.bf16.msra.mxu0 %v3903
    %4148 = vmatprep.subr.bf16.mxu0 0
    %4149 = vmatpush1.bf16.msra.mxu0 %v3906
    %4150 = vmatprep.subr.bf16.mxu0 0
    %4151 = vmatpush1.bf16.msra.mxu0 0
    %4152 = vmatprep.subr.bf16.mxu0 0
    %4153 = vmatpush1.bf16.msra.mxu0 0
    %4154 = vmatprep.subr.bf16.mxu0 0
    %4155 = vmatpush1.bf16.msra.mxu0 0
    %4156 = vmatprep.subr.bf16.mxu0 0
    %4157 = vmatpush1.bf16.msra.mxu0 0
    %4158 = vmatprep.subr.bf16.mxu0 0
    %4159 = vmatpush1.bf16.msra.mxu0 0
    %4160 = vmatprep.subr.bf16.mxu0 0
    %4161 = vmatpush1.bf16.msra.mxu0 0
    %4162 = vmatprep.subr.bf16.mxu0 0
    %4163 = vmatpush1.bf16.msra.mxu0 0
    %4164 = vmatprep.subr.bf16.mxu0 0
    %4165 = vmatpush1.bf16.msra.mxu0 0
    %4166 = vmatprep.mubr.bf16.mxu0 0
    %4167 = vmatmul.mubr.bf16.gmra.mrb[0].mxu0 %v3478
    %v4168 = vpop.f32.mrb[0].mxu0
    %v4169 = vadd.f32 %v4120, %v4168
    %v4170 = vpop.f32.mrb[0].mxu0
    %v4171 = vpop.f32.mrb[0].mxu0
    %v4172 = vadd.f32 %v4123, %v4171
    %v4173 = vpop.f32.mrb[0].mxu0
    %4174 = vmatprep.mubr.bf16.mxu0 0
    %4175 = vmatmul.mubr.bf16.gmra.mrb[0].mxu0 %v3481
    %v4176 = vpop.f32.mrb[0].mxu0
    %v4177 = vadd.f32 %v4128, %v4176
    %v4178 = vpop.f32.mrb[0].mxu0
    %v4179 = vpop.f32.mrb[0].mxu0
    %v4180 = vadd.f32 %v4131, %v4179
    %v4181 = vpop.f32.mrb[0].mxu0
    %4182 = vdwg.mxu0
    %4183 = vst [vmem:[#allocation9] sm:$0xff] %v4067
    %4184 = vst [vmem:[#allocation9 + $0x8] sm:$0xff] %v4069
    %4185 = vst [vmem:[#allocation9 + $0x10] sm:$0xff] %v4169
    %4186 = vst [vmem:[#allocation9 + $0x18] sm:$0xff] %v4071
    %4187 = vst [vmem:[#allocation9 + $0x20] sm:$0xff] %v4073
    %4188 = vst [vmem:[#allocation9 + $0x28] sm:$0xff] %v4172
    %4189 = vst [vmem:[#allocation9 + $0x30] sm:$0xff] %v4077
    %4190 = vst [vmem:[#allocation9 + $0x38] sm:$0xff] %v4079
    %4191 = vst [vmem:[#allocation9 + $0x40] sm:$0xff] %v4177
    %4192 = vst [vmem:[#allocation9 + $0x48] sm:$0xff] %v4081
    %4193 = vst [vmem:[#allocation9 + $0x50] sm:$0xff] %v4083
    %4194 = vst [vmem:[#allocation9 + $0x58] sm:$0xff] %v4180
    // Predicated region
    $region30: #{tpu_custom_call.1} parent=1 // pred_check
      _
    $region31: #{tpu_custom_call.1} parent=1 // pred_check_branch
      %4196 = sbr.rel (0) target = $region33
    $region32: #{tpu_custom_call.1} parent=1 // pred_region
      %s4198 = ssub.s32 1536, 1536
      %4199 = vsyncadd [#allocation5], %s4198
      %s4200 = sshll.u32 [#allocation9], 4
      %s4201 = int_to_ptr.vmem [resolvable:$true] %s4200
      %4206 = dma.vmem_to_hbm [thread:$0]  %s4201, 1536, %s4, [#allocation5], 384, 384, 24
    $region33: #{tpu_custom_call.1} parent=1 // pred_fallthru
      _
    // Predicated region
    $region34: #{tpu_custom_call.1} parent=1 // pred_check
      _
    $region35: #{tpu_custom_call.1} parent=1 // pred_check_branch
      %4208 = sbr.rel (0) target = $region37
    $region36: #{tpu_custom_call.1} parent=1 // pred_region
      %4209 = dma.done [#allocation5], 1536
    $region37: #{tpu_custom_call.1} parent=1 // pred_fallthru
      _
    %4210 = vsyncpa [#allocation4], 1
    %4211 = vsyncpa [#allocation7], 1
    %4212 = vsyncpa [#allocation5], 1

</llo_original>
